<compile_context>
chip_gen: v5e
topology: v5e:2x2
jax: 0.10.0
libtpu: 0.0.40
codegen_flags: <defaults>
</compile_context>

<pallas_src>
import jax
import jax.numpy as jnp
from jax.experimental import pallas as pl
from jax.experimental.pallas import tpu as pltpu


COMPUTE_DTYPE = jnp.bfloat16   # MXU operand dtype; accumulation stays f32
ACT_DTYPE = jnp.bfloat16       # inter-layer activation storage dtype
BLOCK_ROWS = 512               # target rows per tile (multiple of 16)


def _block_rows(m, target=BLOCK_ROWS):
    """Row-block size: full extent if small/unaligned, else `target` (8/16-aligned)."""
    if m <= target or m % 8 != 0:
        return m
    return target


# ----------------------------- Pallas kernels ------------------------------

def _conv_pool_kernel(p0_ref, p1_ref, p2_ref, p3_ref, w_ref, b_ref, o_ref):
    """Fused 3x3-conv (4 phase matmuls) + bias + ReLU + 2x2 max-pool.

    p{0..3}: (tm, 9*Cin) im2col patches of the four pixels in each 2x2 pool
    window.  Since max(relu(a_i + b)) == relu(max(a_i) + b), pooling is a pure
    elementwise max of the four MXU results before the bias/ReLU epilogue.
    """
    w = w_ref[...]
    a0 = jnp.dot(p0_ref[...], w, preferred_element_type=jnp.float32)
    a1 = jnp.dot(p1_ref[...], w, preferred_element_type=jnp.float32)
    a2 = jnp.dot(p2_ref[...], w, preferred_element_type=jnp.float32)
    a3 = jnp.dot(p3_ref[...], w, preferred_element_type=jnp.float32)
    m = jnp.maximum(jnp.maximum(a0, a1), jnp.maximum(a2, a3))
    y = jnp.maximum(m + b_ref[...], 0.0)
    o_ref[...] = y.astype(o_ref.dtype)


def _mlp_kernel(x_ref, w1_ref, b1_ref, w2_ref, b2_ref, o_ref):
    """Fused fc1 + ReLU + fc2 head (single launch)."""
    h = jnp.dot(x_ref[...], w1_ref[...], preferred_element_type=jnp.float32)
    h = jnp.maximum(h + b1_ref[...], 0.0)
    o = jnp.dot(h.astype(w2_ref.dtype), w2_ref[...],
                preferred_element_type=jnp.float32)
    o_ref[...] = (o + b2_ref[...]).astype(o_ref.dtype)


# ------------------------- fused conv+ReLU+pool layer -----------------------

def conv3x3_relu_pool(x, w2, b2):
    """x: (B, H, W, Cin) NHWC -> (B, H//2, W//2, Cout).

    conv: stride=1, padding=1; pool: 2x2, stride 2, floor mode (like PyTorch).
    w2: (9*Cin, Cout) in (dy, dx, cin) row order; b2: (1, Cout) f32.
    """
    B, H, W, Cin = x.shape
    Cout = w2.shape[-1]
    Ho, Wo = H // 2, W // 2
    x = x.astype(COMPUTE_DTYPE)
    xp = jnp.pad(x, ((0, 0), (1, 1), (1, 1), (0, 0)))

    # TODO(synk): the 3x3 patch extraction below is still XLA glue (a 9x read
    # blowup on conv2/conv3); doing the 9-tap reduction in-kernel would need
    # Element-offset windows or manual DMA and is left out of this version.
    def phase(py, px):
        # im2col patches for the pool-window pixel (py, px) of every 2x2 window.
        cols = [xp[:, py + dy:py + dy + 2 * Ho:2, px + dx:px + dx + 2 * Wo:2, :]
                for dy in range(3) for dx in range(3)]
        return jnp.concatenate(cols, axis=-1).reshape(B * Ho * Wo, 9 * Cin)

    phases = [phase(py, px) for py in (0, 1) for px in (0, 1)]

    M, K = B * Ho * Wo, 9 * Cin
    tm = _block_rows(M)
    row_spec = pl.BlockSpec((tm, K), lambda i: (i, 0))
    out = pl.pallas_call(
        _conv_pool_kernel,
        out_shape=jax.ShapeDtypeStruct((M, Cout), ACT_DTYPE),
        grid=(pl.cdiv(M, tm),),
        in_specs=[row_spec, row_spec, row_spec, row_spec,
                  pl.BlockSpec((K, Cout), lambda i: (0, 0)),   # resident weights
                  pl.BlockSpec((1, Cout), lambda i: (0, 0))],  # resident bias
        out_specs=pl.BlockSpec((tm, Cout), lambda i: (i, 0)),
        compiler_params=pltpu.CompilerParams(
            dimension_semantics=("parallel",)),
    )(*phases, w2, b2)
    return out.reshape(B, Ho, Wo, Cout)


# ------------------------------- fused FC head ------------------------------

def mlp_head(x, w1, b1, w2, b2):
    Bm, K1 = x.shape
    Hd = w1.shape[-1]
    N = w2.shape[-1]
    tm = _block_rows(Bm)
    return pl.pallas_call(
        _mlp_kernel,
        out_shape=jax.ShapeDtypeStruct((Bm, N), jnp.float32),
        grid=(pl.cdiv(Bm, tm),),
        in_specs=[pl.BlockSpec((tm, K1), lambda i: (i, 0)),
                  pl.BlockSpec((K1, Hd), lambda i: (0, 0)),
                  pl.BlockSpec((1, Hd), lambda i: (0, 0)),
                  pl.BlockSpec((Hd, N), lambda i: (0, 0)),
                  pl.BlockSpec((1, N), lambda i: (0, 0))],
        out_specs=pl.BlockSpec((tm, N), lambda i: (i, 0)),
        compiler_params=pltpu.CompilerParams(
            dimension_semantics=("parallel",)),
    )(x.astype(COMPUTE_DTYPE), w1, b1, w2, b2)


# ------------------------------- full forward -------------------------------

def classifier_cnn_forward(x_nchw, prep):
    x = jnp.transpose(x_nchw, (0, 2, 3, 1))            # NCHW -> NHWC
    x = conv3x3_relu_pool(x, prep["w1"], prep["b1"])   # (B, 14, 14, 32)
    x = conv3x3_relu_pool(x, prep["w2"], prep["b2"])   # (B, 7, 7, 64)
    x = conv3x3_relu_pool(x, prep["w3"], prep["b3"])   # (B, 3, 3, 64)
    B = x.shape[0]
    # NHWC flatten; PyTorch's channel-major flatten order was folded into
    # prep["fw1"]'s rows once in prepare_params(), so no transpose is needed.
    x = x.reshape(B, 3 * 3 * 64)
    return mlp_head(x, prep["fw1"], prep["fb1"], prep["fw2"], prep["fb2"])


# --------------------------------- params -----------------------------------

def init_params(key, num_classes):
    ks = jax.random.split(key, 5)

    def w(k, shape, fan_in):
        return jax.random.normal(k, shape, jnp.float32) / jnp.sqrt(fan_in)

    # Layouts mirror PyTorch: conv weights HWIO, fc1 rows in NCHW
    # (channel-major) flatten order, exactly as torch.flatten(x, 1) expects.
    return {
        "w1": w(ks[0], (3, 3, 1, 32), 9 * 1),   "b1": jnp.zeros((32,), jnp.float32),
        "w2": w(ks[1], (3, 3, 32, 64), 9 * 32), "b2": jnp.zeros((64,), jnp.float32),
        "w3": w(ks[2], (3, 3, 64, 64), 9 * 64), "b3": jnp.zeros((64,), jnp.float32),
        "fw1": w(ks[3], (64 * 3 * 3, 128), 576), "fb1": jnp.zeros((128,), jnp.float32),
        "fw2": w(ks[4], (128, num_classes), 128),
        "fb2": jnp.zeros((num_classes,), jnp.float32),
    }


def prepare_params(params):
    """One-time repack of PyTorch-layout params into kernel-ready form."""
    def conv_w(w):  # (3, 3, Cin, Cout) -> (9*Cin, Cout); (dy, dx, cin) row order
        kh, kw, cin, cout = w.shape
        return w.reshape(kh * kw * cin, cout).astype(COMPUTE_DTYPE)

    def bias(b):
        return b.reshape(1, -1).astype(jnp.float32)

    # Fold PyTorch's channel-major flatten (c, h, w) into fc1's rows so the
    # kernels can flatten NHWC (h, w, c) directly with no transpose/copy.
    C, Hf, Wf = 64, 3, 3
    perm = jnp.transpose(jnp.arange(C * Hf * Wf).reshape(C, Hf, Wf),
                         (1, 2, 0)).reshape(-1)
    return {
        "w1": conv_w(params["w1"]), "b1": bias(params["b1"]),
        "w2": conv_w(params["w2"]), "b2": bias(params["b2"]),
        "w3": conv_w(params["w3"]), "b3": bias(params["b3"]),
        "fw1": params["fw1"][perm].astype(COMPUTE_DTYPE),
        "fb1": bias(params["fb1"]),
        "fw2": params["fw2"].astype(COMPUTE_DTYPE),
        "fb2": bias(params["fb2"]),
    }


if __name__ == "__main__":
    num_classes = 10
    key = jax.random.PRNGKey(0)
    k_x, k_p = jax.random.split(key)
    # 28x28 single-channel input is implied by the fc input size 64*3*3.
    x = jax.random.normal(k_x, (2, 1, 28, 28), jnp.float32)
    params = init_params(k_p, num_classes)
    prep = prepare_params(params)

    fwd = jax.jit(classifier_cnn_forward)
    out = jax.block_until_ready(fwd(x, prep))
    assert out.shape == (2, num_classes), out.shape
    assert out.dtype == jnp.float32, out.dtype
    assert bool(jnp.all(jnp.isfinite(out)))
    print("KERNEL_OK")
</pallas_src>

<mosaic_0001>
module attributes {stable_mosaic.version = 11 : i64} {
  func.func @_conv_pool_kernel(%arg0: i32, %arg1: memref<392x9xbf16, #tpu.memory_space<vmem>>, %arg2: memref<392x9xbf16, #tpu.memory_space<vmem>>, %arg3: memref<392x9xbf16, #tpu.memory_space<vmem>>, %arg4: memref<392x9xbf16, #tpu.memory_space<vmem>>, %arg5: memref<9x32xbf16, #tpu.memory_space<vmem>>, %arg6: memref<1x32xf32, #tpu.memory_space<vmem>>, %arg7: memref<392x32xbf16, #tpu.memory_space<vmem>>) attributes {dimension_semantics = [#tpu.dimension_semantics<parallel>], iteration_bounds = array<i64: 1>, scalar_prefetch = 0 : i64, scratch_operands = 0 : i64, tpu.core_type = #tpu.core_type<tc>, window_params = [{transform_indices = @transform_0, window_bounds = array<i64: 392, 9>}, {transform_indices = @transform_1, window_bounds = array<i64: 392, 9>}, {transform_indices = @transform_2, window_bounds = array<i64: 392, 9>}, {transform_indices = @transform_3, window_bounds = array<i64: 392, 9>}, {pipeline_mode = #tpu.pipeline_mode<synchronous>, transform_indices = @transform_4, window_bounds = array<i64: 9, 32>}, {pipeline_mode = #tpu.pipeline_mode<synchronous>, transform_indices = @transform_5, window_bounds = array<i64: 1, 32>}, {transform_indices = @transform_6, window_bounds = array<i64: 392, 32>}]} {
    %c0 = arith.constant 0 : index
    %c0_0 = arith.constant 0 : index
    %0 = vector.load %arg5[%c0, %c0_0] : memref<9x32xbf16, #tpu.memory_space<vmem>>, vector<9x32xbf16>
    %c0_1 = arith.constant 0 : index
    %c0_2 = arith.constant 0 : index
    %1 = vector.load %arg1[%c0_1, %c0_2] : memref<392x9xbf16, #tpu.memory_space<vmem>>, vector<392x9xbf16>
    %cst = arith.constant dense<0.000000e+00> : vector<392x32xf32>
    %2 = tpu.matmul %1, %0, %cst {dimension_numbers = #tpu.dot_dimension_numbers<[1], [0], [0], [1], [0, 0, 1, 1], [], []>} : vector<392x9xbf16>, vector<9x32xbf16>, vector<392x32xf32> -> vector<392x32xf32>
    %c0_3 = arith.constant 0 : index
    %c0_4 = arith.constant 0 : index
    %3 = vector.load %arg2[%c0_3, %c0_4] : memref<392x9xbf16, #tpu.memory_space<vmem>>, vector<392x9xbf16>
    %cst_5 = arith.constant dense<0.000000e+00> : vector<392x32xf32>
    %4 = tpu.matmul %3, %0, %cst_5 {dimension_numbers = #tpu.dot_dimension_numbers<[1], [0], [0], [1], [0, 0, 1, 1], [], []>} : vector<392x9xbf16>, vector<9x32xbf16>, vector<392x32xf32> -> vector<392x32xf32>
    %c0_6 = arith.constant 0 : index
    %c0_7 = arith.constant 0 : index
    %5 = vector.load %arg3[%c0_6, %c0_7] : memref<392x9xbf16, #tpu.memory_space<vmem>>, vector<392x9xbf16>
    %cst_8 = arith.constant dense<0.000000e+00> : vector<392x32xf32>
    %6 = tpu.matmul %5, %0, %cst_8 {dimension_numbers = #tpu.dot_dimension_numbers<[1], [0], [0], [1], [0, 0, 1, 1], [], []>} : vector<392x9xbf16>, vector<9x32xbf16>, vector<392x32xf32> -> vector<392x32xf32>
    %c0_9 = arith.constant 0 : index
    %c0_10 = arith.constant 0 : index
    %7 = vector.load %arg4[%c0_9, %c0_10] : memref<392x9xbf16, #tpu.memory_space<vmem>>, vector<392x9xbf16>
    %cst_11 = arith.constant dense<0.000000e+00> : vector<392x32xf32>
    %8 = tpu.matmul %7, %0, %cst_11 {dimension_numbers = #tpu.dot_dimension_numbers<[1], [0], [0], [1], [0, 0, 1, 1], [], []>} : vector<392x9xbf16>, vector<9x32xbf16>, vector<392x32xf32> -> vector<392x32xf32>
    %9 = arith.maximumf %2, %4 : vector<392x32xf32>
    %10 = arith.maximumf %6, %8 : vector<392x32xf32>
    %11 = arith.maximumf %9, %10 : vector<392x32xf32>
    %c0_12 = arith.constant 0 : index
    %c0_13 = arith.constant 0 : index
    %12 = vector.load %arg6[%c0_12, %c0_13] : memref<1x32xf32, #tpu.memory_space<vmem>>, vector<1x32xf32>
    %13 = vector.broadcast %12 : vector<1x32xf32> to vector<392x32xf32>
    %14 = arith.addf %11, %13 : vector<392x32xf32>
    %cst_14 = arith.constant 0.000000e+00 : f32
    %15 = vector.broadcast %cst_14 : f32 to vector<392x32xf32>
    %16 = arith.maximumf %14, %15 : vector<392x32xf32>
    %17 = arith.truncf %16 : vector<392x32xf32> to vector<392x32xbf16>
    %c0_15 = arith.constant 0 : index
    %c0_16 = arith.constant 0 : index
    %18 = vector.load %arg7[%c0_15, %c0_16] : memref<392x32xbf16, #tpu.memory_space<vmem>>, vector<392x32xbf16>
    tpu.vector_store %arg7[%c0_15, %c0_16], %17 {strides = array<i32>} : memref<392x32xbf16, #tpu.memory_space<vmem>>, vector<392x32xbf16>,
    return
  }
  func.func @transform_0(%arg0: i32) -> (i32, i32) {
    %c0_i32 = arith.constant 0 : i32
    %c0_i32_0 = arith.constant 0 : i32
    return %arg0, %c0_i32 : i32, i32
  }
  func.func @transform_1(%arg0: i32) -> (i32, i32) {
    %c0_i32 = arith.constant 0 : i32
    %c0_i32_0 = arith.constant 0 : i32
    return %arg0, %c0_i32 : i32, i32
  }
  func.func @transform_2(%arg0: i32) -> (i32, i32) {
    %c0_i32 = arith.constant 0 : i32
    %c0_i32_0 = arith.constant 0 : i32
    return %arg0, %c0_i32 : i32, i32
  }
  func.func @transform_3(%arg0: i32) -> (i32, i32) {
    %c0_i32 = arith.constant 0 : i32
    %c0_i32_0 = arith.constant 0 : i32
    return %arg0, %c0_i32 : i32, i32
  }
  func.func @transform_4(%arg0: i32) -> (i32, i32) {
    %c0_i32 = arith.constant 0 : i32
    %c0_i32_0 = arith.constant 0 : i32
    %c0_i32_1 = arith.constant 0 : i32
    return %c0_i32, %c0_i32_0 : i32, i32
  }
  func.func @transform_5(%arg0: i32) -> (i32, i32) {
    %c0_i32 = arith.constant 0 : i32
    %c0_i32_0 = arith.constant 0 : i32
    %c0_i32_1 = arith.constant 0 : i32
    return %c0_i32, %c0_i32_0 : i32, i32
  }
  func.func @transform_6(%arg0: i32) -> (i32, i32) {
    %c0_i32 = arith.constant 0 : i32
    %c0_i32_0 = arith.constant 0 : i32
    return %arg0, %c0_i32 : i32, i32
  }
}

module attributes {stable_mosaic.version = 11 : i64} {
  func.func @_conv_pool_kernel(%arg0: i32, %arg1: memref<98x288xbf16, #tpu.memory_space<vmem>>, %arg2: memref<98x288xbf16, #tpu.memory_space<vmem>>, %arg3: memref<98x288xbf16, #tpu.memory_space<vmem>>, %arg4: memref<98x288xbf16, #tpu.memory_space<vmem>>, %arg5: memref<288x64xbf16, #tpu.memory_space<vmem>>, %arg6: memref<1x64xf32, #tpu.memory_space<vmem>>, %arg7: memref<98x64xbf16, #tpu.memory_space<vmem>>) attributes {dimension_semantics = [#tpu.dimension_semantics<parallel>], iteration_bounds = array<i64: 1>, scalar_prefetch = 0 : i64, scratch_operands = 0 : i64, tpu.core_type = #tpu.core_type<tc>, window_params = [{transform_indices = @transform_0, window_bounds = array<i64: 98, 288>}, {transform_indices = @transform_1, window_bounds = array<i64: 98, 288>}, {transform_indices = @transform_2, window_bounds = array<i64: 98, 288>}, {transform_indices = @transform_3, window_bounds = array<i64: 98, 288>}, {pipeline_mode = #tpu.pipeline_mode<synchronous>, transform_indices = @transform_4, window_bounds = array<i64: 288, 64>}, {pipeline_mode = #tpu.pipeline_mode<synchronous>, transform_indices = @transform_5, window_bounds = array<i64: 1, 64>}, {transform_indices = @transform_6, window_bounds = array<i64: 98, 64>}]} {
    %c0 = arith.constant 0 : index
    %c0_0 = arith.constant 0 : index
    %0 = vector.load %arg5[%c0, %c0_0] : memref<288x64xbf16, #tpu.memory_space<vmem>>, vector<288x64xbf16>
    %c0_1 = arith.constant 0 : index
    %c0_2 = arith.constant 0 : index
    %1 = vector.load %arg1[%c0_1, %c0_2] : memref<98x288xbf16, #tpu.memory_space<vmem>>, vector<98x288xbf16>
    %cst = arith.constant dense<0.000000e+00> : vector<98x64xf32>
    %2 = tpu.matmul %1, %0, %cst {dimension_numbers = #tpu.dot_dimension_numbers<[1], [0], [0], [1], [0, 0, 1, 1], [], []>} : vector<98x288xbf16>, vector<288x64xbf16>, vector<98x64xf32> -> vector<98x64xf32>
    %c0_3 = arith.constant 0 : index
    %c0_4 = arith.constant 0 : index
    %3 = vector.load %arg2[%c0_3, %c0_4] : memref<98x288xbf16, #tpu.memory_space<vmem>>, vector<98x288xbf16>
    %cst_5 = arith.constant dense<0.000000e+00> : vector<98x64xf32>
    %4 = tpu.matmul %3, %0, %cst_5 {dimension_numbers = #tpu.dot_dimension_numbers<[1], [0], [0], [1], [0, 0, 1, 1], [], []>} : vector<98x288xbf16>, vector<288x64xbf16>, vector<98x64xf32> -> vector<98x64xf32>
    %c0_6 = arith.constant 0 : index
    %c0_7 = arith.constant 0 : index
    %5 = vector.load %arg3[%c0_6, %c0_7] : memref<98x288xbf16, #tpu.memory_space<vmem>>, vector<98x288xbf16>
    %cst_8 = arith.constant dense<0.000000e+00> : vector<98x64xf32>
    %6 = tpu.matmul %5, %0, %cst_8 {dimension_numbers = #tpu.dot_dimension_numbers<[1], [0], [0], [1], [0, 0, 1, 1], [], []>} : vector<98x288xbf16>, vector<288x64xbf16>, vector<98x64xf32> -> vector<98x64xf32>
    %c0_9 = arith.constant 0 : index
    %c0_10 = arith.constant 0 : index
    %7 = vector.load %arg4[%c0_9, %c0_10] : memref<98x288xbf16, #tpu.memory_space<vmem>>, vector<98x288xbf16>
    %cst_11 = arith.constant dense<0.000000e+00> : vector<98x64xf32>
    %8 = tpu.matmul %7, %0, %cst_11 {dimension_numbers = #tpu.dot_dimension_numbers<[1], [0], [0], [1], [0, 0, 1, 1], [], []>} : vector<98x288xbf16>, vector<288x64xbf16>, vector<98x64xf32> -> vector<98x64xf32>
    %9 = arith.maximumf %2, %4 : vector<98x64xf32>
    %10 = arith.maximumf %6, %8 : vector<98x64xf32>
    %11 = arith.maximumf %9, %10 : vector<98x64xf32>
    %c0_12 = arith.constant 0 : index
    %c0_13 = arith.constant 0 : index
    %12 = vector.load %arg6[%c0_12, %c0_13] : memref<1x64xf32, #tpu.memory_space<vmem>>, vector<1x64xf32>
    %13 = vector.broadcast %12 : vector<1x64xf32> to vector<98x64xf32>
    %14 = arith.addf %11, %13 : vector<98x64xf32>
    %cst_14 = arith.constant 0.000000e+00 : f32
    %15 = vector.broadcast %cst_14 : f32 to vector<98x64xf32>
    %16 = arith.maximumf %14, %15 : vector<98x64xf32>
    %17 = arith.truncf %16 : vector<98x64xf32> to vector<98x64xbf16>
    %c0_15 = arith.constant 0 : index
    %c0_16 = arith.constant 0 : index
    %18 = vector.load %arg7[%c0_15, %c0_16] : memref<98x64xbf16, #tpu.memory_space<vmem>>, vector<98x64xbf16>
    tpu.vector_store %arg7[%c0_15, %c0_16], %17 {strides = array<i32>} : memref<98x64xbf16, #tpu.memory_space<vmem>>, vector<98x64xbf16>,
    return
  }
  func.func @transform_0(%arg0: i32) -> (i32, i32) {
    %c0_i32 = arith.constant 0 : i32
    %c0_i32_0 = arith.constant 0 : i32
    return %arg0, %c0_i32 : i32, i32
  }
  func.func @transform_1(%arg0: i32) -> (i32, i32) {
    %c0_i32 = arith.constant 0 : i32
    %c0_i32_0 = arith.constant 0 : i32
    return %arg0, %c0_i32 : i32, i32
  }
  func.func @transform_2(%arg0: i32) -> (i32, i32) {
    %c0_i32 = arith.constant 0 : i32
    %c0_i32_0 = arith.constant 0 : i32
    return %arg0, %c0_i32 : i32, i32
  }
  func.func @transform_3(%arg0: i32) -> (i32, i32) {
    %c0_i32 = arith.constant 0 : i32
    %c0_i32_0 = arith.constant 0 : i32
    return %arg0, %c0_i32 : i32, i32
  }
  func.func @transform_4(%arg0: i32) -> (i32, i32) {
    %c0_i32 = arith.constant 0 : i32
    %c0_i32_0 = arith.constant 0 : i32
    %c0_i32_1 = arith.constant 0 : i32
    return %c0_i32, %c0_i32_0 : i32, i32
  }
  func.func @transform_5(%arg0: i32) -> (i32, i32) {
    %c0_i32 = arith.constant 0 : i32
    %c0_i32_0 = arith.constant 0 : i32
    %c0_i32_1 = arith.constant 0 : i32
    return %c0_i32, %c0_i32_0 : i32, i32
  }
  func.func @transform_6(%arg0: i32) -> (i32, i32) {
    %c0_i32 = arith.constant 0 : i32
    %c0_i32_0 = arith.constant 0 : i32
    return %arg0, %c0_i32 : i32, i32
  }
}

module attributes {stable_mosaic.version = 11 : i64} {
  func.func @_conv_pool_kernel(%arg0: i32, %arg1: memref<18x576xbf16, #tpu.memory_space<vmem>>, %arg2: memref<18x576xbf16, #tpu.memory_space<vmem>>, %arg3: memref<18x576xbf16, #tpu.memory_space<vmem>>, %arg4: memref<18x576xbf16, #tpu.memory_space<vmem>>, %arg5: memref<576x64xbf16, #tpu.memory_space<vmem>>, %arg6: memref<1x64xf32, #tpu.memory_space<vmem>>, %arg7: memref<18x64xbf16, #tpu.memory_space<vmem>>) attributes {dimension_semantics = [#tpu.dimension_semantics<parallel>], iteration_bounds = array<i64: 1>, scalar_prefetch = 0 : i64, scratch_operands = 0 : i64, tpu.core_type = #tpu.core_type<tc>, window_params = [{transform_indices = @transform_0, window_bounds = array<i64: 18, 576>}, {transform_indices = @transform_1, window_bounds = array<i64: 18, 576>}, {transform_indices = @transform_2, window_bounds = array<i64: 18, 576>}, {transform_indices = @transform_3, window_bounds = array<i64: 18, 576>}, {pipeline_mode = #tpu.pipeline_mode<synchronous>, transform_indices = @transform_4, window_bounds = array<i64: 576, 64>}, {pipeline_mode = #tpu.pipeline_mode<synchronous>, transform_indices = @transform_5, window_bounds = array<i64: 1, 64>}, {transform_indices = @transform_6, window_bounds = array<i64: 18, 64>}]} {
    %c0 = arith.constant 0 : index
    %c0_0 = arith.constant 0 : index
    %0 = vector.load %arg5[%c0, %c0_0] : memref<576x64xbf16, #tpu.memory_space<vmem>>, vector<576x64xbf16>
    %c0_1 = arith.constant 0 : index
    %c0_2 = arith.constant 0 : index
    %1 = vector.load %arg1[%c0_1, %c0_2] : memref<18x576xbf16, #tpu.memory_space<vmem>>, vector<18x576xbf16>
    %cst = arith.constant dense<0.000000e+00> : vector<18x64xf32>
    %2 = tpu.matmul %1, %0, %cst {dimension_numbers = #tpu.dot_dimension_numbers<[1], [0], [0], [1], [0, 0, 1, 1], [], []>} : vector<18x576xbf16>, vector<576x64xbf16>, vector<18x64xf32> -> vector<18x64xf32>
    %c0_3 = arith.constant 0 : index
    %c0_4 = arith.constant 0 : index
    %3 = vector.load %arg2[%c0_3, %c0_4] : memref<18x576xbf16, #tpu.memory_space<vmem>>, vector<18x576xbf16>
    %cst_5 = arith.constant dense<0.000000e+00> : vector<18x64xf32>
    %4 = tpu.matmul %3, %0, %cst_5 {dimension_numbers = #tpu.dot_dimension_numbers<[1], [0], [0], [1], [0, 0, 1, 1], [], []>} : vector<18x576xbf16>, vector<576x64xbf16>, vector<18x64xf32> -> vector<18x64xf32>
    %c0_6 = arith.constant 0 : index
    %c0_7 = arith.constant 0 : index
    %5 = vector.load %arg3[%c0_6, %c0_7] : memref<18x576xbf16, #tpu.memory_space<vmem>>, vector<18x576xbf16>
    %cst_8 = arith.constant dense<0.000000e+00> : vector<18x64xf32>
    %6 = tpu.matmul %5, %0, %cst_8 {dimension_numbers = #tpu.dot_dimension_numbers<[1], [0], [0], [1], [0, 0, 1, 1], [], []>} : vector<18x576xbf16>, vector<576x64xbf16>, vector<18x64xf32> -> vector<18x64xf32>
    %c0_9 = arith.constant 0 : index
    %c0_10 = arith.constant 0 : index
    %7 = vector.load %arg4[%c0_9, %c0_10] : memref<18x576xbf16, #tpu.memory_space<vmem>>, vector<18x576xbf16>
    %cst_11 = arith.constant dense<0.000000e+00> : vector<18x64xf32>
    %8 = tpu.matmul %7, %0, %cst_11 {dimension_numbers = #tpu.dot_dimension_numbers<[1], [0], [0], [1], [0, 0, 1, 1], [], []>} : vector<18x576xbf16>, vector<576x64xbf16>, vector<18x64xf32> -> vector<18x64xf32>
    %9 = arith.maximumf %2, %4 : vector<18x64xf32>
    %10 = arith.maximumf %6, %8 : vector<18x64xf32>
    %11 = arith.maximumf %9, %10 : vector<18x64xf32>
    %c0_12 = arith.constant 0 : index
    %c0_13 = arith.constant 0 : index
    %12 = vector.load %arg6[%c0_12, %c0_13] : memref<1x64xf32, #tpu.memory_space<vmem>>, vector<1x64xf32>
    %13 = vector.broadcast %12 : vector<1x64xf32> to vector<18x64xf32>
    %14 = arith.addf %11, %13 : vector<18x64xf32>
    %cst_14 = arith.constant 0.000000e+00 : f32
    %15 = vector.broadcast %cst_14 : f32 to vector<18x64xf32>
    %16 = arith.maximumf %14, %15 : vector<18x64xf32>
    %17 = arith.truncf %16 : vector<18x64xf32> to vector<18x64xbf16>
    %c0_15 = arith.constant 0 : index
    %c0_16 = arith.constant 0 : index
    %18 = vector.load %arg7[%c0_15, %c0_16] : memref<18x64xbf16, #tpu.memory_space<vmem>>, vector<18x64xbf16>
    tpu.vector_store %arg7[%c0_15, %c0_16], %17 {strides = array<i32>} : memref<18x64xbf16, #tpu.memory_space<vmem>>, vector<18x64xbf16>,
    return
  }
  func.func @transform_0(%arg0: i32) -> (i32, i32) {
    %c0_i32 = arith.constant 0 : i32
    %c0_i32_0 = arith.constant 0 : i32
    return %arg0, %c0_i32 : i32, i32
  }
  func.func @transform_1(%arg0: i32) -> (i32, i32) {
    %c0_i32 = arith.constant 0 : i32
    %c0_i32_0 = arith.constant 0 : i32
    return %arg0, %c0_i32 : i32, i32
  }
  func.func @transform_2(%arg0: i32) -> (i32, i32) {
    %c0_i32 = arith.constant 0 : i32
    %c0_i32_0 = arith.constant 0 : i32
    return %arg0, %c0_i32 : i32, i32
  }
  func.func @transform_3(%arg0: i32) -> (i32, i32) {
    %c0_i32 = arith.constant 0 : i32
    %c0_i32_0 = arith.constant 0 : i32
    return %arg0, %c0_i32 : i32, i32
  }
  func.func @transform_4(%arg0: i32) -> (i32, i32) {
    %c0_i32 = arith.constant 0 : i32
    %c0_i32_0 = arith.constant 0 : i32
    %c0_i32_1 = arith.constant 0 : i32
    return %c0_i32, %c0_i32_0 : i32, i32
  }
  func.func @transform_5(%arg0: i32) -> (i32, i32) {
    %c0_i32 = arith.constant 0 : i32
    %c0_i32_0 = arith.constant 0 : i32
    %c0_i32_1 = arith.constant 0 : i32
    return %c0_i32, %c0_i32_0 : i32, i32
  }
  func.func @transform_6(%arg0: i32) -> (i32, i32) {
    %c0_i32 = arith.constant 0 : i32
    %c0_i32_0 = arith.constant 0 : i32
    return %arg0, %c0_i32 : i32, i32
  }
}

module attributes {stable_mosaic.version = 11 : i64} {
  func.func @_mlp_kernel(%arg0: i32, %arg1: memref<2x576xbf16, #tpu.memory_space<vmem>>, %arg2: memref<576x128xbf16, #tpu.memory_space<vmem>>, %arg3: memref<1x128xf32, #tpu.memory_space<vmem>>, %arg4: memref<128x10xbf16, #tpu.memory_space<vmem>>, %arg5: memref<1x10xf32, #tpu.memory_space<vmem>>, %arg6: memref<2x10xf32, #tpu.memory_space<vmem>>) attributes {dimension_semantics = [#tpu.dimension_semantics<parallel>], iteration_bounds = array<i64: 1>, scalar_prefetch = 0 : i64, scratch_operands = 0 : i64, tpu.core_type = #tpu.core_type<tc>, window_params = [{transform_indices = @transform_0, window_bounds = array<i64: 2, 576>}, {pipeline_mode = #tpu.pipeline_mode<synchronous>, transform_indices = @transform_1, window_bounds = array<i64: 576, 128>}, {pipeline_mode = #tpu.pipeline_mode<synchronous>, transform_indices = @transform_2, window_bounds = array<i64: 1, 128>}, {pipeline_mode = #tpu.pipeline_mode<synchronous>, transform_indices = @transform_3, window_bounds = array<i64: 128, 10>}, {pipeline_mode = #tpu.pipeline_mode<synchronous>, transform_indices = @transform_4, window_bounds = array<i64: 1, 10>}, {transform_indices = @transform_5, window_bounds = array<i64: 2, 10>}]} {
    %c0 = arith.constant 0 : index
    %c0_0 = arith.constant 0 : index
    %0 = vector.load %arg1[%c0, %c0_0] : memref<2x576xbf16, #tpu.memory_space<vmem>>, vector<2x576xbf16>
    %c0_1 = arith.constant 0 : index
    %c0_2 = arith.constant 0 : index
    %1 = vector.load %arg2[%c0_1, %c0_2] : memref<576x128xbf16, #tpu.memory_space<vmem>>, vector<576x128xbf16>
    %cst = arith.constant dense<0.000000e+00> : vector<2x128xf32>
    %2 = tpu.matmul %0, %1, %cst {dimension_numbers = #tpu.dot_dimension_numbers<[1], [0], [0], [1], [0, 0, 1, 1], [], []>} : vector<2x576xbf16>, vector<576x128xbf16>, vector<2x128xf32> -> vector<2x128xf32>
    %c0_3 = arith.constant 0 : index
    %c0_4 = arith.constant 0 : index
    %3 = vector.load %arg3[%c0_3, %c0_4] : memref<1x128xf32, #tpu.memory_space<vmem>>, vector<1x128xf32>
    %4 = vector.broadcast %3 : vector<1x128xf32> to vector<2x128xf32>
    %5 = arith.addf %2, %4 : vector<2x128xf32>
    %cst_5 = arith.constant 0.000000e+00 : f32
    %6 = vector.broadcast %cst_5 : f32 to vector<2x128xf32>
    %7 = arith.maximumf %5, %6 : vector<2x128xf32>
    %8 = arith.truncf %7 : vector<2x128xf32> to vector<2x128xbf16>
    %c0_6 = arith.constant 0 : index
    %c0_7 = arith.constant 0 : index
    %9 = vector.load %arg4[%c0_6, %c0_7] : memref<128x10xbf16, #tpu.memory_space<vmem>>, vector<128x10xbf16>
    %cst_8 = arith.constant dense<0.000000e+00> : vector<2x10xf32>
    %10 = tpu.matmul %8, %9, %cst_8 {dimension_numbers = #tpu.dot_dimension_numbers<[1], [0], [0], [1], [0, 0, 1, 1], [], []>} : vector<2x128xbf16>, vector<128x10xbf16>, vector<2x10xf32> -> vector<2x10xf32>
    %c0_9 = arith.constant 0 : index
    %c0_10 = arith.constant 0 : index
    %11 = vector.load %arg5[%c0_9, %c0_10] : memref<1x10xf32, #tpu.memory_space<vmem>>, vector<1x10xf32>
    %12 = vector.broadcast %11 : vector<1x10xf32> to vector<2x10xf32>
    %13 = arith.addf %10, %12 : vector<2x10xf32>
    %c0_11 = arith.constant 0 : index
    %c0_12 = arith.constant 0 : index
    %14 = vector.load %arg6[%c0_11, %c0_12] : memref<2x10xf32, #tpu.memory_space<vmem>>, vector<2x10xf32>
    tpu.vector_store %arg6[%c0_11, %c0_12], %13 {strides = array<i32>} : memref<2x10xf32, #tpu.memory_space<vmem>>, vector<2x10xf32>,
    return
  }
  func.func @transform_0(%arg0: i32) -> (i32, i32) {
    %c0_i32 = arith.constant 0 : i32
    %c0_i32_0 = arith.constant 0 : i32
    return %arg0, %c0_i32 : i32, i32
  }
  func.func @transform_1(%arg0: i32) -> (i32, i32) {
    %c0_i32 = arith.constant 0 : i32
    %c0_i32_0 = arith.constant 0 : i32
    %c0_i32_1 = arith.constant 0 : i32
    return %c0_i32, %c0_i32_0 : i32, i32
  }
  func.func @transform_2(%arg0: i32) -> (i32, i32) {
    %c0_i32 = arith.constant 0 : i32
    %c0_i32_0 = arith.constant 0 : i32
    %c0_i32_1 = arith.constant 0 : i32
    return %c0_i32, %c0_i32_0 : i32, i32
  }
  func.func @transform_3(%arg0: i32) -> (i32, i32) {
    %c0_i32 = arith.constant 0 : i32
    %c0_i32_0 = arith.constant 0 : i32
    %c0_i32_1 = arith.constant 0 : i32
    return %c0_i32, %c0_i32_0 : i32, i32
  }
  func.func @transform_4(%arg0: i32) -> (i32, i32) {
    %c0_i32 = arith.constant 0 : i32
    %c0_i32_0 = arith.constant 0 : i32
    %c0_i32_1 = arith.constant 0 : i32
    return %c0_i32, %c0_i32_0 : i32, i32
  }
  func.func @transform_5(%arg0: i32) -> (i32, i32) {
    %c0_i32 = arith.constant 0 : i32
    %c0_i32_0 = arith.constant 0 : i32
    return %arg0, %c0_i32 : i32, i32
  }
}

</mosaic_0001>

<llo_original>
// kernel: classifier_cnn_forward.4
$region0: #{classifier_cnn_forward.4}
  #allocation0 [shape = 'u32[]', space=smem, size = 0x4, offset = 0x4, fixed_abs, tag = 'smem constant byte address 0x4 - core index']
  #allocation1 [shape = 'u32[72,128]{1,0:T(1,128)}', space=vmem, size = 0x9000, scoped, tag = 'internal scratch']
  %s0 = inlined_call_operand.vmem [shape: bf16[392,9], index: 0, kind: input, shape index: {}]
  %s1 = inlined_call_operand.vmem [shape: bf16[392,9], index: 1, kind: input, shape index: {}]
  %s2 = inlined_call_operand.vmem [shape: bf16[392,9], index: 2, kind: input, shape index: {}]
  %s3 = inlined_call_operand.vmem [shape: bf16[392,9], index: 3, kind: input, shape index: {}]
  %s4 = inlined_call_operand.vmem [shape: bf16[9,32], index: 4, kind: input, shape index: {}]
  %s5 = inlined_call_operand.vmem [shape: f32[1,32], index: 5, kind: input, shape index: {}]
  %s6 = inlined_call_operand.vmem [shape: bf16[392,32], index: 6, kind: output, shape index: {}]
  %s7 = sld [smem:[#allocation0]]
  $region34: #{classifier_cnn_forward.4} parent=0
    _
  %s9 = ssub.s32 1, %s7
  %s10 = scalar_select 0, %s9, %s7
  // Predicated region
  $region2: #{classifier_cnn_forward.4} parent=0 // pred_check
    _
  $region3: #{classifier_cnn_forward.4} parent=0 // pred_check_branch
    %12 = sbr.rel (0) target = $region5
  $region4: #{classifier_cnn_forward.4} parent=0 // pred_region
    _
  $region5: #{classifier_cnn_forward.4} parent=0 // pred_fallthru
    _
  // Predicated region
  $region6: #{classifier_cnn_forward.4} parent=0 // pred_check
    _
  $region7: #{classifier_cnn_forward.4} parent=0 // pred_check_branch
    %14 = sbr.rel (0) target = $region9
  $region8: #{classifier_cnn_forward.4} parent=0 // pred_region
    _
  $region9: #{classifier_cnn_forward.4} parent=0 // pred_fallthru
    _
  // Predicated region
  $region10: #{classifier_cnn_forward.4} parent=0 // pred_check
    _
  $region11: #{classifier_cnn_forward.4} parent=0 // pred_check_branch
    %16 = sbr.rel (0) target = $region13
  $region12: #{classifier_cnn_forward.4} parent=0 // pred_region
    _
  $region13: #{classifier_cnn_forward.4} parent=0 // pred_fallthru
    _
  // Predicated region
  $region14: #{classifier_cnn_forward.4} parent=0 // pred_check
    _
  $region15: #{classifier_cnn_forward.4} parent=0 // pred_check_branch
    %18 = sbr.rel (0) target = $region17
  $region16: #{classifier_cnn_forward.4} parent=0 // pred_region
    _
  $region17: #{classifier_cnn_forward.4} parent=0 // pred_fallthru
    _
  // Predicated region
  $region18: #{classifier_cnn_forward.4} parent=0 // pred_check
    _
  $region19: #{classifier_cnn_forward.4} parent=0 // pred_check_branch
    %20 = sbr.rel (0) target = $region21
  $region20: #{classifier_cnn_forward.4} parent=0 // pred_region
    _
  $region21: #{classifier_cnn_forward.4} parent=0 // pred_fallthru
    _
  // Predicated region
  $region22: #{classifier_cnn_forward.4} parent=0 // pred_check
    _
  $region23: #{classifier_cnn_forward.4} parent=0 // pred_check_branch
    %22 = sbr.rel (0) target = $region25
  $region24: #{classifier_cnn_forward.4} parent=0 // pred_region
    _
  $region25: #{classifier_cnn_forward.4} parent=0 // pred_fallthru
    _
  %v24 = vld [vmem:[%s4] sm:$0xf]
  %v25 = vld [vmem:[%s4 + $0x4] sm:$0x1]
  %v26 = vld [vmem:[%s0] sm:$0xf]
  %v27 = vld [vmem:[%s0 + $0x4] sm:$0xf]
  %v28 = vld [vmem:[%s0 + $0x8] sm:$0xf]
  %v29 = vld [vmem:[%s0 + $0xc] sm:$0xf]
  %v30 = vld [vmem:[%s0 + $0x10] sm:$0xf]
  %v31 = vld [vmem:[%s0 + $0x14] sm:$0xf]
  %v32 = vld [vmem:[%s0 + $0x18] sm:$0xf]
  %v33 = vld [vmem:[%s0 + $0x1c] sm:$0xf]
  %v34 = vld [vmem:[%s0 + $0x20] sm:$0xf]
  %v35 = vld [vmem:[%s0 + $0x24] sm:$0xf]
  %v36 = vld [vmem:[%s0 + $0x28] sm:$0xf]
  %v37 = vld [vmem:[%s0 + $0x2c] sm:$0xf]
  %v38 = vld [vmem:[%s0 + $0x30] sm:$0xf]
  %v39 = vld [vmem:[%s0 + $0x34] sm:$0xf]
  %v40 = vld [vmem:[%s0 + $0x38] sm:$0xf]
  %v41 = vld [vmem:[%s0 + $0x3c] sm:$0xf]
  %v42 = vld [vmem:[%s0 + $0x40] sm:$0xf]
  %v43 = vld [vmem:[%s0 + $0x44] sm:$0xf]
  %v44 = vld [vmem:[%s0 + $0x48] sm:$0xf]
  %v45 = vld [vmem:[%s0 + $0x4c] sm:$0xf]
  %v46 = vld [vmem:[%s0 + $0x50] sm:$0xf]
  %v47 = vld [vmem:[%s0 + $0x54] sm:$0xf]
  %v48 = vld [vmem:[%s0 + $0x58] sm:$0xf]
  %v49 = vld [vmem:[%s0 + $0x5c] sm:$0xf]
  %v50 = vld [vmem:[%s0 + $0x60] sm:$0xf]
  %v51 = vld [vmem:[%s0 + $0x64] sm:$0xf]
  %v52 = vld [vmem:[%s0 + $0x68] sm:$0xf]
  %v53 = vld [vmem:[%s0 + $0x6c] sm:$0xf]
  %v54 = vld [vmem:[%s0 + $0x70] sm:$0xf]
  %v55 = vld [vmem:[%s0 + $0x74] sm:$0xf]
  %v56 = vld [vmem:[%s0 + $0x78] sm:$0xf]
  %v57 = vld [vmem:[%s0 + $0x7c] sm:$0xf]
  %v58 = vld [vmem:[%s0 + $0x80] sm:$0xf]
  %v59 = vld [vmem:[%s0 + $0x84] sm:$0xf]
  %v60 = vld [vmem:[%s0 + $0x88] sm:$0xf]
  %v61 = vld [vmem:[%s0 + $0x8c] sm:$0xf]
  %v62 = vld [vmem:[%s0 + $0x90] sm:$0xf]
  %v63 = vld [vmem:[%s0 + $0x94] sm:$0xf]
  %v64 = vld [vmem:[%s0 + $0x98] sm:$0xf]
  %v65 = vld [vmem:[%s0 + $0x9c] sm:$0xf]
  %v66 = vld [vmem:[%s0 + $0xa0] sm:$0xf]
  %v67 = vld [vmem:[%s0 + $0xa4] sm:$0xf]
  %v68 = vld [vmem:[%s0 + $0xa8] sm:$0xf]
  %v69 = vld [vmem:[%s0 + $0xac] sm:$0xf]
  %v70 = vld [vmem:[%s0 + $0xb0] sm:$0xf]
  %v71 = vld [vmem:[%s0 + $0xb4] sm:$0xf]
  %v72 = vld [vmem:[%s0 + $0xb8] sm:$0xf]
  %v73 = vld [vmem:[%s0 + $0xbc] sm:$0xf]
  %v74 = vld [vmem:[%s0 + $0xc0] sm:$0xf]
  %v124 = vunpack.c.l.b16 %v26
  %v125 = vunpack.c.l.b16 %v27
  %v126 = vunpack.c.l.b16 %v28
  %v127 = vunpack.c.l.b16 %v29
  %v128 = vunpack.c.l.b16 %v30
  %v129 = vunpack.c.l.b16 %v31
  %v130 = vunpack.c.l.b16 %v32
  %v131 = vunpack.c.l.b16 %v33
  %v132 = vunpack.c.l.b16 %v34
  %v133 = vunpack.c.l.b16 %v35
  %v134 = vunpack.c.l.b16 %v36
  %v135 = vunpack.c.l.b16 %v37
  %v136 = vunpack.c.l.b16 %v38
  %v137 = vunpack.c.l.b16 %v39
  %v138 = vunpack.c.l.b16 %v40
  %v139 = vunpack.c.l.b16 %v41
  %v140 = vunpack.c.l.b16 %v42
  %v141 = vunpack.c.l.b16 %v43
  %v142 = vunpack.c.l.b16 %v44
  %v143 = vunpack.c.l.b16 %v45
  %v144 = vunpack.c.l.b16 %v46
  %v145 = vunpack.c.l.b16 %v47
  %v146 = vunpack.c.l.b16 %v48
  %v147 = vunpack.c.l.b16 %v49
  %v148 = vunpack.c.l.b16 %v50
  %v149 = vunpack.c.l.b16 %v51
  %v150 = vunpack.c.l.b16 %v52
  %v151 = vunpack.c.l.b16 %v53
  %v152 = vunpack.c.l.b16 %v54
  %v153 = vunpack.c.l.b16 %v55
  %v154 = vunpack.c.l.b16 %v56
  %v155 = vunpack.c.l.b16 %v57
  %v156 = vunpack.c.l.b16 %v58
  %v157 = vunpack.c.l.b16 %v59
  %v158 = vunpack.c.l.b16 %v60
  %v159 = vunpack.c.l.b16 %v61
  %v160 = vunpack.c.l.b16 %v62
  %v161 = vunpack.c.l.b16 %v63
  %v162 = vunpack.c.l.b16 %v64
  %v163 = vunpack.c.l.b16 %v65
  %v164 = vunpack.c.l.b16 %v66
  %v165 = vunpack.c.l.b16 %v67
  %v166 = vunpack.c.l.b16 %v68
  %v167 = vunpack.c.l.b16 %v69
  %v168 = vunpack.c.l.b16 %v70
  %v169 = vunpack.c.l.b16 %v71
  %v170 = vunpack.c.l.b16 %v72
  %v171 = vunpack.c.l.b16 %v73
  %v172 = vunpack.c.l.b16 %v74
  %v173 = vpack.c.b16 %v125, %v124
  %v174 = vpack.c.b16 %v127, %v126
  %v175 = vpack.c.b16 %v129, %v128
  %v176 = vpack.c.b16 %v131, %v130
  %v177 = vpack.c.b16 %v133, %v132
  %v178 = vpack.c.b16 %v135, %v134
  %v179 = vpack.c.b16 %v137, %v136
  %v180 = vpack.c.b16 %v139, %v138
  %v181 = vpack.c.b16 %v141, %v140
  %v182 = vpack.c.b16 %v143, %v142
  %v183 = vpack.c.b16 %v145, %v144
  %v184 = vpack.c.b16 %v147, %v146
  %v185 = vpack.c.b16 %v149, %v148
  %v186 = vpack.c.b16 %v151, %v150
  %v187 = vpack.c.b16 %v153, %v152
  %v188 = vpack.c.b16 %v155, %v154
  %v189 = vpack.c.b16 %v157, %v156
  %v190 = vpack.c.b16 %v159, %v158
  %v191 = vpack.c.b16 %v161, %v160
  %v192 = vpack.c.b16 %v163, %v162
  %v193 = vpack.c.b16 %v165, %v164
  %v194 = vpack.c.b16 %v167, %v166
  %v195 = vpack.c.b16 %v169, %v168
  %v196 = vpack.c.b16 %v171, %v170
  %v197 = vpack.c.b16 %v172, %v172
  %v200 = vunpack.c.l.b16 %v24
  %v201 = vunpack.c.l.b16 %v25
  %v202 = vpack.c.b16 %v201, %v200
  %vm203 = vcmask 72704
  %v205 = vsel %vm203, %v173, 0
  %v208 = vsel %vm203, %v174, 0
  %v211 = vsel %vm203, %v175, 0
  %v214 = vsel %vm203, %v176, 0
  %v217 = vsel %vm203, %v177, 0
  %v220 = vsel %vm203, %v178, 0
  %v223 = vsel %vm203, %v179, 0
  %v226 = vsel %vm203, %v180, 0
  %v229 = vsel %vm203, %v181, 0
  %v232 = vsel %vm203, %v182, 0
  %v235 = vsel %vm203, %v183, 0
  %v238 = vsel %vm203, %v184, 0
  %v241 = vsel %vm203, %v185, 0
  %v244 = vsel %vm203, %v186, 0
  %v247 = vsel %vm203, %v187, 0
  %v250 = vsel %vm203, %v188, 0
  %v253 = vsel %vm203, %v189, 0
  %v256 = vsel %vm203, %v190, 0
  %v259 = vsel %vm203, %v191, 0
  %v262 = vsel %vm203, %v192, 0
  %v265 = vsel %vm203, %v193, 0
  %v268 = vsel %vm203, %v194, 0
  %v271 = vsel %vm203, %v195, 0
  %v274 = vsel %vm203, %v196, 0
  %v277 = vsel %vm203, %v197, 0
  %vm279 = vcmask 1043456
  %vm280 = vcmask 1044480
  %v281 = vsel %vm279, 4294967295, 65535
  %v282 = vsel %vm280, %v281, 0
  %v284 = vand.u32 %v202, %v282
  %286 = vmatpush.bf16.msra.mxu0 0
  %287 = vmatpush.bf16.msra.mxu0 0
  %288 = vmatpush.bf16.msra.mxu0 0
  %289 = vmatpush.bf16.msra.mxu0 0
  %290 = vmatpush.bf16.msra.mxu0 0
  %291 = vmatpush.bf16.msra.mxu0 0
  %292 = vmatpush.bf16.msra.mxu0 0
  %293 = vmatpush.bf16.msra.mxu0 %v284
  %294 = vmatmul.bf16.gmra.mxu0 %v205
  %v295 = vpop.f32.mrf.mxu0
  %v296 = vadd.f32 0.0, %v295
  %v297 = vpop.f32.mrf.mxu0
  %v298 = vadd.f32 0.0, %v297
  %299 = vmatmul.bf16.gmra.mxu0 %v208
  %v300 = vpop.f32.mrf.mxu0
  %v301 = vadd.f32 0.0, %v300
  %v302 = vpop.f32.mrf.mxu0
  %v303 = vadd.f32 0.0, %v302
  %304 = vmatmul.bf16.gmra.mxu0 %v211
  %v305 = vpop.f32.mrf.mxu0
  %v306 = vadd.f32 0.0, %v305
  %v307 = vpop.f32.mrf.mxu0
  %v308 = vadd.f32 0.0, %v307
  %309 = vmatmul.bf16.gmra.mxu0 %v214
  %v310 = vpop.f32.mrf.mxu0
  %v311 = vadd.f32 0.0, %v310
  %v312 = vpop.f32.mrf.mxu0
  %v313 = vadd.f32 0.0, %v312
  %314 = vmatmul.bf16.gmra.mxu0 %v217
  %v315 = vpop.f32.mrf.mxu0
  %v316 = vadd.f32 0.0, %v315
  %v317 = vpop.f32.mrf.mxu0
  %v318 = vadd.f32 0.0, %v317
  %319 = vmatmul.bf16.gmra.mxu0 %v220
  %v320 = vpop.f32.mrf.mxu0
  %v321 = vadd.f32 0.0, %v320
  %v322 = vpop.f32.mrf.mxu0
  %v323 = vadd.f32 0.0, %v322
  %324 = vmatmul.bf16.gmra.mxu0 %v223
  %v325 = vpop.f32.mrf.mxu0
  %v326 = vadd.f32 0.0, %v325
  %v327 = vpop.f32.mrf.mxu0
  %v328 = vadd.f32 0.0, %v327
  %329 = vmatmul.bf16.gmra.mxu0 %v226
  %v330 = vpop.f32.mrf.mxu0
  %v331 = vadd.f32 0.0, %v330
  %v332 = vpop.f32.mrf.mxu0
  %v333 = vadd.f32 0.0, %v332
  %334 = vmatmul.bf16.gmra.mxu0 %v229
  %v335 = vpop.f32.mrf.mxu0
  %v336 = vadd.f32 0.0, %v335
  %v337 = vpop.f32.mrf.mxu0
  %v338 = vadd.f32 0.0, %v337
  %339 = vmatmul.bf16.gmra.mxu0 %v232
  %v340 = vpop.f32.mrf.mxu0
  %v341 = vadd.f32 0.0, %v340
  %v342 = vpop.f32.mrf.mxu0
  %v343 = vadd.f32 0.0, %v342
  %344 = vmatmul.bf16.gmra.mxu0 %v235
  %v345 = vpop.f32.mrf.mxu0
  %v346 = vadd.f32 0.0, %v345
  %v347 = vpop.f32.mrf.mxu0
  %v348 = vadd.f32 0.0, %v347
  %349 = vmatmul.bf16.gmra.mxu0 %v238
  %v350 = vpop.f32.mrf.mxu0
  %v351 = vadd.f32 0.0, %v350
  %v352 = vpop.f32.mrf.mxu0
  %v353 = vadd.f32 0.0, %v352
  %354 = vmatmul.bf16.gmra.mxu0 %v241
  %v355 = vpop.f32.mrf.mxu0
  %v356 = vadd.f32 0.0, %v355
  %v357 = vpop.f32.mrf.mxu0
  %v358 = vadd.f32 0.0, %v357
  %359 = vmatmul.bf16.gmra.mxu0 %v244
  %v360 = vpop.f32.mrf.mxu0
  %v361 = vadd.f32 0.0, %v360
  %v362 = vpop.f32.mrf.mxu0
  %v363 = vadd.f32 0.0, %v362
  %364 = vmatmul.bf16.gmra.mxu0 %v247
  %v365 = vpop.f32.mrf.mxu0
  %v366 = vadd.f32 0.0, %v365
  %v367 = vpop.f32.mrf.mxu0
  %v368 = vadd.f32 0.0, %v367
  %369 = vmatmul.bf16.gmra.mxu0 %v250
  %v370 = vpop.f32.mrf.mxu0
  %v371 = vadd.f32 0.0, %v370
  %v372 = vpop.f32.mrf.mxu0
  %v373 = vadd.f32 0.0, %v372
  %374 = vmatmul.bf16.gmra.mxu0 %v253
  %v375 = vpop.f32.mrf.mxu0
  %v376 = vadd.f32 0.0, %v375
  %v377 = vpop.f32.mrf.mxu0
  %v378 = vadd.f32 0.0, %v377
  %379 = vmatmul.bf16.gmra.mxu0 %v256
  %v380 = vpop.f32.mrf.mxu0
  %v381 = vadd.f32 0.0, %v380
  %v382 = vpop.f32.mrf.mxu0
  %v383 = vadd.f32 0.0, %v382
  %384 = vmatmul.bf16.gmra.mxu0 %v259
  %v385 = vpop.f32.mrf.mxu0
  %v386 = vadd.f32 0.0, %v385
  %v387 = vpop.f32.mrf.mxu0
  %v388 = vadd.f32 0.0, %v387
  %389 = vmatmul.bf16.gmra.mxu0 %v262
  %v390 = vpop.f32.mrf.mxu0
  %v391 = vadd.f32 0.0, %v390
  %v392 = vpop.f32.mrf.mxu0
  %v393 = vadd.f32 0.0, %v392
  %394 = vmatmul.bf16.gmra.mxu0 %v265
  %v395 = vpop.f32.mrf.mxu0
  %v396 = vadd.f32 0.0, %v395
  %v397 = vpop.f32.mrf.mxu0
  %v398 = vadd.f32 0.0, %v397
  %399 = vmatmul.bf16.gmra.mxu0 %v268
  %v400 = vpop.f32.mrf.mxu0
  %v401 = vadd.f32 0.0, %v400
  %v402 = vpop.f32.mrf.mxu0
  %v403 = vadd.f32 0.0, %v402
  %404 = vmatmul.bf16.gmra.mxu0 %v271
  %v405 = vpop.f32.mrf.mxu0
  %v406 = vadd.f32 0.0, %v405
  %v407 = vpop.f32.mrf.mxu0
  %v408 = vadd.f32 0.0, %v407
  %409 = vmatmul.bf16.gmra.mxu0 %v274
  %v410 = vpop.f32.mrf.mxu0
  %v411 = vadd.f32 0.0, %v410
  %v412 = vpop.f32.mrf.mxu0
  %v413 = vadd.f32 0.0, %v412
  %414 = vmatmul.bf16.gmra.mxu0 %v277
  %v415 = vpop.f32.mrf.mxu0
  %v416 = vadd.f32 0.0, %v415
  %v417 = vpop.f32.mrf.mxu0
  %418 = vdwg.mxu0
  %v419 = vld [vmem:[%s1] sm:$0xf]
  %v420 = vld [vmem:[%s1 + $0x4] sm:$0xf]
  %v421 = vld [vmem:[%s1 + $0x8] sm:$0xf]
  %v422 = vld [vmem:[%s1 + $0xc] sm:$0xf]
  %v423 = vld [vmem:[%s1 + $0x10] sm:$0xf]
  %v424 = vld [vmem:[%s1 + $0x14] sm:$0xf]
  %v425 = vld [vmem:[%s1 + $0x18] sm:$0xf]
  %v426 = vld [vmem:[%s1 + $0x1c] sm:$0xf]
  %v427 = vld [vmem:[%s1 + $0x20] sm:$0xf]
  %v428 = vld [vmem:[%s1 + $0x24] sm:$0xf]
  %v429 = vld [vmem:[%s1 + $0x28] sm:$0xf]
  %v430 = vld [vmem:[%s1 + $0x2c] sm:$0xf]
  %v431 = vld [vmem:[%s1 + $0x30] sm:$0xf]
  %v432 = vld [vmem:[%s1 + $0x34] sm:$0xf]
  %v433 = vld [vmem:[%s1 + $0x38] sm:$0xf]
  %v434 = vld [vmem:[%s1 + $0x3c] sm:$0xf]
  %v435 = vld [vmem:[%s1 + $0x40] sm:$0xf]
  %v436 = vld [vmem:[%s1 + $0x44] sm:$0xf]
  %v437 = vld [vmem:[%s1 + $0x48] sm:$0xf]
  %v438 = vld [vmem:[%s1 + $0x4c] sm:$0xf]
  %v439 = vld [vmem:[%s1 + $0x50] sm:$0xf]
  %v440 = vld [vmem:[%s1 + $0x54] sm:$0xf]
  %v441 = vld [vmem:[%s1 + $0x58] sm:$0xf]
  %v442 = vld [vmem:[%s1 + $0x5c] sm:$0xf]
  %v443 = vld [vmem:[%s1 + $0x60] sm:$0xf]
  %v444 = vld [vmem:[%s1 + $0x64] sm:$0xf]
  %v445 = vld [vmem:[%s1 + $0x68] sm:$0xf]
  %v446 = vld [vmem:[%s1 + $0x6c] sm:$0xf]
  %v447 = vld [vmem:[%s1 + $0x70] sm:$0xf]
  %v448 = vld [vmem:[%s1 + $0x74] sm:$0xf]
  %v449 = vld [vmem:[%s1 + $0x78] sm:$0xf]
  %v450 = vld [vmem:[%s1 + $0x7c] sm:$0xf]
  %v451 = vld [vmem:[%s1 + $0x80] sm:$0xf]
  %v452 = vld [vmem:[%s1 + $0x84] sm:$0xf]
  %v453 = vld [vmem:[%s1 + $0x88] sm:$0xf]
  %v454 = vld [vmem:[%s1 + $0x8c] sm:$0xf]
  %v455 = vld [vmem:[%s1 + $0x90] sm:$0xf]
  %v456 = vld [vmem:[%s1 + $0x94] sm:$0xf]
  %v457 = vld [vmem:[%s1 + $0x98] sm:$0xf]
  %v458 = vld [vmem:[%s1 + $0x9c] sm:$0xf]
  %v459 = vld [vmem:[%s1 + $0xa0] sm:$0xf]
  %v460 = vld [vmem:[%s1 + $0xa4] sm:$0xf]
  %v461 = vld [vmem:[%s1 + $0xa8] sm:$0xf]
  %v462 = vld [vmem:[%s1 + $0xac] sm:$0xf]
  %v463 = vld [vmem:[%s1 + $0xb0] sm:$0xf]
  %v464 = vld [vmem:[%s1 + $0xb4] sm:$0xf]
  %v465 = vld [vmem:[%s1 + $0xb8] sm:$0xf]
  %v466 = vld [vmem:[%s1 + $0xbc] sm:$0xf]
  %v467 = vld [vmem:[%s1 + $0xc0] sm:$0xf]
  %v517 = vunpack.c.l.b16 %v419
  %v518 = vunpack.c.l.b16 %v420
  %v519 = vunpack.c.l.b16 %v421
  %v520 = vunpack.c.l.b16 %v422
  %v521 = vunpack.c.l.b16 %v423
  %v522 = vunpack.c.l.b16 %v424
  %v523 = vunpack.c.l.b16 %v425
  %v524 = vunpack.c.l.b16 %v426
  %v525 = vunpack.c.l.b16 %v427
  %v526 = vunpack.c.l.b16 %v428
  %v527 = vunpack.c.l.b16 %v429
  %v528 = vunpack.c.l.b16 %v430
  %v529 = vunpack.c.l.b16 %v431
  %v530 = vunpack.c.l.b16 %v432
  %v531 = vunpack.c.l.b16 %v433
  %v532 = vunpack.c.l.b16 %v434
  %v533 = vunpack.c.l.b16 %v435
  %v534 = vunpack.c.l.b16 %v436
  %v535 = vunpack.c.l.b16 %v437
  %v536 = vunpack.c.l.b16 %v438
  %v537 = vunpack.c.l.b16 %v439
  %v538 = vunpack.c.l.b16 %v440
  %v539 = vunpack.c.l.b16 %v441
  %v540 = vunpack.c.l.b16 %v442
  %v541 = vunpack.c.l.b16 %v443
  %v542 = vunpack.c.l.b16 %v444
  %v543 = vunpack.c.l.b16 %v445
  %v544 = vunpack.c.l.b16 %v446
  %v545 = vunpack.c.l.b16 %v447
  %v546 = vunpack.c.l.b16 %v448
  %v547 = vunpack.c.l.b16 %v449
  %v548 = vunpack.c.l.b16 %v450
  %v549 = vunpack.c.l.b16 %v451
  %v550 = vunpack.c.l.b16 %v452
  %v551 = vunpack.c.l.b16 %v453
  %v552 = vunpack.c.l.b16 %v454
  %v553 = vunpack.c.l.b16 %v455
  %v554 = vunpack.c.l.b16 %v456
  %v555 = vunpack.c.l.b16 %v457
  %v556 = vunpack.c.l.b16 %v458
  %v557 = vunpack.c.l.b16 %v459
  %v558 = vunpack.c.l.b16 %v460
  %v559 = vunpack.c.l.b16 %v461
  %v560 = vunpack.c.l.b16 %v462
  %v561 = vunpack.c.l.b16 %v463
  %v562 = vunpack.c.l.b16 %v464
  %v563 = vunpack.c.l.b16 %v465
  %v564 = vunpack.c.l.b16 %v466
  %v565 = vunpack.c.l.b16 %v467
  %v566 = vpack.c.b16 %v518, %v517
  %v567 = vpack.c.b16 %v520, %v519
  %v568 = vpack.c.b16 %v522, %v521
  %v569 = vpack.c.b16 %v524, %v523
  %v570 = vpack.c.b16 %v526, %v525
  %v571 = vpack.c.b16 %v528, %v527
  %v572 = vpack.c.b16 %v530, %v529
  %v573 = vpack.c.b16 %v532, %v531
  %v574 = vpack.c.b16 %v534, %v533
  %v575 = vpack.c.b16 %v536, %v535
  %v576 = vpack.c.b16 %v538, %v537
  %v577 = vpack.c.b16 %v540, %v539
  %v578 = vpack.c.b16 %v542, %v541
  %v579 = vpack.c.b16 %v544, %v543
  %v580 = vpack.c.b16 %v546, %v545
  %v581 = vpack.c.b16 %v548, %v547
  %v582 = vpack.c.b16 %v550, %v549
  %v583 = vpack.c.b16 %v552, %v551
  %v584 = vpack.c.b16 %v554, %v553
  %v585 = vpack.c.b16 %v556, %v555
  %v586 = vpack.c.b16 %v558, %v557
  %v587 = vpack.c.b16 %v560, %v559
  %v588 = vpack.c.b16 %v562, %v561
  %v589 = vpack.c.b16 %v564, %v563
  %v590 = vpack.c.b16 %v565, %v565
  %v592 = vsel %vm203, %v566, 0
  %v595 = vsel %vm203, %v567, 0
  %v598 = vsel %vm203, %v568, 0
  %v601 = vsel %vm203, %v569, 0
  %v604 = vsel %vm203, %v570, 0
  %v607 = vsel %vm203, %v571, 0
  %v610 = vsel %vm203, %v572, 0
  %v613 = vsel %vm203, %v573, 0
  %v616 = vsel %vm203, %v574, 0
  %v619 = vsel %vm203, %v575, 0
  %v622 = vsel %vm203, %v576, 0
  %v625 = vsel %vm203, %v577, 0
  %v628 = vsel %vm203, %v578, 0
  %v631 = vsel %vm203, %v579, 0
  %v634 = vsel %vm203, %v580, 0
  %v637 = vsel %vm203, %v581, 0
  %v640 = vsel %vm203, %v582, 0
  %v643 = vsel %vm203, %v583, 0
  %v646 = vsel %vm203, %v584, 0
  %v649 = vsel %vm203, %v585, 0
  %v652 = vsel %vm203, %v586, 0
  %v655 = vsel %vm203, %v587, 0
  %v658 = vsel %vm203, %v588, 0
  %v661 = vsel %vm203, %v589, 0
  %v664 = vsel %vm203, %v590, 0
  %666 = vmatpush.bf16.msra.mxu0 0
  %667 = vmatpush.bf16.msra.mxu0 0
  %668 = vmatpush.bf16.msra.mxu0 0
  %669 = vmatpush.bf16.msra.mxu0 0
  %670 = vmatpush.bf16.msra.mxu0 0
  %671 = vmatpush.bf16.msra.mxu0 0
  %672 = vmatpush.bf16.msra.mxu0 0
  %673 = vmatpush.bf16.msra.mxu0 %v284
  %674 = vmatmul.bf16.gmra.mxu0 %v592
  %v675 = vpop.f32.mrf.mxu0
  %v676 = vadd.f32 0.0, %v675
  %v677 = vpop.f32.mrf.mxu0
  %v678 = vadd.f32 0.0, %v677
  %679 = vmatmul.bf16.gmra.mxu0 %v595
  %v680 = vpop.f32.mrf.mxu0
  %v681 = vadd.f32 0.0, %v680
  %v682 = vpop.f32.mrf.mxu0
  %v683 = vadd.f32 0.0, %v682
  %684 = vmatmul.bf16.gmra.mxu0 %v598
  %v685 = vpop.f32.mrf.mxu0
  %v686 = vadd.f32 0.0, %v685
  %v687 = vpop.f32.mrf.mxu0
  %v688 = vadd.f32 0.0, %v687
  %689 = vmatmul.bf16.gmra.mxu0 %v601
  %v690 = vpop.f32.mrf.mxu0
  %v691 = vadd.f32 0.0, %v690
  %v692 = vpop.f32.mrf.mxu0
  %v693 = vadd.f32 0.0, %v692
  %694 = vmatmul.bf16.gmra.mxu0 %v604
  %v695 = vpop.f32.mrf.mxu0
  %v696 = vadd.f32 0.0, %v695
  %v697 = vpop.f32.mrf.mxu0
  %v698 = vadd.f32 0.0, %v697
  %699 = vmatmul.bf16.gmra.mxu0 %v607
  %v700 = vpop.f32.mrf.mxu0
  %v701 = vadd.f32 0.0, %v700
  %v702 = vpop.f32.mrf.mxu0
  %v703 = vadd.f32 0.0, %v702
  %704 = vmatmul.bf16.gmra.mxu0 %v610
  %v705 = vpop.f32.mrf.mxu0
  %v706 = vadd.f32 0.0, %v705
  %v707 = vpop.f32.mrf.mxu0
  %v708 = vadd.f32 0.0, %v707
  %709 = vmatmul.bf16.gmra.mxu0 %v613
  %v710 = vpop.f32.mrf.mxu0
  %v711 = vadd.f32 0.0, %v710
  %v712 = vpop.f32.mrf.mxu0
  %v713 = vadd.f32 0.0, %v712
  %714 = vmatmul.bf16.gmra.mxu0 %v616
  %v715 = vpop.f32.mrf.mxu0
  %v716 = vadd.f32 0.0, %v715
  %v717 = vpop.f32.mrf.mxu0
  %v718 = vadd.f32 0.0, %v717
  %719 = vmatmul.bf16.gmra.mxu0 %v619
  %v720 = vpop.f32.mrf.mxu0
  %v721 = vadd.f32 0.0, %v720
  %v722 = vpop.f32.mrf.mxu0
  %v723 = vadd.f32 0.0, %v722
  %724 = vmatmul.bf16.gmra.mxu0 %v622
  %v725 = vpop.f32.mrf.mxu0
  %v726 = vadd.f32 0.0, %v725
  %v727 = vpop.f32.mrf.mxu0
  %v728 = vadd.f32 0.0, %v727
  %729 = vmatmul.bf16.gmra.mxu0 %v625
  %v730 = vpop.f32.mrf.mxu0
  %v731 = vadd.f32 0.0, %v730
  %v732 = vpop.f32.mrf.mxu0
  %v733 = vadd.f32 0.0, %v732
  %734 = vmatmul.bf16.gmra.mxu0 %v628
  %v735 = vpop.f32.mrf.mxu0
  %v736 = vadd.f32 0.0, %v735
  %v737 = vpop.f32.mrf.mxu0
  %v738 = vadd.f32 0.0, %v737
  %739 = vmatmul.bf16.gmra.mxu0 %v631
  %v740 = vpop.f32.mrf.mxu0
  %v741 = vadd.f32 0.0, %v740
  %v742 = vpop.f32.mrf.mxu0
  %v743 = vadd.f32 0.0, %v742
  %744 = vmatmul.bf16.gmra.mxu0 %v634
  %v745 = vpop.f32.mrf.mxu0
  %v746 = vadd.f32 0.0, %v745
  %v747 = vpop.f32.mrf.mxu0
  %v748 = vadd.f32 0.0, %v747
  %749 = vmatmul.bf16.gmra.mxu0 %v637
  %v750 = vpop.f32.mrf.mxu0
  %v751 = vadd.f32 0.0, %v750
  %v752 = vpop.f32.mrf.mxu0
  %v753 = vadd.f32 0.0, %v752
  %754 = vmatmul.bf16.gmra.mxu0 %v640
  %v755 = vpop.f32.mrf.mxu0
  %v756 = vadd.f32 0.0, %v755
  %v757 = vpop.f32.mrf.mxu0
  %v758 = vadd.f32 0.0, %v757
  %759 = vmatmul.bf16.gmra.mxu0 %v643
  %v760 = vpop.f32.mrf.mxu0
  %v761 = vadd.f32 0.0, %v760
  %v762 = vpop.f32.mrf.mxu0
  %v763 = vadd.f32 0.0, %v762
  %764 = vmatmul.bf16.gmra.mxu0 %v646
  %v765 = vpop.f32.mrf.mxu0
  %v766 = vadd.f32 0.0, %v765
  %v767 = vpop.f32.mrf.mxu0
  %v768 = vadd.f32 0.0, %v767
  %769 = vmatmul.bf16.gmra.mxu0 %v649
  %v770 = vpop.f32.mrf.mxu0
  %v771 = vadd.f32 0.0, %v770
  %v772 = vpop.f32.mrf.mxu0
  %v773 = vadd.f32 0.0, %v772
  %774 = vmatmul.bf16.gmra.mxu0 %v652
  %v775 = vpop.f32.mrf.mxu0
  %v776 = vadd.f32 0.0, %v775
  %v777 = vpop.f32.mrf.mxu0
  %v778 = vadd.f32 0.0, %v777
  %779 = vmatmul.bf16.gmra.mxu0 %v655
  %v780 = vpop.f32.mrf.mxu0
  %v781 = vadd.f32 0.0, %v780
  %v782 = vpop.f32.mrf.mxu0
  %v783 = vadd.f32 0.0, %v782
  %784 = vmatmul.bf16.gmra.mxu0 %v658
  %v785 = vpop.f32.mrf.mxu0
  %v786 = vadd.f32 0.0, %v785
  %v787 = vpop.f32.mrf.mxu0
  %v788 = vadd.f32 0.0, %v787
  %789 = vmatmul.bf16.gmra.mxu0 %v661
  %v790 = vpop.f32.mrf.mxu0
  %v791 = vadd.f32 0.0, %v790
  %v792 = vpop.f32.mrf.mxu0
  %v793 = vadd.f32 0.0, %v792
  %794 = vmatmul.bf16.gmra.mxu0 %v664
  %v795 = vpop.f32.mrf.mxu0
  %v796 = vadd.f32 0.0, %v795
  %v797 = vpop.f32.mrf.mxu0
  %798 = vdwg.mxu0
  %v799 = vld [vmem:[%s2] sm:$0xf]
  %v800 = vld [vmem:[%s2 + $0x4] sm:$0xf]
  %v801 = vld [vmem:[%s2 + $0x8] sm:$0xf]
  %v802 = vld [vmem:[%s2 + $0xc] sm:$0xf]
  %v803 = vld [vmem:[%s2 + $0x10] sm:$0xf]
  %v804 = vld [vmem:[%s2 + $0x14] sm:$0xf]
  %v805 = vld [vmem:[%s2 + $0x18] sm:$0xf]
  %v806 = vld [vmem:[%s2 + $0x1c] sm:$0xf]
  %v807 = vld [vmem:[%s2 + $0x20] sm:$0xf]
  %v808 = vld [vmem:[%s2 + $0x24] sm:$0xf]
  %v809 = vld [vmem:[%s2 + $0x28] sm:$0xf]
  %v810 = vld [vmem:[%s2 + $0x2c] sm:$0xf]
  %v811 = vld [vmem:[%s2 + $0x30] sm:$0xf]
  %v812 = vld [vmem:[%s2 + $0x34] sm:$0xf]
  %v813 = vld [vmem:[%s2 + $0x38] sm:$0xf]
  %v814 = vld [vmem:[%s2 + $0x3c] sm:$0xf]
  %v815 = vld [vmem:[%s2 + $0x40] sm:$0xf]
  %v816 = vld [vmem:[%s2 + $0x44] sm:$0xf]
  %v817 = vld [vmem:[%s2 + $0x48] sm:$0xf]
  %v818 = vld [vmem:[%s2 + $0x4c] sm:$0xf]
  %v819 = vld [vmem:[%s2 + $0x50] sm:$0xf]
  %v820 = vld [vmem:[%s2 + $0x54] sm:$0xf]
  %v821 = vld [vmem:[%s2 + $0x58] sm:$0xf]
  %v822 = vld [vmem:[%s2 + $0x5c] sm:$0xf]
  %v823 = vld [vmem:[%s2 + $0x60] sm:$0xf]
  %v824 = vld [vmem:[%s2 + $0x64] sm:$0xf]
  %v825 = vld [vmem:[%s2 + $0x68] sm:$0xf]
  %v826 = vld [vmem:[%s2 + $0x6c] sm:$0xf]
  %v827 = vld [vmem:[%s2 + $0x70] sm:$0xf]
  %v828 = vld [vmem:[%s2 + $0x74] sm:$0xf]
  %v829 = vld [vmem:[%s2 + $0x78] sm:$0xf]
  %v830 = vld [vmem:[%s2 + $0x7c] sm:$0xf]
  %v831 = vld [vmem:[%s2 + $0x80] sm:$0xf]
  %v832 = vld [vmem:[%s2 + $0x84] sm:$0xf]
  %v833 = vld [vmem:[%s2 + $0x88] sm:$0xf]
  %v834 = vld [vmem:[%s2 + $0x8c] sm:$0xf]
  %v835 = vld [vmem:[%s2 + $0x90] sm:$0xf]
  %v836 = vld [vmem:[%s2 + $0x94] sm:$0xf]
  %v837 = vld [vmem:[%s2 + $0x98] sm:$0xf]
  %v838 = vld [vmem:[%s2 + $0x9c] sm:$0xf]
  %v839 = vld [vmem:[%s2 + $0xa0] sm:$0xf]
  %v840 = vld [vmem:[%s2 + $0xa4] sm:$0xf]
  %v841 = vld [vmem:[%s2 + $0xa8] sm:$0xf]
  %v842 = vld [vmem:[%s2 + $0xac] sm:$0xf]
  %v843 = vld [vmem:[%s2 + $0xb0] sm:$0xf]
  %v844 = vld [vmem:[%s2 + $0xb4] sm:$0xf]
  %v845 = vld [vmem:[%s2 + $0xb8] sm:$0xf]
  %v846 = vld [vmem:[%s2 + $0xbc] sm:$0xf]
  %v847 = vld [vmem:[%s2 + $0xc0] sm:$0xf]
  %v897 = vunpack.c.l.b16 %v799
  %v898 = vunpack.c.l.b16 %v800
  %v899 = vunpack.c.l.b16 %v801
  %v900 = vunpack.c.l.b16 %v802
  %v901 = vunpack.c.l.b16 %v803
  %v902 = vunpack.c.l.b16 %v804
  %v903 = vunpack.c.l.b16 %v805
  %v904 = vunpack.c.l.b16 %v806
  %v905 = vunpack.c.l.b16 %v807
  %v906 = vunpack.c.l.b16 %v808
  %v907 = vunpack.c.l.b16 %v809
  %v908 = vunpack.c.l.b16 %v810
  %v909 = vunpack.c.l.b16 %v811
  %v910 = vunpack.c.l.b16 %v812
  %v911 = vunpack.c.l.b16 %v813
  %v912 = vunpack.c.l.b16 %v814
  %v913 = vunpack.c.l.b16 %v815
  %v914 = vunpack.c.l.b16 %v816
  %v915 = vunpack.c.l.b16 %v817
  %v916 = vunpack.c.l.b16 %v818
  %v917 = vunpack.c.l.b16 %v819
  %v918 = vunpack.c.l.b16 %v820
  %v919 = vunpack.c.l.b16 %v821
  %v920 = vunpack.c.l.b16 %v822
  %v921 = vunpack.c.l.b16 %v823
  %v922 = vunpack.c.l.b16 %v824
  %v923 = vunpack.c.l.b16 %v825
  %v924 = vunpack.c.l.b16 %v826
  %v925 = vunpack.c.l.b16 %v827
  %v926 = vunpack.c.l.b16 %v828
  %v927 = vunpack.c.l.b16 %v829
  %v928 = vunpack.c.l.b16 %v830
  %v929 = vunpack.c.l.b16 %v831
  %v930 = vunpack.c.l.b16 %v832
  %v931 = vunpack.c.l.b16 %v833
  %v932 = vunpack.c.l.b16 %v834
  %v933 = vunpack.c.l.b16 %v835
  %v934 = vunpack.c.l.b16 %v836
  %v935 = vunpack.c.l.b16 %v837
  %v936 = vunpack.c.l.b16 %v838
  %v937 = vunpack.c.l.b16 %v839
  %v938 = vunpack.c.l.b16 %v840
  %v939 = vunpack.c.l.b16 %v841
  %v940 = vunpack.c.l.b16 %v842
  %v941 = vunpack.c.l.b16 %v843
  %v942 = vunpack.c.l.b16 %v844
  %v943 = vunpack.c.l.b16 %v845
  %v944 = vunpack.c.l.b16 %v846
  %v945 = vunpack.c.l.b16 %v847
  %v946 = vpack.c.b16 %v898, %v897
  %v947 = vpack.c.b16 %v900, %v899
  %v948 = vpack.c.b16 %v902, %v901
  %v949 = vpack.c.b16 %v904, %v903
  %v950 = vpack.c.b16 %v906, %v905
  %v951 = vpack.c.b16 %v908, %v907
  %v952 = vpack.c.b16 %v910, %v909
  %v953 = vpack.c.b16 %v912, %v911
  %v954 = vpack.c.b16 %v914, %v913
  %v955 = vpack.c.b16 %v916, %v915
  %v956 = vpack.c.b16 %v918, %v917
  %v957 = vpack.c.b16 %v920, %v919
  %v958 = vpack.c.b16 %v922, %v921
  %v959 = vpack.c.b16 %v924, %v923
  %v960 = vpack.c.b16 %v926, %v925
  %v961 = vpack.c.b16 %v928, %v927
  %v962 = vpack.c.b16 %v930, %v929
  %v963 = vpack.c.b16 %v932, %v931
  %v964 = vpack.c.b16 %v934, %v933
  %v965 = vpack.c.b16 %v936, %v935
  %v966 = vpack.c.b16 %v938, %v937
  %v967 = vpack.c.b16 %v940, %v939
  %v968 = vpack.c.b16 %v942, %v941
  %v969 = vpack.c.b16 %v944, %v943
  %v970 = vpack.c.b16 %v945, %v945
  %v972 = vsel %vm203, %v946, 0
  %v975 = vsel %vm203, %v947, 0
  %v978 = vsel %vm203, %v948, 0
  %v981 = vsel %vm203, %v949, 0
  %v984 = vsel %vm203, %v950, 0
  %v987 = vsel %vm203, %v951, 0
  %v990 = vsel %vm203, %v952, 0
  %v993 = vsel %vm203, %v953, 0
  %v996 = vsel %vm203, %v954, 0
  %v999 = vsel %vm203, %v955, 0
  %v1002 = vsel %vm203, %v956, 0
  %v1005 = vsel %vm203, %v957, 0
  %v1008 = vsel %vm203, %v958, 0
  %v1011 = vsel %vm203, %v959, 0
  %v1014 = vsel %vm203, %v960, 0
  %v1017 = vsel %vm203, %v961, 0
  %v1020 = vsel %vm203, %v962, 0
  %v1023 = vsel %vm203, %v963, 0
  %v1026 = vsel %vm203, %v964, 0
  %v1029 = vsel %vm203, %v965, 0
  %v1032 = vsel %vm203, %v966, 0
  %v1035 = vsel %vm203, %v967, 0
  %v1038 = vsel %vm203, %v968, 0
  %v1041 = vsel %vm203, %v969, 0
  %v1044 = vsel %vm203, %v970, 0
  %1046 = vmatpush.bf16.msra.mxu0 0
  %1047 = vmatpush.bf16.msra.mxu0 0
  %1048 = vmatpush.bf16.msra.mxu0 0
  %1049 = vmatpush.bf16.msra.mxu0 0
  %1050 = vmatpush.bf16.msra.mxu0 0
  %1051 = vmatpush.bf16.msra.mxu0 0
  %1052 = vmatpush.bf16.msra.mxu0 0
  %1053 = vmatpush.bf16.msra.mxu0 %v284
  %1054 = vmatmul.bf16.gmra.mxu0 %v972
  %v1055 = vpop.f32.mrf.mxu0
  %v1056 = vadd.f32 0.0, %v1055
  %v1057 = vpop.f32.mrf.mxu0
  %v1058 = vadd.f32 0.0, %v1057
  %1059 = vmatmul.bf16.gmra.mxu0 %v975
  %v1060 = vpop.f32.mrf.mxu0
  %v1061 = vadd.f32 0.0, %v1060
  %v1062 = vpop.f32.mrf.mxu0
  %v1063 = vadd.f32 0.0, %v1062
  %1064 = vmatmul.bf16.gmra.mxu0 %v978
  %v1065 = vpop.f32.mrf.mxu0
  %v1066 = vadd.f32 0.0, %v1065
  %v1067 = vpop.f32.mrf.mxu0
  %v1068 = vadd.f32 0.0, %v1067
  %1069 = vmatmul.bf16.gmra.mxu0 %v981
  %v1070 = vpop.f32.mrf.mxu0
  %v1071 = vadd.f32 0.0, %v1070
  %v1072 = vpop.f32.mrf.mxu0
  %v1073 = vadd.f32 0.0, %v1072
  %1074 = vmatmul.bf16.gmra.mxu0 %v984
  %v1075 = vpop.f32.mrf.mxu0
  %v1076 = vadd.f32 0.0, %v1075
  %v1077 = vpop.f32.mrf.mxu0
  %v1078 = vadd.f32 0.0, %v1077
  %1079 = vmatmul.bf16.gmra.mxu0 %v987
  %v1080 = vpop.f32.mrf.mxu0
  %v1081 = vadd.f32 0.0, %v1080
  %v1082 = vpop.f32.mrf.mxu0
  %v1083 = vadd.f32 0.0, %v1082
  %1084 = vmatmul.bf16.gmra.mxu0 %v990
  %v1085 = vpop.f32.mrf.mxu0
  %v1086 = vadd.f32 0.0, %v1085
  %v1087 = vpop.f32.mrf.mxu0
  %v1088 = vadd.f32 0.0, %v1087
  %1089 = vmatmul.bf16.gmra.mxu0 %v993
  %v1090 = vpop.f32.mrf.mxu0
  %v1091 = vadd.f32 0.0, %v1090
  %v1092 = vpop.f32.mrf.mxu0
  %v1093 = vadd.f32 0.0, %v1092
  %1094 = vmatmul.bf16.gmra.mxu0 %v996
  %v1095 = vpop.f32.mrf.mxu0
  %v1096 = vadd.f32 0.0, %v1095
  %v1097 = vpop.f32.mrf.mxu0
  %v1098 = vadd.f32 0.0, %v1097
  %1099 = vmatmul.bf16.gmra.mxu0 %v999
  %v1100 = vpop.f32.mrf.mxu0
  %v1101 = vadd.f32 0.0, %v1100
  %v1102 = vpop.f32.mrf.mxu0
  %v1103 = vadd.f32 0.0, %v1102
  %1104 = vmatmul.bf16.gmra.mxu0 %v1002
  %v1105 = vpop.f32.mrf.mxu0
  %v1106 = vadd.f32 0.0, %v1105
  %v1107 = vpop.f32.mrf.mxu0
  %v1108 = vadd.f32 0.0, %v1107
  %1109 = vmatmul.bf16.gmra.mxu0 %v1005
  %v1110 = vpop.f32.mrf.mxu0
  %v1111 = vadd.f32 0.0, %v1110
  %v1112 = vpop.f32.mrf.mxu0
  %v1113 = vadd.f32 0.0, %v1112
  %1114 = vmatmul.bf16.gmra.mxu0 %v1008
  %v1115 = vpop.f32.mrf.mxu0
  %v1116 = vadd.f32 0.0, %v1115
  %v1117 = vpop.f32.mrf.mxu0
  %v1118 = vadd.f32 0.0, %v1117
  %1119 = vmatmul.bf16.gmra.mxu0 %v1011
  %v1120 = vpop.f32.mrf.mxu0
  %v1121 = vadd.f32 0.0, %v1120
  %v1122 = vpop.f32.mrf.mxu0
  %v1123 = vadd.f32 0.0, %v1122
  %1124 = vmatmul.bf16.gmra.mxu0 %v1014
  %v1125 = vpop.f32.mrf.mxu0
  %v1126 = vadd.f32 0.0, %v1125
  %v1127 = vpop.f32.mrf.mxu0
  %v1128 = vadd.f32 0.0, %v1127
  %1129 = vmatmul.bf16.gmra.mxu0 %v1017
  %v1130 = vpop.f32.mrf.mxu0
  %v1131 = vadd.f32 0.0, %v1130
  %v1132 = vpop.f32.mrf.mxu0
  %v1133 = vadd.f32 0.0, %v1132
  %1134 = vmatmul.bf16.gmra.mxu0 %v1020
  %v1135 = vpop.f32.mrf.mxu0
  %v1136 = vadd.f32 0.0, %v1135
  %v1137 = vpop.f32.mrf.mxu0
  %v1138 = vadd.f32 0.0, %v1137
  %1139 = vmatmul.bf16.gmra.mxu0 %v1023
  %v1140 = vpop.f32.mrf.mxu0
  %v1141 = vadd.f32 0.0, %v1140
  %v1142 = vpop.f32.mrf.mxu0
  %v1143 = vadd.f32 0.0, %v1142
  %1144 = vmatmul.bf16.gmra.mxu0 %v1026
  %v1145 = vpop.f32.mrf.mxu0
  %v1146 = vadd.f32 0.0, %v1145
  %v1147 = vpop.f32.mrf.mxu0
  %v1148 = vadd.f32 0.0, %v1147
  %1149 = vmatmul.bf16.gmra.mxu0 %v1029
  %v1150 = vpop.f32.mrf.mxu0
  %v1151 = vadd.f32 0.0, %v1150
  %v1152 = vpop.f32.mrf.mxu0
  %v1153 = vadd.f32 0.0, %v1152
  %1154 = vmatmul.bf16.gmra.mxu0 %v1032
  %v1155 = vpop.f32.mrf.mxu0
  %v1156 = vadd.f32 0.0, %v1155
  %v1157 = vpop.f32.mrf.mxu0
  %v1158 = vadd.f32 0.0, %v1157
  %1159 = vmatmul.bf16.gmra.mxu0 %v1035
  %v1160 = vpop.f32.mrf.mxu0
  %v1161 = vadd.f32 0.0, %v1160
  %v1162 = vpop.f32.mrf.mxu0
  %v1163 = vadd.f32 0.0, %v1162
  %1164 = vmatmul.bf16.gmra.mxu0 %v1038
  %v1165 = vpop.f32.mrf.mxu0
  %v1166 = vadd.f32 0.0, %v1165
  %v1167 = vpop.f32.mrf.mxu0
  %v1168 = vadd.f32 0.0, %v1167
  %1169 = vmatmul.bf16.gmra.mxu0 %v1041
  %v1170 = vpop.f32.mrf.mxu0
  %v1171 = vadd.f32 0.0, %v1170
  %v1172 = vpop.f32.mrf.mxu0
  %v1173 = vadd.f32 0.0, %v1172
  %1174 = vmatmul.bf16.gmra.mxu0 %v1044
  %v1175 = vpop.f32.mrf.mxu0
  %v1176 = vadd.f32 0.0, %v1175
  %v1177 = vpop.f32.mrf.mxu0
  %1178 = vdwg.mxu0
  %v1179 = vld [vmem:[%s3] sm:$0xf]
  %v1180 = vld [vmem:[%s3 + $0x4] sm:$0xf]
  %v1181 = vld [vmem:[%s3 + $0x8] sm:$0xf]
  %v1182 = vld [vmem:[%s3 + $0xc] sm:$0xf]
  %v1183 = vld [vmem:[%s3 + $0x10] sm:$0xf]
  %v1184 = vld [vmem:[%s3 + $0x14] sm:$0xf]
  %v1185 = vld [vmem:[%s3 + $0x18] sm:$0xf]
  %v1186 = vld [vmem:[%s3 + $0x1c] sm:$0xf]
  %v1187 = vld [vmem:[%s3 + $0x20] sm:$0xf]
  %v1188 = vld [vmem:[%s3 + $0x24] sm:$0xf]
  %v1189 = vld [vmem:[%s3 + $0x28] sm:$0xf]
  %v1190 = vld [vmem:[%s3 + $0x2c] sm:$0xf]
  %v1191 = vld [vmem:[%s3 + $0x30] sm:$0xf]
  %v1192 = vld [vmem:[%s3 + $0x34] sm:$0xf]
  %v1193 = vld [vmem:[%s3 + $0x38] sm:$0xf]
  %v1194 = vld [vmem:[%s3 + $0x3c] sm:$0xf]
  %v1195 = vld [vmem:[%s3 + $0x40] sm:$0xf]
  %v1196 = vld [vmem:[%s3 + $0x44] sm:$0xf]
  %v1197 = vld [vmem:[%s3 + $0x48] sm:$0xf]
  %v1198 = vld [vmem:[%s3 + $0x4c] sm:$0xf]
  %v1199 = vld [vmem:[%s3 + $0x50] sm:$0xf]
  %v1200 = vld [vmem:[%s3 + $0x54] sm:$0xf]
  %v1201 = vld [vmem:[%s3 + $0x58] sm:$0xf]
  %v1202 = vld [vmem:[%s3 + $0x5c] sm:$0xf]
  %v1203 = vld [vmem:[%s3 + $0x60] sm:$0xf]
  %v1204 = vld [vmem:[%s3 + $0x64] sm:$0xf]
  %v1205 = vld [vmem:[%s3 + $0x68] sm:$0xf]
  %v1206 = vld [vmem:[%s3 + $0x6c] sm:$0xf]
  %v1207 = vld [vmem:[%s3 + $0x70] sm:$0xf]
  %v1208 = vld [vmem:[%s3 + $0x74] sm:$0xf]
  %v1209 = vld [vmem:[%s3 + $0x78] sm:$0xf]
  %v1210 = vld [vmem:[%s3 + $0x7c] sm:$0xf]
  %v1211 = vld [vmem:[%s3 + $0x80] sm:$0xf]
  %v1212 = vld [vmem:[%s3 + $0x84] sm:$0xf]
  %v1213 = vld [vmem:[%s3 + $0x88] sm:$0xf]
  %v1214 = vld [vmem:[%s3 + $0x8c] sm:$0xf]
  %v1215 = vld [vmem:[%s3 + $0x90] sm:$0xf]
  %v1216 = vld [vmem:[%s3 + $0x94] sm:$0xf]
  %v1217 = vld [vmem:[%s3 + $0x98] sm:$0xf]
  %v1218 = vld [vmem:[%s3 + $0x9c] sm:$0xf]
  %v1219 = vld [vmem:[%s3 + $0xa0] sm:$0xf]
  %v1220 = vld [vmem:[%s3 + $0xa4] sm:$0xf]
  %v1221 = vld [vmem:[%s3 + $0xa8] sm:$0xf]
  %v1222 = vld [vmem:[%s3 + $0xac] sm:$0xf]
  %v1223 = vld [vmem:[%s3 + $0xb0] sm:$0xf]
  %v1224 = vld [vmem:[%s3 + $0xb4] sm:$0xf]
  %v1225 = vld [vmem:[%s3 + $0xb8] sm:$0xf]
  %v1226 = vld [vmem:[%s3 + $0xbc] sm:$0xf]
  %v1227 = vld [vmem:[%s3 + $0xc0] sm:$0xf]
  %v1277 = vunpack.c.l.b16 %v1179
  %v1278 = vunpack.c.l.b16 %v1180
  %v1279 = vunpack.c.l.b16 %v1181
  %v1280 = vunpack.c.l.b16 %v1182
  %v1281 = vunpack.c.l.b16 %v1183
  %v1282 = vunpack.c.l.b16 %v1184
  %v1283 = vunpack.c.l.b16 %v1185
  %v1284 = vunpack.c.l.b16 %v1186
  %v1285 = vunpack.c.l.b16 %v1187
  %v1286 = vunpack.c.l.b16 %v1188
  %v1287 = vunpack.c.l.b16 %v1189
  %v1288 = vunpack.c.l.b16 %v1190
  %v1289 = vunpack.c.l.b16 %v1191
  %v1290 = vunpack.c.l.b16 %v1192
  %v1291 = vunpack.c.l.b16 %v1193
  %v1292 = vunpack.c.l.b16 %v1194
  %v1293 = vunpack.c.l.b16 %v1195
  %v1294 = vunpack.c.l.b16 %v1196
  %v1295 = vunpack.c.l.b16 %v1197
  %v1296 = vunpack.c.l.b16 %v1198
  %v1297 = vunpack.c.l.b16 %v1199
  %v1298 = vunpack.c.l.b16 %v1200
  %v1299 = vunpack.c.l.b16 %v1201
  %v1300 = vunpack.c.l.b16 %v1202
  %v1301 = vunpack.c.l.b16 %v1203
  %v1302 = vunpack.c.l.b16 %v1204
  %v1303 = vunpack.c.l.b16 %v1205
  %v1304 = vunpack.c.l.b16 %v1206
  %v1305 = vunpack.c.l.b16 %v1207
  %v1306 = vunpack.c.l.b16 %v1208
  %v1307 = vunpack.c.l.b16 %v1209
  %v1308 = vunpack.c.l.b16 %v1210
  %v1309 = vunpack.c.l.b16 %v1211
  %v1310 = vunpack.c.l.b16 %v1212
  %v1311 = vunpack.c.l.b16 %v1213
  %v1312 = vunpack.c.l.b16 %v1214
  %v1313 = vunpack.c.l.b16 %v1215
  %v1314 = vunpack.c.l.b16 %v1216
  %v1315 = vunpack.c.l.b16 %v1217
  %v1316 = vunpack.c.l.b16 %v1218
  %v1317 = vunpack.c.l.b16 %v1219
  %v1318 = vunpack.c.l.b16 %v1220
  %v1319 = vunpack.c.l.b16 %v1221
  %v1320 = vunpack.c.l.b16 %v1222
  %v1321 = vunpack.c.l.b16 %v1223
  %v1322 = vunpack.c.l.b16 %v1224
  %v1323 = vunpack.c.l.b16 %v1225
  %v1324 = vunpack.c.l.b16 %v1226
  %v1325 = vunpack.c.l.b16 %v1227
  %v1326 = vpack.c.b16 %v1278, %v1277
  %v1327 = vpack.c.b16 %v1280, %v1279
  %v1328 = vpack.c.b16 %v1282, %v1281
  %v1329 = vpack.c.b16 %v1284, %v1283
  %v1330 = vpack.c.b16 %v1286, %v1285
  %v1331 = vpack.c.b16 %v1288, %v1287
  %v1332 = vpack.c.b16 %v1290, %v1289
  %v1333 = vpack.c.b16 %v1292, %v1291
  %v1334 = vpack.c.b16 %v1294, %v1293
  %v1335 = vpack.c.b16 %v1296, %v1295
  %v1336 = vpack.c.b16 %v1298, %v1297
  %v1337 = vpack.c.b16 %v1300, %v1299
  %v1338 = vpack.c.b16 %v1302, %v1301
  %v1339 = vpack.c.b16 %v1304, %v1303
  %v1340 = vpack.c.b16 %v1306, %v1305
  %v1341 = vpack.c.b16 %v1308, %v1307
  %v1342 = vpack.c.b16 %v1310, %v1309
  %v1343 = vpack.c.b16 %v1312, %v1311
  %v1344 = vpack.c.b16 %v1314, %v1313
  %v1345 = vpack.c.b16 %v1316, %v1315
  %v1346 = vpack.c.b16 %v1318, %v1317
  %v1347 = vpack.c.b16 %v1320, %v1319
  %v1348 = vpack.c.b16 %v1322, %v1321
  %v1349 = vpack.c.b16 %v1324, %v1323
  %v1350 = vpack.c.b16 %v1325, %v1325
  %v1352 = vsel %vm203, %v1326, 0
  %v1355 = vsel %vm203, %v1327, 0
  %v1358 = vsel %vm203, %v1328, 0
  %v1361 = vsel %vm203, %v1329, 0
  %v1364 = vsel %vm203, %v1330, 0
  %v1367 = vsel %vm203, %v1331, 0
  %v1370 = vsel %vm203, %v1332, 0
  %v1373 = vsel %vm203, %v1333, 0
  %v1376 = vsel %vm203, %v1334, 0
  %v1379 = vsel %vm203, %v1335, 0
  %v1382 = vsel %vm203, %v1336, 0
  %v1385 = vsel %vm203, %v1337, 0
  %v1388 = vsel %vm203, %v1338, 0
  %v1391 = vsel %vm203, %v1339, 0
  %v1394 = vsel %vm203, %v1340, 0
  %v1397 = vsel %vm203, %v1341, 0
  %v1400 = vsel %vm203, %v1342, 0
  %v1403 = vsel %vm203, %v1343, 0
  %v1406 = vsel %vm203, %v1344, 0
  %v1409 = vsel %vm203, %v1345, 0
  %v1412 = vsel %vm203, %v1346, 0
  %v1415 = vsel %vm203, %v1347, 0
  %v1418 = vsel %vm203, %v1348, 0
  %v1421 = vsel %vm203, %v1349, 0
  %v1424 = vsel %vm203, %v1350, 0
  %1426 = vmatpush.bf16.msra.mxu0 0
  %1427 = vmatpush.bf16.msra.mxu0 0
  %1428 = vmatpush.bf16.msra.mxu0 0
  %1429 = vmatpush.bf16.msra.mxu0 0
  %1430 = vmatpush.bf16.msra.mxu0 0
  %1431 = vmatpush.bf16.msra.mxu0 0
  %1432 = vmatpush.bf16.msra.mxu0 0
  %1433 = vmatpush.bf16.msra.mxu0 %v284
  %1434 = vmatmul.bf16.gmra.mxu0 %v1352
  %v1435 = vpop.f32.mrf.mxu0
  %v1436 = vadd.f32 0.0, %v1435
  %v1437 = vpop.f32.mrf.mxu0
  %v1438 = vadd.f32 0.0, %v1437
  %1439 = vmatmul.bf16.gmra.mxu0 %v1355
  %v1440 = vpop.f32.mrf.mxu0
  %v1441 = vadd.f32 0.0, %v1440
  %v1442 = vpop.f32.mrf.mxu0
  %v1443 = vadd.f32 0.0, %v1442
  %1444 = vmatmul.bf16.gmra.mxu0 %v1358
  %v1445 = vpop.f32.mrf.mxu0
  %v1446 = vadd.f32 0.0, %v1445
  %v1447 = vpop.f32.mrf.mxu0
  %v1448 = vadd.f32 0.0, %v1447
  %1449 = vmatmul.bf16.gmra.mxu0 %v1361
  %v1450 = vpop.f32.mrf.mxu0
  %v1451 = vadd.f32 0.0, %v1450
  %v1452 = vpop.f32.mrf.mxu0
  %v1453 = vadd.f32 0.0, %v1452
  %1454 = vmatmul.bf16.gmra.mxu0 %v1364
  %v1455 = vpop.f32.mrf.mxu0
  %v1456 = vadd.f32 0.0, %v1455
  %v1457 = vpop.f32.mrf.mxu0
  %v1458 = vadd.f32 0.0, %v1457
  %1459 = vmatmul.bf16.gmra.mxu0 %v1367
  %v1460 = vpop.f32.mrf.mxu0
  %v1461 = vadd.f32 0.0, %v1460
  %v1462 = vpop.f32.mrf.mxu0
  %v1463 = vadd.f32 0.0, %v1462
  %1464 = vmatmul.bf16.gmra.mxu0 %v1370
  %v1465 = vpop.f32.mrf.mxu0
  %v1466 = vadd.f32 0.0, %v1465
  %v1467 = vpop.f32.mrf.mxu0
  %v1468 = vadd.f32 0.0, %v1467
  %1469 = vmatmul.bf16.gmra.mxu0 %v1373
  %v1470 = vpop.f32.mrf.mxu0
  %v1471 = vadd.f32 0.0, %v1470
  %v1472 = vpop.f32.mrf.mxu0
  %v1473 = vadd.f32 0.0, %v1472
  %1474 = vmatmul.bf16.gmra.mxu0 %v1376
  %v1475 = vpop.f32.mrf.mxu0
  %v1476 = vadd.f32 0.0, %v1475
  %v1477 = vpop.f32.mrf.mxu0
  %v1478 = vadd.f32 0.0, %v1477
  %1479 = vmatmul.bf16.gmra.mxu0 %v1379
  %v1480 = vpop.f32.mrf.mxu0
  %v1481 = vadd.f32 0.0, %v1480
  %v1482 = vpop.f32.mrf.mxu0
  %v1483 = vadd.f32 0.0, %v1482
  %1484 = vmatmul.bf16.gmra.mxu0 %v1382
  %v1485 = vpop.f32.mrf.mxu0
  %v1486 = vadd.f32 0.0, %v1485
  %v1487 = vpop.f32.mrf.mxu0
  %v1488 = vadd.f32 0.0, %v1487
  %1489 = vmatmul.bf16.gmra.mxu0 %v1385
  %v1490 = vpop.f32.mrf.mxu0
  %v1491 = vadd.f32 0.0, %v1490
  %v1492 = vpop.f32.mrf.mxu0
  %v1493 = vadd.f32 0.0, %v1492
  %1494 = vmatmul.bf16.gmra.mxu0 %v1388
  %v1495 = vpop.f32.mrf.mxu0
  %v1496 = vadd.f32 0.0, %v1495
  %v1497 = vpop.f32.mrf.mxu0
  %v1498 = vadd.f32 0.0, %v1497
  %1499 = vmatmul.bf16.gmra.mxu0 %v1391
  %v1500 = vpop.f32.mrf.mxu0
  %v1501 = vadd.f32 0.0, %v1500
  %v1502 = vpop.f32.mrf.mxu0
  %v1503 = vadd.f32 0.0, %v1502
  %1504 = vmatmul.bf16.gmra.mxu0 %v1394
  %v1505 = vpop.f32.mrf.mxu0
  %v1506 = vadd.f32 0.0, %v1505
  %v1507 = vpop.f32.mrf.mxu0
  %v1508 = vadd.f32 0.0, %v1507
  %1509 = vmatmul.bf16.gmra.mxu0 %v1397
  %v1510 = vpop.f32.mrf.mxu0
  %v1511 = vadd.f32 0.0, %v1510
  %v1512 = vpop.f32.mrf.mxu0
  %v1513 = vadd.f32 0.0, %v1512
  %1514 = vmatmul.bf16.gmra.mxu0 %v1400
  %v1515 = vpop.f32.mrf.mxu0
  %v1516 = vadd.f32 0.0, %v1515
  %v1517 = vpop.f32.mrf.mxu0
  %v1518 = vadd.f32 0.0, %v1517
  %1519 = vmatmul.bf16.gmra.mxu0 %v1403
  %v1520 = vpop.f32.mrf.mxu0
  %v1521 = vadd.f32 0.0, %v1520
  %v1522 = vpop.f32.mrf.mxu0
  %v1523 = vadd.f32 0.0, %v1522
  %1524 = vmatmul.bf16.gmra.mxu0 %v1406
  %v1525 = vpop.f32.mrf.mxu0
  %v1526 = vadd.f32 0.0, %v1525
  %v1527 = vpop.f32.mrf.mxu0
  %v1528 = vadd.f32 0.0, %v1527
  %1529 = vmatmul.bf16.gmra.mxu0 %v1409
  %v1530 = vpop.f32.mrf.mxu0
  %v1531 = vadd.f32 0.0, %v1530
  %v1532 = vpop.f32.mrf.mxu0
  %v1533 = vadd.f32 0.0, %v1532
  %1534 = vmatmul.bf16.gmra.mxu0 %v1412
  %v1535 = vpop.f32.mrf.mxu0
  %v1536 = vadd.f32 0.0, %v1535
  %v1537 = vpop.f32.mrf.mxu0
  %v1538 = vadd.f32 0.0, %v1537
  %1539 = vmatmul.bf16.gmra.mxu0 %v1415
  %v1540 = vpop.f32.mrf.mxu0
  %v1541 = vadd.f32 0.0, %v1540
  %v1542 = vpop.f32.mrf.mxu0
  %v1543 = vadd.f32 0.0, %v1542
  %1544 = vmatmul.bf16.gmra.mxu0 %v1418
  %v1545 = vpop.f32.mrf.mxu0
  %v1546 = vadd.f32 0.0, %v1545
  %v1547 = vpop.f32.mrf.mxu0
  %v1548 = vadd.f32 0.0, %v1547
  %1549 = vmatmul.bf16.gmra.mxu0 %v1421
  %v1550 = vpop.f32.mrf.mxu0
  %v1551 = vadd.f32 0.0, %v1550
  %v1552 = vpop.f32.mrf.mxu0
  %v1553 = vadd.f32 0.0, %v1552
  %1554 = vmatmul.bf16.gmra.mxu0 %v1424
  %v1555 = vpop.f32.mrf.mxu0
  %v1556 = vadd.f32 0.0, %v1555
  %v1557 = vpop.f32.mrf.mxu0
  %1558 = vdwg.mxu0
  %v1559 = vmax.f32 %v296, %v676
  %v1560 = vmax.f32 %v298, %v678
  %v1561 = vmax.f32 %v301, %v681
  %v1562 = vmax.f32 %v303, %v683
  %v1563 = vmax.f32 %v306, %v686
  %v1564 = vmax.f32 %v308, %v688
  %v1565 = vmax.f32 %v311, %v691
  %v1566 = vmax.f32 %v313, %v693
  %v1567 = vmax.f32 %v316, %v696
  %v1568 = vmax.f32 %v318, %v698
  %v1569 = vmax.f32 %v321, %v701
  %v1570 = vmax.f32 %v323, %v703
  %v1571 = vmax.f32 %v326, %v706
  %v1572 = vmax.f32 %v328, %v708
  %v1573 = vmax.f32 %v331, %v711
  %v1574 = vmax.f32 %v333, %v713
  %v1575 = vmax.f32 %v336, %v716
  %v1576 = vmax.f32 %v338, %v718
  %v1577 = vmax.f32 %v341, %v721
  %v1578 = vmax.f32 %v343, %v723
  %v1579 = vmax.f32 %v346, %v726
  %v1580 = vmax.f32 %v348, %v728
  %v1581 = vmax.f32 %v351, %v731
  %v1582 = vmax.f32 %v353, %v733
  %v1583 = vmax.f32 %v356, %v736
  %v1584 = vmax.f32 %v358, %v738
  %v1585 = vmax.f32 %v361, %v741
  %v1586 = vmax.f32 %v363, %v743
  %v1587 = vmax.f32 %v366, %v746
  %v1588 = vmax.f32 %v368, %v748
  %v1589 = vmax.f32 %v371, %v751
  %v1590 = vmax.f32 %v373, %v753
  %v1591 = vmax.f32 %v376, %v756
  %v1592 = vmax.f32 %v378, %v758
  %v1593 = vmax.f32 %v381, %v761
  %v1594 = vmax.f32 %v383, %v763
  %v1595 = vmax.f32 %v386, %v766
  %v1596 = vmax.f32 %v388, %v768
  %v1597 = vmax.f32 %v391, %v771
  %v1598 = vmax.f32 %v393, %v773
  %v1599 = vmax.f32 %v396, %v776
  %v1600 = vmax.f32 %v398, %v778
  %v1601 = vmax.f32 %v401, %v781
  %v1602 = vmax.f32 %v403, %v783
  %v1603 = vmax.f32 %v406, %v786
  %v1604 = vmax.f32 %v408, %v788
  %v1605 = vmax.f32 %v411, %v791
  %v1606 = vmax.f32 %v413, %v793
  %v1607 = vmax.f32 %v416, %v796
  %v1608 = vmax.f32 %v1056, %v1436
  %v1609 = vmax.f32 %v1058, %v1438
  %v1610 = vmax.f32 %v1061, %v1441
  %v1611 = vmax.f32 %v1063, %v1443
  %v1612 = vmax.f32 %v1066, %v1446
  %v1613 = vmax.f32 %v1068, %v1448
  %v1614 = vmax.f32 %v1071, %v1451
  %v1615 = vmax.f32 %v1073, %v1453
  %v1616 = vmax.f32 %v1076, %v1456
  %v1617 = vmax.f32 %v1078, %v1458
  %v1618 = vmax.f32 %v1081, %v1461
  %v1619 = vmax.f32 %v1083, %v1463
  %v1620 = vmax.f32 %v1086, %v1466
  %v1621 = vmax.f32 %v1088, %v1468
  %v1622 = vmax.f32 %v1091, %v1471
  %v1623 = vmax.f32 %v1093, %v1473
  %v1624 = vmax.f32 %v1096, %v1476
  %v1625 = vmax.f32 %v1098, %v1478
  %v1626 = vmax.f32 %v1101, %v1481
  %v1627 = vmax.f32 %v1103, %v1483
  %v1628 = vmax.f32 %v1106, %v1486
  %v1629 = vmax.f32 %v1108, %v1488
  %v1630 = vmax.f32 %v1111, %v1491
  %v1631 = vmax.f32 %v1113, %v1493
  %v1632 = vmax.f32 %v1116, %v1496
  %v1633 = vmax.f32 %v1118, %v1498
  %v1634 = vmax.f32 %v1121, %v1501
  %v1635 = vmax.f32 %v1123, %v1503
  %v1636 = vmax.f32 %v1126, %v1506
  %v1637 = vmax.f32 %v1128, %v1508
  %v1638 = vmax.f32 %v1131, %v1511
  %v1639 = vmax.f32 %v1133, %v1513
  %v1640 = vmax.f32 %v1136, %v1516
  %v1641 = vmax.f32 %v1138, %v1518
  %v1642 = vmax.f32 %v1141, %v1521
  %v1643 = vmax.f32 %v1143, %v1523
  %v1644 = vmax.f32 %v1146, %v1526
  %v1645 = vmax.f32 %v1148, %v1528
  %v1646 = vmax.f32 %v1151, %v1531
  %v1647 = vmax.f32 %v1153, %v1533
  %v1648 = vmax.f32 %v1156, %v1536
  %v1649 = vmax.f32 %v1158, %v1538
  %v1650 = vmax.f32 %v1161, %v1541
  %v1651 = vmax.f32 %v1163, %v1543
  %v1652 = vmax.f32 %v1166, %v1546
  %v1653 = vmax.f32 %v1168, %v1548
  %v1654 = vmax.f32 %v1171, %v1551
  %v1655 = vmax.f32 %v1173, %v1553
  %v1656 = vmax.f32 %v1176, %v1556
  %v1657 = vmax.f32 %v1559, %v1608
  %v1658 = vmax.f32 %v1560, %v1609
  %v1659 = vmax.f32 %v1561, %v1610
  %v1660 = vmax.f32 %v1562, %v1611
  %v1661 = vmax.f32 %v1563, %v1612
  %v1662 = vmax.f32 %v1564, %v1613
  %v1663 = vmax.f32 %v1565, %v1614
  %v1664 = vmax.f32 %v1566, %v1615
  %v1665 = vmax.f32 %v1567, %v1616
  %v1666 = vmax.f32 %v1568, %v1617
  %v1667 = vmax.f32 %v1569, %v1618
  %v1668 = vmax.f32 %v1570, %v1619
  %v1669 = vmax.f32 %v1571, %v1620
  %v1670 = vmax.f32 %v1572, %v1621
  %v1671 = vmax.f32 %v1573, %v1622
  %v1672 = vmax.f32 %v1574, %v1623
  %v1673 = vmax.f32 %v1575, %v1624
  %v1674 = vmax.f32 %v1576, %v1625
  %v1675 = vmax.f32 %v1577, %v1626
  %v1676 = vmax.f32 %v1578, %v1627
  %v1677 = vmax.f32 %v1579, %v1628
  %v1678 = vmax.f32 %v1580, %v1629
  %v1679 = vmax.f32 %v1581, %v1630
  %v1680 = vmax.f32 %v1582, %v1631
  %v1681 = vmax.f32 %v1583, %v1632
  %v1682 = vmax.f32 %v1584, %v1633
  %v1683 = vmax.f32 %v1585, %v1634
  %v1684 = vmax.f32 %v1586, %v1635
  %v1685 = vmax.f32 %v1587, %v1636
  %v1686 = vmax.f32 %v1588, %v1637
  %v1687 = vmax.f32 %v1589, %v1638
  %v1688 = vmax.f32 %v1590, %v1639
  %v1689 = vmax.f32 %v1591, %v1640
  %v1690 = vmax.f32 %v1592, %v1641
  %v1691 = vmax.f32 %v1593, %v1642
  %v1692 = vmax.f32 %v1594, %v1643
  %v1693 = vmax.f32 %v1595, %v1644
  %v1694 = vmax.f32 %v1596, %v1645
  %v1695 = vmax.f32 %v1597, %v1646
  %v1696 = vmax.f32 %v1598, %v1647
  %v1697 = vmax.f32 %v1599, %v1648
  %v1698 = vmax.f32 %v1600, %v1649
  %v1699 = vmax.f32 %v1601, %v1650
  %v1700 = vmax.f32 %v1602, %v1651
  %v1701 = vmax.f32 %v1603, %v1652
  %v1702 = vmax.f32 %v1604, %v1653
  %v1703 = vmax.f32 %v1605, %v1654
  %v1704 = vmax.f32 %v1606, %v1655
  %v1705 = vmax.f32 %v1607, %v1656
  %v1706 = vld [vmem:[%s5] sm:$0x1]
  %v1708 = vperm.slane %v1706, 0
  %v1710 = vadd.f32 %v1657, %v1708
  %v1711 = vadd.f32 %v1658, %v1708
  %v1712 = vadd.f32 %v1659, %v1708
  %v1713 = vadd.f32 %v1660, %v1708
  %v1714 = vadd.f32 %v1661, %v1708
  %v1715 = vadd.f32 %v1662, %v1708
  %v1716 = vadd.f32 %v1663, %v1708
  %v1717 = vadd.f32 %v1664, %v1708
  %v1718 = vadd.f32 %v1665, %v1708
  %v1719 = vadd.f32 %v1666, %v1708
  %v1720 = vadd.f32 %v1667, %v1708
  %v1721 = vadd.f32 %v1668, %v1708
  %v1722 = vadd.f32 %v1669, %v1708
  %v1723 = vadd.f32 %v1670, %v1708
  %v1724 = vadd.f32 %v1671, %v1708
  %v1725 = vadd.f32 %v1672, %v1708
  %v1726 = vadd.f32 %v1673, %v1708
  %v1727 = vadd.f32 %v1674, %v1708
  %v1728 = vadd.f32 %v1675, %v1708
  %v1729 = vadd.f32 %v1676, %v1708
  %v1730 = vadd.f32 %v1677, %v1708
  %v1731 = vadd.f32 %v1678, %v1708
  %v1732 = vadd.f32 %v1679, %v1708
  %v1733 = vadd.f32 %v1680, %v1708
  %v1734 = vadd.f32 %v1681, %v1708
  %v1735 = vadd.f32 %v1682, %v1708
  %v1736 = vadd.f32 %v1683, %v1708
  %v1737 = vadd.f32 %v1684, %v1708
  %v1738 = vadd.f32 %v1685, %v1708
  %v1739 = vadd.f32 %v1686, %v1708
  %v1740 = vadd.f32 %v1687, %v1708
  %v1741 = vadd.f32 %v1688, %v1708
  %v1742 = vadd.f32 %v1689, %v1708
  %v1743 = vadd.f32 %v1690, %v1708
  %v1744 = vadd.f32 %v1691, %v1708
  %v1745 = vadd.f32 %v1692, %v1708
  %v1746 = vadd.f32 %v1693, %v1708
  %v1747 = vadd.f32 %v1694, %v1708
  %v1748 = vadd.f32 %v1695, %v1708
  %v1749 = vadd.f32 %v1696, %v1708
  %v1750 = vadd.f32 %v1697, %v1708
  %v1751 = vadd.f32 %v1698, %v1708
  %v1752 = vadd.f32 %v1699, %v1708
  %v1753 = vadd.f32 %v1700, %v1708
  %v1754 = vadd.f32 %v1701, %v1708
  %v1755 = vadd.f32 %v1702, %v1708
  %v1756 = vadd.f32 %v1703, %v1708
  %v1757 = vadd.f32 %v1704, %v1708
  %v1758 = vadd.f32 %v1705, %v1708
  %v1759 = vmax.f32 %v1710, 0.0
  %v1760 = vmax.f32 %v1711, 0.0
  %v1761 = vmax.f32 %v1712, 0.0
  %v1762 = vmax.f32 %v1713, 0.0
  %v1763 = vmax.f32 %v1714, 0.0
  %v1764 = vmax.f32 %v1715, 0.0
  %v1765 = vmax.f32 %v1716, 0.0
  %v1766 = vmax.f32 %v1717, 0.0
  %v1767 = vmax.f32 %v1718, 0.0
  %v1768 = vmax.f32 %v1719, 0.0
  %v1769 = vmax.f32 %v1720, 0.0
  %v1770 = vmax.f32 %v1721, 0.0
  %v1771 = vmax.f32 %v1722, 0.0
  %v1772 = vmax.f32 %v1723, 0.0
  %v1773 = vmax.f32 %v1724, 0.0
  %v1774 = vmax.f32 %v1725, 0.0
  %v1775 = vmax.f32 %v1726, 0.0
  %v1776 = vmax.f32 %v1727, 0.0
  %v1777 = vmax.f32 %v1728, 0.0
  %v1778 = vmax.f32 %v1729, 0.0
  %v1779 = vmax.f32 %v1730, 0.0
  %v1780 = vmax.f32 %v1731, 0.0
  %v1781 = vmax.f32 %v1732, 0.0
  %v1782 = vmax.f32 %v1733, 0.0
  %v1783 = vmax.f32 %v1734, 0.0
  %v1784 = vmax.f32 %v1735, 0.0
  %v1785 = vmax.f32 %v1736, 0.0
  %v1786 = vmax.f32 %v1737, 0.0
  %v1787 = vmax.f32 %v1738, 0.0
  %v1788 = vmax.f32 %v1739, 0.0
  %v1789 = vmax.f32 %v1740, 0.0
  %v1790 = vmax.f32 %v1741, 0.0
  %v1791 = vmax.f32 %v1742, 0.0
  %v1792 = vmax.f32 %v1743, 0.0
  %v1793 = vmax.f32 %v1744, 0.0
  %v1794 = vmax.f32 %v1745, 0.0
  %v1795 = vmax.f32 %v1746, 0.0
  %v1796 = vmax.f32 %v1747, 0.0
  %v1797 = vmax.f32 %v1748, 0.0
  %v1798 = vmax.f32 %v1749, 0.0
  %v1799 = vmax.f32 %v1750, 0.0
  %v1800 = vmax.f32 %v1751, 0.0
  %v1801 = vmax.f32 %v1752, 0.0
  %v1802 = vmax.f32 %v1753, 0.0
  %v1803 = vmax.f32 %v1754, 0.0
  %v1804 = vmax.f32 %v1755, 0.0
  %v1805 = vmax.f32 %v1756, 0.0
  %v1806 = vmax.f32 %v1757, 0.0
  %v1807 = vmax.f32 %v1758, 0.0
  %v1808 = vpack.c.bf16 %v1759, %v1759
  %v1809 = vpack.c.bf16 %v1760, %v1760
  %v1810 = vpack.c.bf16 %v1761, %v1761
  %v1811 = vpack.c.bf16 %v1762, %v1762
  %v1812 = vpack.c.bf16 %v1763, %v1763
  %v1813 = vpack.c.bf16 %v1764, %v1764
  %v1814 = vpack.c.bf16 %v1765, %v1765
  %v1815 = vpack.c.bf16 %v1766, %v1766
  %v1816 = vpack.c.bf16 %v1767, %v1767
  %v1817 = vpack.c.bf16 %v1768, %v1768
  %v1818 = vpack.c.bf16 %v1769, %v1769
  %v1819 = vpack.c.bf16 %v1770, %v1770
  %v1820 = vpack.c.bf16 %v1771, %v1771
  %v1821 = vpack.c.bf16 %v1772, %v1772
  %v1822 = vpack.c.bf16 %v1773, %v1773
  %v1823 = vpack.c.bf16 %v1774, %v1774
  %v1824 = vpack.c.bf16 %v1775, %v1775
  %v1825 = vpack.c.bf16 %v1776, %v1776
  %v1826 = vpack.c.bf16 %v1777, %v1777
  %v1827 = vpack.c.bf16 %v1778, %v1778
  %v1828 = vpack.c.bf16 %v1779, %v1779
  %v1829 = vpack.c.bf16 %v1780, %v1780
  %v1830 = vpack.c.bf16 %v1781, %v1781
  %v1831 = vpack.c.bf16 %v1782, %v1782
  %v1832 = vpack.c.bf16 %v1783, %v1783
  %v1833 = vpack.c.bf16 %v1784, %v1784
  %v1834 = vpack.c.bf16 %v1785, %v1785
  %v1835 = vpack.c.bf16 %v1786, %v1786
  %v1836 = vpack.c.bf16 %v1787, %v1787
  %v1837 = vpack.c.bf16 %v1788, %v1788
  %v1838 = vpack.c.bf16 %v1789, %v1789
  %v1839 = vpack.c.bf16 %v1790, %v1790
  %v1840 = vpack.c.bf16 %v1791, %v1791
  %v1841 = vpack.c.bf16 %v1792, %v1792
  %v1842 = vpack.c.bf16 %v1793, %v1793
  %v1843 = vpack.c.bf16 %v1794, %v1794
  %v1844 = vpack.c.bf16 %v1795, %v1795
  %v1845 = vpack.c.bf16 %v1796, %v1796
  %v1846 = vpack.c.bf16 %v1797, %v1797
  %v1847 = vpack.c.bf16 %v1798, %v1798
  %v1848 = vpack.c.bf16 %v1799, %v1799
  %v1849 = vpack.c.bf16 %v1800, %v1800
  %v1850 = vpack.c.bf16 %v1801, %v1801
  %v1851 = vpack.c.bf16 %v1802, %v1802
  %v1852 = vpack.c.bf16 %v1803, %v1803
  %v1853 = vpack.c.bf16 %v1804, %v1804
  %v1854 = vpack.c.bf16 %v1805, %v1805
  %v1855 = vpack.c.bf16 %v1806, %v1806
  %v1856 = vpack.c.bf16 %v1807, %v1807
  %vm1857 = vcmask 257024
  %1858 = vst.msk [vmem:[%s6] sm:$0xf] %vm1857, %v1808
  %1859 = vst.msk [vmem:[%s6 + $0x4] sm:$0xf] %vm1857, %v1809
  %1860 = vst.msk [vmem:[%s6 + $0x8] sm:$0xf] %vm1857, %v1810
  %1861 = vst.msk [vmem:[%s6 + $0xc] sm:$0xf] %vm1857, %v1811
  %1862 = vst.msk [vmem:[%s6 + $0x10] sm:$0xf] %vm1857, %v1812
  %1863 = vst.msk [vmem:[%s6 + $0x14] sm:$0xf] %vm1857, %v1813
  %1864 = vst.msk [vmem:[%s6 + $0x18] sm:$0xf] %vm1857, %v1814
  %1865 = vst.msk [vmem:[%s6 + $0x1c] sm:$0xf] %vm1857, %v1815
  %1866 = vst.msk [vmem:[%s6 + $0x20] sm:$0xf] %vm1857, %v1816
  %1867 = vst.msk [vmem:[%s6 + $0x24] sm:$0xf] %vm1857, %v1817
  %1868 = vst.msk [vmem:[%s6 + $0x28] sm:$0xf] %vm1857, %v1818
  %1869 = vst.msk [vmem:[%s6 + $0x2c] sm:$0xf] %vm1857, %v1819
  %1870 = vst.msk [vmem:[%s6 + $0x30] sm:$0xf] %vm1857, %v1820
  %1871 = vst.msk [vmem:[%s6 + $0x34] sm:$0xf] %vm1857, %v1821
  %1872 = vst.msk [vmem:[%s6 + $0x38] sm:$0xf] %vm1857, %v1822
  %1873 = vst.msk [vmem:[%s6 + $0x3c] sm:$0xf] %vm1857, %v1823
  %1874 = vst.msk [vmem:[%s6 + $0x40] sm:$0xf] %vm1857, %v1824
  %1875 = vst.msk [vmem:[%s6 + $0x44] sm:$0xf] %vm1857, %v1825
  %1876 = vst.msk [vmem:[%s6 + $0x48] sm:$0xf] %vm1857, %v1826
  %1877 = vst.msk [vmem:[%s6 + $0x4c] sm:$0xf] %vm1857, %v1827
  %1878 = vst.msk [vmem:[%s6 + $0x50] sm:$0xf] %vm1857, %v1828
  %1879 = vst.msk [vmem:[%s6 + $0x54] sm:$0xf] %vm1857, %v1829
  %1880 = vst.msk [vmem:[%s6 + $0x58] sm:$0xf] %vm1857, %v1830
  %1881 = vst.msk [vmem:[%s6 + $0x5c] sm:$0xf] %vm1857, %v1831
  %1882 = vst.msk [vmem:[%s6 + $0x60] sm:$0xf] %vm1857, %v1832
  %1883 = vst.msk [vmem:[%s6 + $0x64] sm:$0xf] %vm1857, %v1833
  %1884 = vst.msk [vmem:[%s6 + $0x68] sm:$0xf] %vm1857, %v1834
  %1885 = vst.msk [vmem:[%s6 + $0x6c] sm:$0xf] %vm1857, %v1835
  %1886 = vst.msk [vmem:[%s6 + $0x70] sm:$0xf] %vm1857, %v1836
  %1887 = vst.msk [vmem:[%s6 + $0x74] sm:$0xf] %vm1857, %v1837
  %1888 = vst.msk [vmem:[%s6 + $0x78] sm:$0xf] %vm1857, %v1838
  %1889 = vst.msk [vmem:[%s6 + $0x7c] sm:$0xf] %vm1857, %v1839
  %1890 = vst.msk [vmem:[%s6 + $0x80] sm:$0xf] %vm1857, %v1840
  %1891 = vst.msk [vmem:[%s6 + $0x84] sm:$0xf] %vm1857, %v1841
  %1892 = vst.msk [vmem:[%s6 + $0x88] sm:$0xf] %vm1857, %v1842
  %1893 = vst.msk [vmem:[%s6 + $0x8c] sm:$0xf] %vm1857, %v1843
  %1894 = vst.msk [vmem:[%s6 + $0x90] sm:$0xf] %vm1857, %v1844
  %1895 = vst.msk [vmem:[%s6 + $0x94] sm:$0xf] %vm1857, %v1845
  %1896 = vst.msk [vmem:[%s6 + $0x98] sm:$0xf] %vm1857, %v1846
  %1897 = vst.msk [vmem:[%s6 + $0x9c] sm:$0xf] %vm1857, %v1847
  %1898 = vst.msk [vmem:[%s6 + $0xa0] sm:$0xf] %vm1857, %v1848
  %1899 = vst.msk [vmem:[%s6 + $0xa4] sm:$0xf] %vm1857, %v1849
  %1900 = vst.msk [vmem:[%s6 + $0xa8] sm:$0xf] %vm1857, %v1850
  %1901 = vst.msk [vmem:[%s6 + $0xac] sm:$0xf] %vm1857, %v1851
  %1902 = vst.msk [vmem:[%s6 + $0xb0] sm:$0xf] %vm1857, %v1852
  %1903 = vst.msk [vmem:[%s6 + $0xb4] sm:$0xf] %vm1857, %v1853
  %1904 = vst.msk [vmem:[%s6 + $0xb8] sm:$0xf] %vm1857, %v1854
  %1905 = vst.msk [vmem:[%s6 + $0xbc] sm:$0xf] %vm1857, %v1855
  %1906 = vst.msk [vmem:[%s6 + $0xc0] sm:$0xf] %vm1857, %v1856
  // Predicated region
  $region26: #{classifier_cnn_forward.4} parent=0 // pred_check
    _
  $region27: #{classifier_cnn_forward.4} parent=0 // pred_check_branch
    %1908 = sbr.rel (0) target = $region29
  $region28: #{classifier_cnn_forward.4} parent=0 // pred_region
    _
  $region29: #{classifier_cnn_forward.4} parent=0 // pred_fallthru
    _
  // Predicated region
  $region30: #{classifier_cnn_forward.4} parent=0 // pred_check
    _
  $region31: #{classifier_cnn_forward.4} parent=0 // pred_check_branch
    %1910 = sbr.rel (0) target = $region33
  $region32: #{classifier_cnn_forward.4} parent=0 // pred_region
    _
  $region33: #{classifier_cnn_forward.4} parent=0 // pred_fallthru
    _

// kernel: classifier_cnn_forward.5
$region0: #{classifier_cnn_forward.5}
  #allocation0 [shape = 'u32[]', space=smem, size = 0x4, offset = 0x4, fixed_abs, tag = 'smem constant byte address 0x4 - core index']
  #allocation1 [shape = 'u32[72,128]{1,0:T(1,128)}', space=vmem, size = 0x9000, scoped, tag = 'internal scratch']
  %s0 = inlined_call_operand.vmem [shape: bf16[98,288], index: 0, kind: input, shape index: {}]
  %s1 = inlined_call_operand.vmem [shape: bf16[98,288], index: 1, kind: input, shape index: {}]
  %s2 = inlined_call_operand.vmem [shape: bf16[98,288], index: 2, kind: input, shape index: {}]
  %s3 = inlined_call_operand.vmem [shape: bf16[98,288], index: 3, kind: input, shape index: {}]
  %s4 = inlined_call_operand.vmem [shape: bf16[288,64], index: 4, kind: input, shape index: {}]
  %s5 = inlined_call_operand.vmem [shape: f32[1,64], index: 5, kind: input, shape index: {}]
  %s6 = inlined_call_operand.vmem [shape: bf16[98,64], index: 6, kind: output, shape index: {}]
  %s7 = sld [smem:[#allocation0]]
  $region34: #{classifier_cnn_forward.5} parent=0
    _
  %s9 = ssub.s32 1, %s7
  %s10 = scalar_select 0, %s9, %s7
  // Predicated region
  $region2: #{classifier_cnn_forward.5} parent=0 // pred_check
    _
  $region3: #{classifier_cnn_forward.5} parent=0 // pred_check_branch
    %12 = sbr.rel (0) target = $region5
  $region4: #{classifier_cnn_forward.5} parent=0 // pred_region
    _
  $region5: #{classifier_cnn_forward.5} parent=0 // pred_fallthru
    _
  // Predicated region
  $region6: #{classifier_cnn_forward.5} parent=0 // pred_check
    _
  $region7: #{classifier_cnn_forward.5} parent=0 // pred_check_branch
    %14 = sbr.rel (0) target = $region9
  $region8: #{classifier_cnn_forward.5} parent=0 // pred_region
    _
  $region9: #{classifier_cnn_forward.5} parent=0 // pred_fallthru
    _
  // Predicated region
  $region10: #{classifier_cnn_forward.5} parent=0 // pred_check
    _
  $region11: #{classifier_cnn_forward.5} parent=0 // pred_check_branch
    %16 = sbr.rel (0) target = $region13
  $region12: #{classifier_cnn_forward.5} parent=0 // pred_region
    _
  $region13: #{classifier_cnn_forward.5} parent=0 // pred_fallthru
    _
  // Predicated region
  $region14: #{classifier_cnn_forward.5} parent=0 // pred_check
    _
  $region15: #{classifier_cnn_forward.5} parent=0 // pred_check_branch
    %18 = sbr.rel (0) target = $region17
  $region16: #{classifier_cnn_forward.5} parent=0 // pred_region
    _
  $region17: #{classifier_cnn_forward.5} parent=0 // pred_fallthru
    _
  // Predicated region
  $region18: #{classifier_cnn_forward.5} parent=0 // pred_check
    _
  $region19: #{classifier_cnn_forward.5} parent=0 // pred_check_branch
    %20 = sbr.rel (0) target = $region21
  $region20: #{classifier_cnn_forward.5} parent=0 // pred_region
    _
  $region21: #{classifier_cnn_forward.5} parent=0 // pred_fallthru
    _
  // Predicated region
  $region22: #{classifier_cnn_forward.5} parent=0 // pred_check
    _
  $region23: #{classifier_cnn_forward.5} parent=0 // pred_check_branch
    %22 = sbr.rel (0) target = $region25
  $region24: #{classifier_cnn_forward.5} parent=0 // pred_region
    _
  $region25: #{classifier_cnn_forward.5} parent=0 // pred_fallthru
    _
  %v24 = vld [vmem:[%s4] sm:$0xf]
  %v25 = vld [vmem:[%s4 + $0x4] sm:$0xf]
  %v26 = vld [vmem:[%s4 + $0x8] sm:$0xf]
  %v27 = vld [vmem:[%s4 + $0xc] sm:$0xf]
  %v28 = vld [vmem:[%s4 + $0x10] sm:$0xf]
  %v29 = vld [vmem:[%s4 + $0x14] sm:$0xf]
  %v30 = vld [vmem:[%s4 + $0x18] sm:$0xf]
  %v31 = vld [vmem:[%s4 + $0x1c] sm:$0xf]
  %v32 = vld [vmem:[%s4 + $0x20] sm:$0xf]
  %v33 = vld [vmem:[%s4 + $0x24] sm:$0xf]
  %v34 = vld [vmem:[%s4 + $0x28] sm:$0xf]
  %v35 = vld [vmem:[%s4 + $0x2c] sm:$0xf]
  %v36 = vld [vmem:[%s4 + $0x30] sm:$0xf]
  %v37 = vld [vmem:[%s4 + $0x34] sm:$0xf]
  %v38 = vld [vmem:[%s4 + $0x38] sm:$0xf]
  %v39 = vld [vmem:[%s4 + $0x3c] sm:$0xf]
  %v40 = vld [vmem:[%s4 + $0x40] sm:$0xf]
  %v41 = vld [vmem:[%s4 + $0x44] sm:$0xf]
  %v42 = vld [vmem:[%s4 + $0x48] sm:$0xf]
  %v43 = vld [vmem:[%s4 + $0x4c] sm:$0xf]
  %v44 = vld [vmem:[%s4 + $0x50] sm:$0xf]
  %v45 = vld [vmem:[%s4 + $0x54] sm:$0xf]
  %v46 = vld [vmem:[%s4 + $0x58] sm:$0xf]
  %v47 = vld [vmem:[%s4 + $0x5c] sm:$0xf]
  %v48 = vld [vmem:[%s4 + $0x60] sm:$0xf]
  %v49 = vld [vmem:[%s4 + $0x64] sm:$0xf]
  %v50 = vld [vmem:[%s4 + $0x68] sm:$0xf]
  %v51 = vld [vmem:[%s4 + $0x6c] sm:$0xf]
  %v52 = vld [vmem:[%s4 + $0x70] sm:$0xf]
  %v53 = vld [vmem:[%s4 + $0x74] sm:$0xf]
  %v54 = vld [vmem:[%s4 + $0x78] sm:$0xf]
  %v55 = vld [vmem:[%s4 + $0x7c] sm:$0xf]
  %v56 = vld [vmem:[%s4 + $0x80] sm:$0xf]
  %v57 = vld [vmem:[%s4 + $0x84] sm:$0xf]
  %v58 = vld [vmem:[%s4 + $0x88] sm:$0xf]
  %v59 = vld [vmem:[%s4 + $0x8c] sm:$0xf]
  %v60 = vld [vmem:[%s0] sm:$0xff]
  %v61 = vld [vmem:[%s0 + $0x8] sm:$0xf]
  %v62 = vld [vmem:[%s0 + $0xc] sm:$0xff]
  %v63 = vld [vmem:[%s0 + $0x14] sm:$0xf]
  %v64 = vld [vmem:[%s0 + $0x18] sm:$0xff]
  %v65 = vld [vmem:[%s0 + $0x20] sm:$0xf]
  %v66 = vld [vmem:[%s0 + $0x24] sm:$0xff]
  %v67 = vld [vmem:[%s0 + $0x2c] sm:$0xf]
  %v68 = vld [vmem:[%s0 + $0x30] sm:$0xff]
  %v69 = vld [vmem:[%s0 + $0x38] sm:$0xf]
  %v70 = vld [vmem:[%s0 + $0x3c] sm:$0xff]
  %v71 = vld [vmem:[%s0 + $0x44] sm:$0xf]
  %v72 = vld [vmem:[%s0 + $0x48] sm:$0xff]
  %v73 = vld [vmem:[%s0 + $0x50] sm:$0xf]
  %v74 = vld [vmem:[%s0 + $0x54] sm:$0xff]
  %v75 = vld [vmem:[%s0 + $0x5c] sm:$0xf]
  %v76 = vld [vmem:[%s0 + $0x60] sm:$0xff]
  %v77 = vld [vmem:[%s0 + $0x68] sm:$0xf]
  %v78 = vld [vmem:[%s0 + $0x6c] sm:$0xff]
  %v79 = vld [vmem:[%s0 + $0x74] sm:$0xf]
  %v80 = vld [vmem:[%s0 + $0x78] sm:$0xff]
  %v81 = vld [vmem:[%s0 + $0x80] sm:$0xf]
  %v82 = vld [vmem:[%s0 + $0x84] sm:$0xff]
  %v83 = vld [vmem:[%s0 + $0x8c] sm:$0xf]
  %v84 = vld [vmem:[%s0 + $0x90] sm:$0x11]
  %v85 = vld [vmem:[%s0 + $0x98] sm:$0x1]
  %v112 = vunpack.c.l.b16 %v60
  %v113 = vunpack.c.h.b16 %v60
  %v114 = vunpack.c.l.b16 %v61
  %v115 = vunpack.c.l.b16 %v62
  %v116 = vunpack.c.h.b16 %v62
  %v117 = vunpack.c.l.b16 %v63
  %v118 = vunpack.c.l.b16 %v64
  %v119 = vunpack.c.h.b16 %v64
  %v120 = vunpack.c.l.b16 %v65
  %v121 = vunpack.c.l.b16 %v66
  %v122 = vunpack.c.h.b16 %v66
  %v123 = vunpack.c.l.b16 %v67
  %v124 = vunpack.c.l.b16 %v68
  %v125 = vunpack.c.h.b16 %v68
  %v126 = vunpack.c.l.b16 %v69
  %v127 = vunpack.c.l.b16 %v70
  %v128 = vunpack.c.h.b16 %v70
  %v129 = vunpack.c.l.b16 %v71
  %v130 = vunpack.c.l.b16 %v72
  %v131 = vunpack.c.h.b16 %v72
  %v132 = vunpack.c.l.b16 %v73
  %v133 = vunpack.c.l.b16 %v74
  %v134 = vunpack.c.h.b16 %v74
  %v135 = vunpack.c.l.b16 %v75
  %v136 = vunpack.c.l.b16 %v76
  %v137 = vunpack.c.h.b16 %v76
  %v138 = vunpack.c.l.b16 %v77
  %v139 = vunpack.c.l.b16 %v78
  %v140 = vunpack.c.h.b16 %v78
  %v141 = vunpack.c.l.b16 %v79
  %v142 = vunpack.c.l.b16 %v80
  %v143 = vunpack.c.h.b16 %v80
  %v144 = vunpack.c.l.b16 %v81
  %v145 = vunpack.c.l.b16 %v82
  %v146 = vunpack.c.h.b16 %v82
  %v147 = vunpack.c.l.b16 %v83
  %v148 = vunpack.c.l.b16 %v84
  %v149 = vunpack.c.h.b16 %v84
  %v150 = vunpack.c.l.b16 %v85
  %v151 = vpack.c.b16 %v115, %v112
  %v152 = vpack.c.b16 %v116, %v113
  %v153 = vpack.c.b16 %v117, %v114
  %v154 = vpack.c.b16 %v121, %v118
  %v155 = vpack.c.b16 %v122, %v119
  %v156 = vpack.c.b16 %v123, %v120
  %v157 = vpack.c.b16 %v127, %v124
  %v158 = vpack.c.b16 %v128, %v125
  %v159 = vpack.c.b16 %v129, %v126
  %v160 = vpack.c.b16 %v133, %v130
  %v161 = vpack.c.b16 %v134, %v131
  %v162 = vpack.c.b16 %v135, %v132
  %v163 = vpack.c.b16 %v139, %v136
  %v164 = vpack.c.b16 %v140, %v137
  %v165 = vpack.c.b16 %v141, %v138
  %v166 = vpack.c.b16 %v145, %v142
  %v167 = vpack.c.b16 %v146, %v143
  %v168 = vpack.c.b16 %v147, %v144
  %v169 = vpack.c.b16 %v148, %v148
  %v170 = vpack.c.b16 %v149, %v149
  %v171 = vpack.c.b16 %v150, %v150
  %v222 = vunpack.c.l.b16 %v24
  %v223 = vunpack.c.l.b16 %v25
  %v224 = vunpack.c.l.b16 %v26
  %v225 = vunpack.c.l.b16 %v27
  %v226 = vunpack.c.l.b16 %v28
  %v227 = vunpack.c.l.b16 %v29
  %v228 = vunpack.c.l.b16 %v30
  %v229 = vunpack.c.l.b16 %v31
  %v230 = vunpack.c.l.b16 %v32
  %v231 = vunpack.c.l.b16 %v33
  %v232 = vunpack.c.l.b16 %v34
  %v233 = vunpack.c.l.b16 %v35
  %v234 = vunpack.c.l.b16 %v36
  %v235 = vunpack.c.l.b16 %v37
  %v236 = vunpack.c.l.b16 %v38
  %v237 = vunpack.c.l.b16 %v39
  %v238 = vunpack.c.l.b16 %v40
  %v239 = vunpack.c.l.b16 %v41
  %v240 = vunpack.c.l.b16 %v42
  %v241 = vunpack.c.l.b16 %v43
  %v242 = vunpack.c.l.b16 %v44
  %v243 = vunpack.c.l.b16 %v45
  %v244 = vunpack.c.l.b16 %v46
  %v245 = vunpack.c.l.b16 %v47
  %v246 = vunpack.c.l.b16 %v48
  %v247 = vunpack.c.l.b16 %v49
  %v248 = vunpack.c.l.b16 %v50
  %v249 = vunpack.c.l.b16 %v51
  %v250 = vunpack.c.l.b16 %v52
  %v251 = vunpack.c.l.b16 %v53
  %v252 = vunpack.c.l.b16 %v54
  %v253 = vunpack.c.l.b16 %v55
  %v254 = vunpack.c.l.b16 %v56
  %v255 = vunpack.c.l.b16 %v57
  %v256 = vunpack.c.l.b16 %v58
  %v257 = vunpack.c.l.b16 %v59
  %v258 = vpack.c.b16 %v223, %v222
  %v259 = vpack.c.b16 %v225, %v224
  %v260 = vpack.c.b16 %v227, %v226
  %v261 = vpack.c.b16 %v229, %v228
  %v262 = vpack.c.b16 %v231, %v230
  %v263 = vpack.c.b16 %v233, %v232
  %v264 = vpack.c.b16 %v235, %v234
  %v265 = vpack.c.b16 %v237, %v236
  %v266 = vpack.c.b16 %v239, %v238
  %v267 = vpack.c.b16 %v241, %v240
  %v268 = vpack.c.b16 %v243, %v242
  %v269 = vpack.c.b16 %v245, %v244
  %v270 = vpack.c.b16 %v247, %v246
  %v271 = vpack.c.b16 %v249, %v248
  %v272 = vpack.c.b16 %v251, %v250
  %v273 = vpack.c.b16 %v253, %v252
  %v274 = vpack.c.b16 %v255, %v254
  %v275 = vpack.c.b16 %v257, %v256
  %vm294 = vcmask 261120
  %v296 = vsel %vm294, %v153, 0
  %v299 = vsel %vm294, %v156, 0
  %v302 = vsel %vm294, %v159, 0
  %v305 = vsel %vm294, %v162, 0
  %v308 = vsel %vm294, %v165, 0
  %v311 = vsel %vm294, %v168, 0
  %v314 = vsel %vm294, %v171, 0
  %316 = vmatpush.bf16.msra.mxu0 %v265
  %317 = vmatpush.bf16.msra.mxu0 %v264
  %318 = vmatpush.bf16.msra.mxu0 %v263
  %319 = vmatpush.bf16.msra.mxu0 %v262
  %320 = vmatpush.bf16.msra.mxu0 %v261
  %321 = vmatpush.bf16.msra.mxu0 %v260
  %322 = vmatpush.bf16.msra.mxu0 %v259
  %323 = vmatpush.bf16.msra.mxu0 %v258
  %324 = vmatmul.bf16.gmra.mxu0 %v151
  %v325 = vpop.f32.mrf.mxu0
  %v326 = vadd.f32 0.0, %v325
  %v327 = vpop.f32.mrf.mxu0
  %v328 = vadd.f32 0.0, %v327
  %329 = vmatmul.bf16.gmra.mxu0 %v154
  %v330 = vpop.f32.mrf.mxu0
  %v331 = vadd.f32 0.0, %v330
  %v332 = vpop.f32.mrf.mxu0
  %v333 = vadd.f32 0.0, %v332
  %334 = vmatmul.bf16.gmra.mxu0 %v157
  %v335 = vpop.f32.mrf.mxu0
  %v336 = vadd.f32 0.0, %v335
  %v337 = vpop.f32.mrf.mxu0
  %v338 = vadd.f32 0.0, %v337
  %339 = vmatmul.bf16.gmra.mxu0 %v160
  %v340 = vpop.f32.mrf.mxu0
  %v341 = vadd.f32 0.0, %v340
  %v342 = vpop.f32.mrf.mxu0
  %v343 = vadd.f32 0.0, %v342
  %344 = vmatmul.bf16.gmra.mxu0 %v163
  %v345 = vpop.f32.mrf.mxu0
  %v346 = vadd.f32 0.0, %v345
  %v347 = vpop.f32.mrf.mxu0
  %v348 = vadd.f32 0.0, %v347
  %349 = vmatmul.bf16.gmra.mxu0 %v166
  %v350 = vpop.f32.mrf.mxu0
  %v351 = vadd.f32 0.0, %v350
  %v352 = vpop.f32.mrf.mxu0
  %v353 = vadd.f32 0.0, %v352
  %354 = vmatmul.bf16.gmra.mxu0 %v169
  %v355 = vpop.f32.mrf.mxu0
  %v356 = vadd.f32 0.0, %v355
  %v357 = vpop.f32.mrf.mxu0
  %358 = vdwg.mxu0
  %359 = vmatpush.bf16.msra.mxu0 %v273
  %360 = vmatpush.bf16.msra.mxu0 %v272
  %361 = vmatpush.bf16.msra.mxu0 %v271
  %362 = vmatpush.bf16.msra.mxu0 %v270
  %363 = vmatpush.bf16.msra.mxu0 %v269
  %364 = vmatpush.bf16.msra.mxu0 %v268
  %365 = vmatpush.bf16.msra.mxu0 %v267
  %366 = vmatpush.bf16.msra.mxu0 %v266
  %367 = vmatmul.bf16.gmra.mxu0 %v152
  %v368 = vpop.f32.mrf.mxu0
  %v369 = vadd.f32 %v326, %v368
  %v370 = vpop.f32.mrf.mxu0
  %v371 = vadd.f32 %v328, %v370
  %372 = vmatmul.bf16.gmra.mxu0 %v155
  %v373 = vpop.f32.mrf.mxu0
  %v374 = vadd.f32 %v331, %v373
  %v375 = vpop.f32.mrf.mxu0
  %v376 = vadd.f32 %v333, %v375
  %377 = vmatmul.bf16.gmra.mxu0 %v158
  %v378 = vpop.f32.mrf.mxu0
  %v379 = vadd.f32 %v336, %v378
  %v380 = vpop.f32.mrf.mxu0
  %v381 = vadd.f32 %v338, %v380
  %382 = vmatmul.bf16.gmra.mxu0 %v161
  %v383 = vpop.f32.mrf.mxu0
  %v384 = vadd.f32 %v341, %v383
  %v385 = vpop.f32.mrf.mxu0
  %v386 = vadd.f32 %v343, %v385
  %387 = vmatmul.bf16.gmra.mxu0 %v164
  %v388 = vpop.f32.mrf.mxu0
  %v389 = vadd.f32 %v346, %v388
  %v390 = vpop.f32.mrf.mxu0
  %v391 = vadd.f32 %v348, %v390
  %392 = vmatmul.bf16.gmra.mxu0 %v167
  %v393 = vpop.f32.mrf.mxu0
  %v394 = vadd.f32 %v351, %v393
  %v395 = vpop.f32.mrf.mxu0
  %v396 = vadd.f32 %v353, %v395
  %397 = vmatmul.bf16.gmra.mxu0 %v170
  %v398 = vpop.f32.mrf.mxu0
  %v399 = vadd.f32 %v356, %v398
  %v400 = vpop.f32.mrf.mxu0
  %401 = vdwg.mxu0
  %402 = vmatpush.bf16.msra.mxu0 0
  %403 = vmatpush.bf16.msra.mxu0 0
  %404 = vmatpush.bf16.msra.mxu0 0
  %405 = vmatpush.bf16.msra.mxu0 0
  %406 = vmatpush.bf16.msra.mxu0 0
  %407 = vmatpush.bf16.msra.mxu0 0
  %408 = vmatpush.bf16.msra.mxu0 %v275
  %409 = vmatpush.bf16.msra.mxu0 %v274
  %410 = vmatmul.bf16.gmra.mxu0 %v296
  %v411 = vpop.f32.mrf.mxu0
  %v412 = vadd.f32 %v369, %v411
  %v413 = vpop.f32.mrf.mxu0
  %v414 = vadd.f32 %v371, %v413
  %415 = vmatmul.bf16.gmra.mxu0 %v299
  %v416 = vpop.f32.mrf.mxu0
  %v417 = vadd.f32 %v374, %v416
  %v418 = vpop.f32.mrf.mxu0
  %v419 = vadd.f32 %v376, %v418
  %420 = vmatmul.bf16.gmra.mxu0 %v302
  %v421 = vpop.f32.mrf.mxu0
  %v422 = vadd.f32 %v379, %v421
  %v423 = vpop.f32.mrf.mxu0
  %v424 = vadd.f32 %v381, %v423
  %425 = vmatmul.bf16.gmra.mxu0 %v305
  %v426 = vpop.f32.mrf.mxu0
  %v427 = vadd.f32 %v384, %v426
  %v428 = vpop.f32.mrf.mxu0
  %v429 = vadd.f32 %v386, %v428
  %430 = vmatmul.bf16.gmra.mxu0 %v308
  %v431 = vpop.f32.mrf.mxu0
  %v432 = vadd.f32 %v389, %v431
  %v433 = vpop.f32.mrf.mxu0
  %v434 = vadd.f32 %v391, %v433
  %435 = vmatmul.bf16.gmra.mxu0 %v311
  %v436 = vpop.f32.mrf.mxu0
  %v437 = vadd.f32 %v394, %v436
  %v438 = vpop.f32.mrf.mxu0
  %v439 = vadd.f32 %v396, %v438
  %440 = vmatmul.bf16.gmra.mxu0 %v314
  %v441 = vpop.f32.mrf.mxu0
  %v442 = vadd.f32 %v399, %v441
  %v443 = vpop.f32.mrf.mxu0
  %444 = vdwg.mxu0
  %v445 = vld [vmem:[%s1] sm:$0xff]
  %v446 = vld [vmem:[%s1 + $0x8] sm:$0xf]
  %v447 = vld [vmem:[%s1 + $0xc] sm:$0xff]
  %v448 = vld [vmem:[%s1 + $0x14] sm:$0xf]
  %v449 = vld [vmem:[%s1 + $0x18] sm:$0xff]
  %v450 = vld [vmem:[%s1 + $0x20] sm:$0xf]
  %v451 = vld [vmem:[%s1 + $0x24] sm:$0xff]
  %v452 = vld [vmem:[%s1 + $0x2c] sm:$0xf]
  %v453 = vld [vmem:[%s1 + $0x30] sm:$0xff]
  %v454 = vld [vmem:[%s1 + $0x38] sm:$0xf]
  %v455 = vld [vmem:[%s1 + $0x3c] sm:$0xff]
  %v456 = vld [vmem:[%s1 + $0x44] sm:$0xf]
  %v457 = vld [vmem:[%s1 + $0x48] sm:$0xff]
  %v458 = vld [vmem:[%s1 + $0x50] sm:$0xf]
  %v459 = vld [vmem:[%s1 + $0x54] sm:$0xff]
  %v460 = vld [vmem:[%s1 + $0x5c] sm:$0xf]
  %v461 = vld [vmem:[%s1 + $0x60] sm:$0xff]
  %v462 = vld [vmem:[%s1 + $0x68] sm:$0xf]
  %v463 = vld [vmem:[%s1 + $0x6c] sm:$0xff]
  %v464 = vld [vmem:[%s1 + $0x74] sm:$0xf]
  %v465 = vld [vmem:[%s1 + $0x78] sm:$0xff]
  %v466 = vld [vmem:[%s1 + $0x80] sm:$0xf]
  %v467 = vld [vmem:[%s1 + $0x84] sm:$0xff]
  %v468 = vld [vmem:[%s1 + $0x8c] sm:$0xf]
  %v469 = vld [vmem:[%s1 + $0x90] sm:$0x11]
  %v470 = vld [vmem:[%s1 + $0x98] sm:$0x1]
  %v497 = vunpack.c.l.b16 %v445
  %v498 = vunpack.c.h.b16 %v445
  %v499 = vunpack.c.l.b16 %v446
  %v500 = vunpack.c.l.b16 %v447
  %v501 = vunpack.c.h.b16 %v447
  %v502 = vunpack.c.l.b16 %v448
  %v503 = vunpack.c.l.b16 %v449
  %v504 = vunpack.c.h.b16 %v449
  %v505 = vunpack.c.l.b16 %v450
  %v506 = vunpack.c.l.b16 %v451
  %v507 = vunpack.c.h.b16 %v451
  %v508 = vunpack.c.l.b16 %v452
  %v509 = vunpack.c.l.b16 %v453
  %v510 = vunpack.c.h.b16 %v453
  %v511 = vunpack.c.l.b16 %v454
  %v512 = vunpack.c.l.b16 %v455
  %v513 = vunpack.c.h.b16 %v455
  %v514 = vunpack.c.l.b16 %v456
  %v515 = vunpack.c.l.b16 %v457
  %v516 = vunpack.c.h.b16 %v457
  %v517 = vunpack.c.l.b16 %v458
  %v518 = vunpack.c.l.b16 %v459
  %v519 = vunpack.c.h.b16 %v459
  %v520 = vunpack.c.l.b16 %v460
  %v521 = vunpack.c.l.b16 %v461
  %v522 = vunpack.c.h.b16 %v461
  %v523 = vunpack.c.l.b16 %v462
  %v524 = vunpack.c.l.b16 %v463
  %v525 = vunpack.c.h.b16 %v463
  %v526 = vunpack.c.l.b16 %v464
  %v527 = vunpack.c.l.b16 %v465
  %v528 = vunpack.c.h.b16 %v465
  %v529 = vunpack.c.l.b16 %v466
  %v530 = vunpack.c.l.b16 %v467
  %v531 = vunpack.c.h.b16 %v467
  %v532 = vunpack.c.l.b16 %v468
  %v533 = vunpack.c.l.b16 %v469
  %v534 = vunpack.c.h.b16 %v469
  %v535 = vunpack.c.l.b16 %v470
  %v536 = vpack.c.b16 %v500, %v497
  %v537 = vpack.c.b16 %v501, %v498
  %v538 = vpack.c.b16 %v502, %v499
  %v539 = vpack.c.b16 %v506, %v503
  %v540 = vpack.c.b16 %v507, %v504
  %v541 = vpack.c.b16 %v508, %v505
  %v542 = vpack.c.b16 %v512, %v509
  %v543 = vpack.c.b16 %v513, %v510
  %v544 = vpack.c.b16 %v514, %v511
  %v545 = vpack.c.b16 %v518, %v515
  %v546 = vpack.c.b16 %v519, %v516
  %v547 = vpack.c.b16 %v520, %v517
  %v548 = vpack.c.b16 %v524, %v521
  %v549 = vpack.c.b16 %v525, %v522
  %v550 = vpack.c.b16 %v526, %v523
  %v551 = vpack.c.b16 %v530, %v527
  %v552 = vpack.c.b16 %v531, %v528
  %v553 = vpack.c.b16 %v532, %v529
  %v554 = vpack.c.b16 %v533, %v533
  %v555 = vpack.c.b16 %v534, %v534
  %v556 = vpack.c.b16 %v535, %v535
  %v572 = vsel %vm294, %v538, 0
  %v575 = vsel %vm294, %v541, 0
  %v578 = vsel %vm294, %v544, 0
  %v581 = vsel %vm294, %v547, 0
  %v584 = vsel %vm294, %v550, 0
  %v587 = vsel %vm294, %v553, 0
  %v590 = vsel %vm294, %v556, 0
  %592 = vmatpush.bf16.msra.mxu0 %v265
  %593 = vmatpush.bf16.msra.mxu0 %v264
  %594 = vmatpush.bf16.msra.mxu0 %v263
  %595 = vmatpush.bf16.msra.mxu0 %v262
  %596 = vmatpush.bf16.msra.mxu0 %v261
  %597 = vmatpush.bf16.msra.mxu0 %v260
  %598 = vmatpush.bf16.msra.mxu0 %v259
  %599 = vmatpush.bf16.msra.mxu0 %v258
  %600 = vmatmul.bf16.gmra.mxu0 %v536
  %v601 = vpop.f32.mrf.mxu0
  %v602 = vadd.f32 0.0, %v601
  %v603 = vpop.f32.mrf.mxu0
  %v604 = vadd.f32 0.0, %v603
  %605 = vmatmul.bf16.gmra.mxu0 %v539
  %v606 = vpop.f32.mrf.mxu0
  %v607 = vadd.f32 0.0, %v606
  %v608 = vpop.f32.mrf.mxu0
  %v609 = vadd.f32 0.0, %v608
  %610 = vmatmul.bf16.gmra.mxu0 %v542
  %v611 = vpop.f32.mrf.mxu0
  %v612 = vadd.f32 0.0, %v611
  %v613 = vpop.f32.mrf.mxu0
  %v614 = vadd.f32 0.0, %v613
  %615 = vmatmul.bf16.gmra.mxu0 %v545
  %v616 = vpop.f32.mrf.mxu0
  %v617 = vadd.f32 0.0, %v616
  %v618 = vpop.f32.mrf.mxu0
  %v619 = vadd.f32 0.0, %v618
  %620 = vmatmul.bf16.gmra.mxu0 %v548
  %v621 = vpop.f32.mrf.mxu0
  %v622 = vadd.f32 0.0, %v621
  %v623 = vpop.f32.mrf.mxu0
  %v624 = vadd.f32 0.0, %v623
  %625 = vmatmul.bf16.gmra.mxu0 %v551
  %v626 = vpop.f32.mrf.mxu0
  %v627 = vadd.f32 0.0, %v626
  %v628 = vpop.f32.mrf.mxu0
  %v629 = vadd.f32 0.0, %v628
  %630 = vmatmul.bf16.gmra.mxu0 %v554
  %v631 = vpop.f32.mrf.mxu0
  %v632 = vadd.f32 0.0, %v631
  %v633 = vpop.f32.mrf.mxu0
  %634 = vdwg.mxu0
  %635 = vmatpush.bf16.msra.mxu0 %v273
  %636 = vmatpush.bf16.msra.mxu0 %v272
  %637 = vmatpush.bf16.msra.mxu0 %v271
  %638 = vmatpush.bf16.msra.mxu0 %v270
  %639 = vmatpush.bf16.msra.mxu0 %v269
  %640 = vmatpush.bf16.msra.mxu0 %v268
  %641 = vmatpush.bf16.msra.mxu0 %v267
  %642 = vmatpush.bf16.msra.mxu0 %v266
  %643 = vmatmul.bf16.gmra.mxu0 %v537
  %v644 = vpop.f32.mrf.mxu0
  %v645 = vadd.f32 %v602, %v644
  %v646 = vpop.f32.mrf.mxu0
  %v647 = vadd.f32 %v604, %v646
  %648 = vmatmul.bf16.gmra.mxu0 %v540
  %v649 = vpop.f32.mrf.mxu0
  %v650 = vadd.f32 %v607, %v649
  %v651 = vpop.f32.mrf.mxu0
  %v652 = vadd.f32 %v609, %v651
  %653 = vmatmul.bf16.gmra.mxu0 %v543
  %v654 = vpop.f32.mrf.mxu0
  %v655 = vadd.f32 %v612, %v654
  %v656 = vpop.f32.mrf.mxu0
  %v657 = vadd.f32 %v614, %v656
  %658 = vmatmul.bf16.gmra.mxu0 %v546
  %v659 = vpop.f32.mrf.mxu0
  %v660 = vadd.f32 %v617, %v659
  %v661 = vpop.f32.mrf.mxu0
  %v662 = vadd.f32 %v619, %v661
  %663 = vmatmul.bf16.gmra.mxu0 %v549
  %v664 = vpop.f32.mrf.mxu0
  %v665 = vadd.f32 %v622, %v664
  %v666 = vpop.f32.mrf.mxu0
  %v667 = vadd.f32 %v624, %v666
  %668 = vmatmul.bf16.gmra.mxu0 %v552
  %v669 = vpop.f32.mrf.mxu0
  %v670 = vadd.f32 %v627, %v669
  %v671 = vpop.f32.mrf.mxu0
  %v672 = vadd.f32 %v629, %v671
  %673 = vmatmul.bf16.gmra.mxu0 %v555
  %v674 = vpop.f32.mrf.mxu0
  %v675 = vadd.f32 %v632, %v674
  %v676 = vpop.f32.mrf.mxu0
  %677 = vdwg.mxu0
  %678 = vmatpush.bf16.msra.mxu0 0
  %679 = vmatpush.bf16.msra.mxu0 0
  %680 = vmatpush.bf16.msra.mxu0 0
  %681 = vmatpush.bf16.msra.mxu0 0
  %682 = vmatpush.bf16.msra.mxu0 0
  %683 = vmatpush.bf16.msra.mxu0 0
  %684 = vmatpush.bf16.msra.mxu0 %v275
  %685 = vmatpush.bf16.msra.mxu0 %v274
  %686 = vmatmul.bf16.gmra.mxu0 %v572
  %v687 = vpop.f32.mrf.mxu0
  %v688 = vadd.f32 %v645, %v687
  %v689 = vpop.f32.mrf.mxu0
  %v690 = vadd.f32 %v647, %v689
  %691 = vmatmul.bf16.gmra.mxu0 %v575
  %v692 = vpop.f32.mrf.mxu0
  %v693 = vadd.f32 %v650, %v692
  %v694 = vpop.f32.mrf.mxu0
  %v695 = vadd.f32 %v652, %v694
  %696 = vmatmul.bf16.gmra.mxu0 %v578
  %v697 = vpop.f32.mrf.mxu0
  %v698 = vadd.f32 %v655, %v697
  %v699 = vpop.f32.mrf.mxu0
  %v700 = vadd.f32 %v657, %v699
  %701 = vmatmul.bf16.gmra.mxu0 %v581
  %v702 = vpop.f32.mrf.mxu0
  %v703 = vadd.f32 %v660, %v702
  %v704 = vpop.f32.mrf.mxu0
  %v705 = vadd.f32 %v662, %v704
  %706 = vmatmul.bf16.gmra.mxu0 %v584
  %v707 = vpop.f32.mrf.mxu0
  %v708 = vadd.f32 %v665, %v707
  %v709 = vpop.f32.mrf.mxu0
  %v710 = vadd.f32 %v667, %v709
  %711 = vmatmul.bf16.gmra.mxu0 %v587
  %v712 = vpop.f32.mrf.mxu0
  %v713 = vadd.f32 %v670, %v712
  %v714 = vpop.f32.mrf.mxu0
  %v715 = vadd.f32 %v672, %v714
  %716 = vmatmul.bf16.gmra.mxu0 %v590
  %v717 = vpop.f32.mrf.mxu0
  %v718 = vadd.f32 %v675, %v717
  %v719 = vpop.f32.mrf.mxu0
  %720 = vdwg.mxu0
  %v721 = vld [vmem:[%s2] sm:$0xff]
  %v722 = vld [vmem:[%s2 + $0x8] sm:$0xf]
  %v723 = vld [vmem:[%s2 + $0xc] sm:$0xff]
  %v724 = vld [vmem:[%s2 + $0x14] sm:$0xf]
  %v725 = vld [vmem:[%s2 + $0x18] sm:$0xff]
  %v726 = vld [vmem:[%s2 + $0x20] sm:$0xf]
  %v727 = vld [vmem:[%s2 + $0x24] sm:$0xff]
  %v728 = vld [vmem:[%s2 + $0x2c] sm:$0xf]
  %v729 = vld [vmem:[%s2 + $0x30] sm:$0xff]
  %v730 = vld [vmem:[%s2 + $0x38] sm:$0xf]
  %v731 = vld [vmem:[%s2 + $0x3c] sm:$0xff]
  %v732 = vld [vmem:[%s2 + $0x44] sm:$0xf]
  %v733 = vld [vmem:[%s2 + $0x48] sm:$0xff]
  %v734 = vld [vmem:[%s2 + $0x50] sm:$0xf]
  %v735 = vld [vmem:[%s2 + $0x54] sm:$0xff]
  %v736 = vld [vmem:[%s2 + $0x5c] sm:$0xf]
  %v737 = vld [vmem:[%s2 + $0x60] sm:$0xff]
  %v738 = vld [vmem:[%s2 + $0x68] sm:$0xf]
  %v739 = vld [vmem:[%s2 + $0x6c] sm:$0xff]
  %v740 = vld [vmem:[%s2 + $0x74] sm:$0xf]
  %v741 = vld [vmem:[%s2 + $0x78] sm:$0xff]
  %v742 = vld [vmem:[%s2 + $0x80] sm:$0xf]
  %v743 = vld [vmem:[%s2 + $0x84] sm:$0xff]
  %v744 = vld [vmem:[%s2 + $0x8c] sm:$0xf]
  %v745 = vld [vmem:[%s2 + $0x90] sm:$0x11]
  %v746 = vld [vmem:[%s2 + $0x98] sm:$0x1]
  %v773 = vunpack.c.l.b16 %v721
  %v774 = vunpack.c.h.b16 %v721
  %v775 = vunpack.c.l.b16 %v722
  %v776 = vunpack.c.l.b16 %v723
  %v777 = vunpack.c.h.b16 %v723
  %v778 = vunpack.c.l.b16 %v724
  %v779 = vunpack.c.l.b16 %v725
  %v780 = vunpack.c.h.b16 %v725
  %v781 = vunpack.c.l.b16 %v726
  %v782 = vunpack.c.l.b16 %v727
  %v783 = vunpack.c.h.b16 %v727
  %v784 = vunpack.c.l.b16 %v728
  %v785 = vunpack.c.l.b16 %v729
  %v786 = vunpack.c.h.b16 %v729
  %v787 = vunpack.c.l.b16 %v730
  %v788 = vunpack.c.l.b16 %v731
  %v789 = vunpack.c.h.b16 %v731
  %v790 = vunpack.c.l.b16 %v732
  %v791 = vunpack.c.l.b16 %v733
  %v792 = vunpack.c.h.b16 %v733
  %v793 = vunpack.c.l.b16 %v734
  %v794 = vunpack.c.l.b16 %v735
  %v795 = vunpack.c.h.b16 %v735
  %v796 = vunpack.c.l.b16 %v736
  %v797 = vunpack.c.l.b16 %v737
  %v798 = vunpack.c.h.b16 %v737
  %v799 = vunpack.c.l.b16 %v738
  %v800 = vunpack.c.l.b16 %v739
  %v801 = vunpack.c.h.b16 %v739
  %v802 = vunpack.c.l.b16 %v740
  %v803 = vunpack.c.l.b16 %v741
  %v804 = vunpack.c.h.b16 %v741
  %v805 = vunpack.c.l.b16 %v742
  %v806 = vunpack.c.l.b16 %v743
  %v807 = vunpack.c.h.b16 %v743
  %v808 = vunpack.c.l.b16 %v744
  %v809 = vunpack.c.l.b16 %v745
  %v810 = vunpack.c.h.b16 %v745
  %v811 = vunpack.c.l.b16 %v746
  %v812 = vpack.c.b16 %v776, %v773
  %v813 = vpack.c.b16 %v777, %v774
  %v814 = vpack.c.b16 %v778, %v775
  %v815 = vpack.c.b16 %v782, %v779
  %v816 = vpack.c.b16 %v783, %v780
  %v817 = vpack.c.b16 %v784, %v781
  %v818 = vpack.c.b16 %v788, %v785
  %v819 = vpack.c.b16 %v789, %v786
  %v820 = vpack.c.b16 %v790, %v787
  %v821 = vpack.c.b16 %v794, %v791
  %v822 = vpack.c.b16 %v795, %v792
  %v823 = vpack.c.b16 %v796, %v793
  %v824 = vpack.c.b16 %v800, %v797
  %v825 = vpack.c.b16 %v801, %v798
  %v826 = vpack.c.b16 %v802, %v799
  %v827 = vpack.c.b16 %v806, %v803
  %v828 = vpack.c.b16 %v807, %v804
  %v829 = vpack.c.b16 %v808, %v805
  %v830 = vpack.c.b16 %v809, %v809
  %v831 = vpack.c.b16 %v810, %v810
  %v832 = vpack.c.b16 %v811, %v811
  %v848 = vsel %vm294, %v814, 0
  %v851 = vsel %vm294, %v817, 0
  %v854 = vsel %vm294, %v820, 0
  %v857 = vsel %vm294, %v823, 0
  %v860 = vsel %vm294, %v826, 0
  %v863 = vsel %vm294, %v829, 0
  %v866 = vsel %vm294, %v832, 0
  %868 = vmatpush.bf16.msra.mxu0 %v265
  %869 = vmatpush.bf16.msra.mxu0 %v264
  %870 = vmatpush.bf16.msra.mxu0 %v263
  %871 = vmatpush.bf16.msra.mxu0 %v262
  %872 = vmatpush.bf16.msra.mxu0 %v261
  %873 = vmatpush.bf16.msra.mxu0 %v260
  %874 = vmatpush.bf16.msra.mxu0 %v259
  %875 = vmatpush.bf16.msra.mxu0 %v258
  %876 = vmatmul.bf16.gmra.mxu0 %v812
  %v877 = vpop.f32.mrf.mxu0
  %v878 = vadd.f32 0.0, %v877
  %v879 = vpop.f32.mrf.mxu0
  %v880 = vadd.f32 0.0, %v879
  %881 = vmatmul.bf16.gmra.mxu0 %v815
  %v882 = vpop.f32.mrf.mxu0
  %v883 = vadd.f32 0.0, %v882
  %v884 = vpop.f32.mrf.mxu0
  %v885 = vadd.f32 0.0, %v884
  %886 = vmatmul.bf16.gmra.mxu0 %v818
  %v887 = vpop.f32.mrf.mxu0
  %v888 = vadd.f32 0.0, %v887
  %v889 = vpop.f32.mrf.mxu0
  %v890 = vadd.f32 0.0, %v889
  %891 = vmatmul.bf16.gmra.mxu0 %v821
  %v892 = vpop.f32.mrf.mxu0
  %v893 = vadd.f32 0.0, %v892
  %v894 = vpop.f32.mrf.mxu0
  %v895 = vadd.f32 0.0, %v894
  %896 = vmatmul.bf16.gmra.mxu0 %v824
  %v897 = vpop.f32.mrf.mxu0
  %v898 = vadd.f32 0.0, %v897
  %v899 = vpop.f32.mrf.mxu0
  %v900 = vadd.f32 0.0, %v899
  %901 = vmatmul.bf16.gmra.mxu0 %v827
  %v902 = vpop.f32.mrf.mxu0
  %v903 = vadd.f32 0.0, %v902
  %v904 = vpop.f32.mrf.mxu0
  %v905 = vadd.f32 0.0, %v904
  %906 = vmatmul.bf16.gmra.mxu0 %v830
  %v907 = vpop.f32.mrf.mxu0
  %v908 = vadd.f32 0.0, %v907
  %v909 = vpop.f32.mrf.mxu0
  %910 = vdwg.mxu0
  %911 = vmatpush.bf16.msra.mxu0 %v273
  %912 = vmatpush.bf16.msra.mxu0 %v272
  %913 = vmatpush.bf16.msra.mxu0 %v271
  %914 = vmatpush.bf16.msra.mxu0 %v270
  %915 = vmatpush.bf16.msra.mxu0 %v269
  %916 = vmatpush.bf16.msra.mxu0 %v268
  %917 = vmatpush.bf16.msra.mxu0 %v267
  %918 = vmatpush.bf16.msra.mxu0 %v266
  %919 = vmatmul.bf16.gmra.mxu0 %v813
  %v920 = vpop.f32.mrf.mxu0
  %v921 = vadd.f32 %v878, %v920
  %v922 = vpop.f32.mrf.mxu0
  %v923 = vadd.f32 %v880, %v922
  %924 = vmatmul.bf16.gmra.mxu0 %v816
  %v925 = vpop.f32.mrf.mxu0
  %v926 = vadd.f32 %v883, %v925
  %v927 = vpop.f32.mrf.mxu0
  %v928 = vadd.f32 %v885, %v927
  %929 = vmatmul.bf16.gmra.mxu0 %v819
  %v930 = vpop.f32.mrf.mxu0
  %v931 = vadd.f32 %v888, %v930
  %v932 = vpop.f32.mrf.mxu0
  %v933 = vadd.f32 %v890, %v932
  %934 = vmatmul.bf16.gmra.mxu0 %v822
  %v935 = vpop.f32.mrf.mxu0
  %v936 = vadd.f32 %v893, %v935
  %v937 = vpop.f32.mrf.mxu0
  %v938 = vadd.f32 %v895, %v937
  %939 = vmatmul.bf16.gmra.mxu0 %v825
  %v940 = vpop.f32.mrf.mxu0
  %v941 = vadd.f32 %v898, %v940
  %v942 = vpop.f32.mrf.mxu0
  %v943 = vadd.f32 %v900, %v942
  %944 = vmatmul.bf16.gmra.mxu0 %v828
  %v945 = vpop.f32.mrf.mxu0
  %v946 = vadd.f32 %v903, %v945
  %v947 = vpop.f32.mrf.mxu0
  %v948 = vadd.f32 %v905, %v947
  %949 = vmatmul.bf16.gmra.mxu0 %v831
  %v950 = vpop.f32.mrf.mxu0
  %v951 = vadd.f32 %v908, %v950
  %v952 = vpop.f32.mrf.mxu0
  %953 = vdwg.mxu0
  %954 = vmatpush.bf16.msra.mxu0 0
  %955 = vmatpush.bf16.msra.mxu0 0
  %956 = vmatpush.bf16.msra.mxu0 0
  %957 = vmatpush.bf16.msra.mxu0 0
  %958 = vmatpush.bf16.msra.mxu0 0
  %959 = vmatpush.bf16.msra.mxu0 0
  %960 = vmatpush.bf16.msra.mxu0 %v275
  %961 = vmatpush.bf16.msra.mxu0 %v274
  %962 = vmatmul.bf16.gmra.mxu0 %v848
  %v963 = vpop.f32.mrf.mxu0
  %v964 = vadd.f32 %v921, %v963
  %v965 = vpop.f32.mrf.mxu0
  %v966 = vadd.f32 %v923, %v965
  %967 = vmatmul.bf16.gmra.mxu0 %v851
  %v968 = vpop.f32.mrf.mxu0
  %v969 = vadd.f32 %v926, %v968
  %v970 = vpop.f32.mrf.mxu0
  %v971 = vadd.f32 %v928, %v970
  %972 = vmatmul.bf16.gmra.mxu0 %v854
  %v973 = vpop.f32.mrf.mxu0
  %v974 = vadd.f32 %v931, %v973
  %v975 = vpop.f32.mrf.mxu0
  %v976 = vadd.f32 %v933, %v975
  %977 = vmatmul.bf16.gmra.mxu0 %v857
  %v978 = vpop.f32.mrf.mxu0
  %v979 = vadd.f32 %v936, %v978
  %v980 = vpop.f32.mrf.mxu0
  %v981 = vadd.f32 %v938, %v980
  %982 = vmatmul.bf16.gmra.mxu0 %v860
  %v983 = vpop.f32.mrf.mxu0
  %v984 = vadd.f32 %v941, %v983
  %v985 = vpop.f32.mrf.mxu0
  %v986 = vadd.f32 %v943, %v985
  %987 = vmatmul.bf16.gmra.mxu0 %v863
  %v988 = vpop.f32.mrf.mxu0
  %v989 = vadd.f32 %v946, %v988
  %v990 = vpop.f32.mrf.mxu0
  %v991 = vadd.f32 %v948, %v990
  %992 = vmatmul.bf16.gmra.mxu0 %v866
  %v993 = vpop.f32.mrf.mxu0
  %v994 = vadd.f32 %v951, %v993
  %v995 = vpop.f32.mrf.mxu0
  %996 = vdwg.mxu0
  %v997 = vld [vmem:[%s3] sm:$0xff]
  %v998 = vld [vmem:[%s3 + $0x8] sm:$0xf]
  %v999 = vld [vmem:[%s3 + $0xc] sm:$0xff]
  %v1000 = vld [vmem:[%s3 + $0x14] sm:$0xf]
  %v1001 = vld [vmem:[%s3 + $0x18] sm:$0xff]
  %v1002 = vld [vmem:[%s3 + $0x20] sm:$0xf]
  %v1003 = vld [vmem:[%s3 + $0x24] sm:$0xff]
  %v1004 = vld [vmem:[%s3 + $0x2c] sm:$0xf]
  %v1005 = vld [vmem:[%s3 + $0x30] sm:$0xff]
  %v1006 = vld [vmem:[%s3 + $0x38] sm:$0xf]
  %v1007 = vld [vmem:[%s3 + $0x3c] sm:$0xff]
  %v1008 = vld [vmem:[%s3 + $0x44] sm:$0xf]
  %v1009 = vld [vmem:[%s3 + $0x48] sm:$0xff]
  %v1010 = vld [vmem:[%s3 + $0x50] sm:$0xf]
  %v1011 = vld [vmem:[%s3 + $0x54] sm:$0xff]
  %v1012 = vld [vmem:[%s3 + $0x5c] sm:$0xf]
  %v1013 = vld [vmem:[%s3 + $0x60] sm:$0xff]
  %v1014 = vld [vmem:[%s3 + $0x68] sm:$0xf]
  %v1015 = vld [vmem:[%s3 + $0x6c] sm:$0xff]
  %v1016 = vld [vmem:[%s3 + $0x74] sm:$0xf]
  %v1017 = vld [vmem:[%s3 + $0x78] sm:$0xff]
  %v1018 = vld [vmem:[%s3 + $0x80] sm:$0xf]
  %v1019 = vld [vmem:[%s3 + $0x84] sm:$0xff]
  %v1020 = vld [vmem:[%s3 + $0x8c] sm:$0xf]
  %v1021 = vld [vmem:[%s3 + $0x90] sm:$0x11]
  %v1022 = vld [vmem:[%s3 + $0x98] sm:$0x1]
  %v1049 = vunpack.c.l.b16 %v997
  %v1050 = vunpack.c.h.b16 %v997
  %v1051 = vunpack.c.l.b16 %v998
  %v1052 = vunpack.c.l.b16 %v999
  %v1053 = vunpack.c.h.b16 %v999
  %v1054 = vunpack.c.l.b16 %v1000
  %v1055 = vunpack.c.l.b16 %v1001
  %v1056 = vunpack.c.h.b16 %v1001
  %v1057 = vunpack.c.l.b16 %v1002
  %v1058 = vunpack.c.l.b16 %v1003
  %v1059 = vunpack.c.h.b16 %v1003
  %v1060 = vunpack.c.l.b16 %v1004
  %v1061 = vunpack.c.l.b16 %v1005
  %v1062 = vunpack.c.h.b16 %v1005
  %v1063 = vunpack.c.l.b16 %v1006
  %v1064 = vunpack.c.l.b16 %v1007
  %v1065 = vunpack.c.h.b16 %v1007
  %v1066 = vunpack.c.l.b16 %v1008
  %v1067 = vunpack.c.l.b16 %v1009
  %v1068 = vunpack.c.h.b16 %v1009
  %v1069 = vunpack.c.l.b16 %v1010
  %v1070 = vunpack.c.l.b16 %v1011
  %v1071 = vunpack.c.h.b16 %v1011
  %v1072 = vunpack.c.l.b16 %v1012
  %v1073 = vunpack.c.l.b16 %v1013
  %v1074 = vunpack.c.h.b16 %v1013
  %v1075 = vunpack.c.l.b16 %v1014
  %v1076 = vunpack.c.l.b16 %v1015
  %v1077 = vunpack.c.h.b16 %v1015
  %v1078 = vunpack.c.l.b16 %v1016
  %v1079 = vunpack.c.l.b16 %v1017
  %v1080 = vunpack.c.h.b16 %v1017
  %v1081 = vunpack.c.l.b16 %v1018
  %v1082 = vunpack.c.l.b16 %v1019
  %v1083 = vunpack.c.h.b16 %v1019
  %v1084 = vunpack.c.l.b16 %v1020
  %v1085 = vunpack.c.l.b16 %v1021
  %v1086 = vunpack.c.h.b16 %v1021
  %v1087 = vunpack.c.l.b16 %v1022
  %v1088 = vpack.c.b16 %v1052, %v1049
  %v1089 = vpack.c.b16 %v1053, %v1050
  %v1090 = vpack.c.b16 %v1054, %v1051
  %v1091 = vpack.c.b16 %v1058, %v1055
  %v1092 = vpack.c.b16 %v1059, %v1056
  %v1093 = vpack.c.b16 %v1060, %v1057
  %v1094 = vpack.c.b16 %v1064, %v1061
  %v1095 = vpack.c.b16 %v1065, %v1062
  %v1096 = vpack.c.b16 %v1066, %v1063
  %v1097 = vpack.c.b16 %v1070, %v1067
  %v1098 = vpack.c.b16 %v1071, %v1068
  %v1099 = vpack.c.b16 %v1072, %v1069
  %v1100 = vpack.c.b16 %v1076, %v1073
  %v1101 = vpack.c.b16 %v1077, %v1074
  %v1102 = vpack.c.b16 %v1078, %v1075
  %v1103 = vpack.c.b16 %v1082, %v1079
  %v1104 = vpack.c.b16 %v1083, %v1080
  %v1105 = vpack.c.b16 %v1084, %v1081
  %v1106 = vpack.c.b16 %v1085, %v1085
  %v1107 = vpack.c.b16 %v1086, %v1086
  %v1108 = vpack.c.b16 %v1087, %v1087
  %v1124 = vsel %vm294, %v1090, 0
  %v1127 = vsel %vm294, %v1093, 0
  %v1130 = vsel %vm294, %v1096, 0
  %v1133 = vsel %vm294, %v1099, 0
  %v1136 = vsel %vm294, %v1102, 0
  %v1139 = vsel %vm294, %v1105, 0
  %v1142 = vsel %vm294, %v1108, 0
  %1144 = vmatpush.bf16.msra.mxu0 %v265
  %1145 = vmatpush.bf16.msra.mxu0 %v264
  %1146 = vmatpush.bf16.msra.mxu0 %v263
  %1147 = vmatpush.bf16.msra.mxu0 %v262
  %1148 = vmatpush.bf16.msra.mxu0 %v261
  %1149 = vmatpush.bf16.msra.mxu0 %v260
  %1150 = vmatpush.bf16.msra.mxu0 %v259
  %1151 = vmatpush.bf16.msra.mxu0 %v258
  %1152 = vmatmul.bf16.gmra.mxu0 %v1088
  %v1153 = vpop.f32.mrf.mxu0
  %v1154 = vadd.f32 0.0, %v1153
  %v1155 = vpop.f32.mrf.mxu0
  %v1156 = vadd.f32 0.0, %v1155
  %1157 = vmatmul.bf16.gmra.mxu0 %v1091
  %v1158 = vpop.f32.mrf.mxu0
  %v1159 = vadd.f32 0.0, %v1158
  %v1160 = vpop.f32.mrf.mxu0
  %v1161 = vadd.f32 0.0, %v1160
  %1162 = vmatmul.bf16.gmra.mxu0 %v1094
  %v1163 = vpop.f32.mrf.mxu0
  %v1164 = vadd.f32 0.0, %v1163
  %v1165 = vpop.f32.mrf.mxu0
  %v1166 = vadd.f32 0.0, %v1165
  %1167 = vmatmul.bf16.gmra.mxu0 %v1097
  %v1168 = vpop.f32.mrf.mxu0
  %v1169 = vadd.f32 0.0, %v1168
  %v1170 = vpop.f32.mrf.mxu0
  %v1171 = vadd.f32 0.0, %v1170
  %1172 = vmatmul.bf16.gmra.mxu0 %v1100
  %v1173 = vpop.f32.mrf.mxu0
  %v1174 = vadd.f32 0.0, %v1173
  %v1175 = vpop.f32.mrf.mxu0
  %v1176 = vadd.f32 0.0, %v1175
  %1177 = vmatmul.bf16.gmra.mxu0 %v1103
  %v1178 = vpop.f32.mrf.mxu0
  %v1179 = vadd.f32 0.0, %v1178
  %v1180 = vpop.f32.mrf.mxu0
  %v1181 = vadd.f32 0.0, %v1180
  %1182 = vmatmul.bf16.gmra.mxu0 %v1106
  %v1183 = vpop.f32.mrf.mxu0
  %v1184 = vadd.f32 0.0, %v1183
  %v1185 = vpop.f32.mrf.mxu0
  %1186 = vdwg.mxu0
  %1187 = vmatpush.bf16.msra.mxu0 %v273
  %1188 = vmatpush.bf16.msra.mxu0 %v272
  %1189 = vmatpush.bf16.msra.mxu0 %v271
  %1190 = vmatpush.bf16.msra.mxu0 %v270
  %1191 = vmatpush.bf16.msra.mxu0 %v269
  %1192 = vmatpush.bf16.msra.mxu0 %v268
  %1193 = vmatpush.bf16.msra.mxu0 %v267
  %1194 = vmatpush.bf16.msra.mxu0 %v266
  %1195 = vmatmul.bf16.gmra.mxu0 %v1089
  %v1196 = vpop.f32.mrf.mxu0
  %v1197 = vadd.f32 %v1154, %v1196
  %v1198 = vpop.f32.mrf.mxu0
  %v1199 = vadd.f32 %v1156, %v1198
  %1200 = vmatmul.bf16.gmra.mxu0 %v1092
  %v1201 = vpop.f32.mrf.mxu0
  %v1202 = vadd.f32 %v1159, %v1201
  %v1203 = vpop.f32.mrf.mxu0
  %v1204 = vadd.f32 %v1161, %v1203
  %1205 = vmatmul.bf16.gmra.mxu0 %v1095
  %v1206 = vpop.f32.mrf.mxu0
  %v1207 = vadd.f32 %v1164, %v1206
  %v1208 = vpop.f32.mrf.mxu0
  %v1209 = vadd.f32 %v1166, %v1208
  %1210 = vmatmul.bf16.gmra.mxu0 %v1098
  %v1211 = vpop.f32.mrf.mxu0
  %v1212 = vadd.f32 %v1169, %v1211
  %v1213 = vpop.f32.mrf.mxu0
  %v1214 = vadd.f32 %v1171, %v1213
  %1215 = vmatmul.bf16.gmra.mxu0 %v1101
  %v1216 = vpop.f32.mrf.mxu0
  %v1217 = vadd.f32 %v1174, %v1216
  %v1218 = vpop.f32.mrf.mxu0
  %v1219 = vadd.f32 %v1176, %v1218
  %1220 = vmatmul.bf16.gmra.mxu0 %v1104
  %v1221 = vpop.f32.mrf.mxu0
  %v1222 = vadd.f32 %v1179, %v1221
  %v1223 = vpop.f32.mrf.mxu0
  %v1224 = vadd.f32 %v1181, %v1223
  %1225 = vmatmul.bf16.gmra.mxu0 %v1107
  %v1226 = vpop.f32.mrf.mxu0
  %v1227 = vadd.f32 %v1184, %v1226
  %v1228 = vpop.f32.mrf.mxu0
  %1229 = vdwg.mxu0
  %1230 = vmatpush.bf16.msra.mxu0 0
  %1231 = vmatpush.bf16.msra.mxu0 0
  %1232 = vmatpush.bf16.msra.mxu0 0
  %1233 = vmatpush.bf16.msra.mxu0 0
  %1234 = vmatpush.bf16.msra.mxu0 0
  %1235 = vmatpush.bf16.msra.mxu0 0
  %1236 = vmatpush.bf16.msra.mxu0 %v275
  %1237 = vmatpush.bf16.msra.mxu0 %v274
  %1238 = vmatmul.bf16.gmra.mxu0 %v1124
  %v1239 = vpop.f32.mrf.mxu0
  %v1240 = vadd.f32 %v1197, %v1239
  %v1241 = vpop.f32.mrf.mxu0
  %v1242 = vadd.f32 %v1199, %v1241
  %1243 = vmatmul.bf16.gmra.mxu0 %v1127
  %v1244 = vpop.f32.mrf.mxu0
  %v1245 = vadd.f32 %v1202, %v1244
  %v1246 = vpop.f32.mrf.mxu0
  %v1247 = vadd.f32 %v1204, %v1246
  %1248 = vmatmul.bf16.gmra.mxu0 %v1130
  %v1249 = vpop.f32.mrf.mxu0
  %v1250 = vadd.f32 %v1207, %v1249
  %v1251 = vpop.f32.mrf.mxu0
  %v1252 = vadd.f32 %v1209, %v1251
  %1253 = vmatmul.bf16.gmra.mxu0 %v1133
  %v1254 = vpop.f32.mrf.mxu0
  %v1255 = vadd.f32 %v1212, %v1254
  %v1256 = vpop.f32.mrf.mxu0
  %v1257 = vadd.f32 %v1214, %v1256
  %1258 = vmatmul.bf16.gmra.mxu0 %v1136
  %v1259 = vpop.f32.mrf.mxu0
  %v1260 = vadd.f32 %v1217, %v1259
  %v1261 = vpop.f32.mrf.mxu0
  %v1262 = vadd.f32 %v1219, %v1261
  %1263 = vmatmul.bf16.gmra.mxu0 %v1139
  %v1264 = vpop.f32.mrf.mxu0
  %v1265 = vadd.f32 %v1222, %v1264
  %v1266 = vpop.f32.mrf.mxu0
  %v1267 = vadd.f32 %v1224, %v1266
  %1268 = vmatmul.bf16.gmra.mxu0 %v1142
  %v1269 = vpop.f32.mrf.mxu0
  %v1270 = vadd.f32 %v1227, %v1269
  %v1271 = vpop.f32.mrf.mxu0
  %1272 = vdwg.mxu0
  %v1273 = vmax.f32 %v412, %v688
  %v1274 = vmax.f32 %v414, %v690
  %v1275 = vmax.f32 %v417, %v693
  %v1276 = vmax.f32 %v419, %v695
  %v1277 = vmax.f32 %v422, %v698
  %v1278 = vmax.f32 %v424, %v700
  %v1279 = vmax.f32 %v427, %v703
  %v1280 = vmax.f32 %v429, %v705
  %v1281 = vmax.f32 %v432, %v708
  %v1282 = vmax.f32 %v434, %v710
  %v1283 = vmax.f32 %v437, %v713
  %v1284 = vmax.f32 %v439, %v715
  %v1285 = vmax.f32 %v442, %v718
  %v1286 = vmax.f32 %v964, %v1240
  %v1287 = vmax.f32 %v966, %v1242
  %v1288 = vmax.f32 %v969, %v1245
  %v1289 = vmax.f32 %v971, %v1247
  %v1290 = vmax.f32 %v974, %v1250
  %v1291 = vmax.f32 %v976, %v1252
  %v1292 = vmax.f32 %v979, %v1255
  %v1293 = vmax.f32 %v981, %v1257
  %v1294 = vmax.f32 %v984, %v1260
  %v1295 = vmax.f32 %v986, %v1262
  %v1296 = vmax.f32 %v989, %v1265
  %v1297 = vmax.f32 %v991, %v1267
  %v1298 = vmax.f32 %v994, %v1270
  %v1299 = vmax.f32 %v1273, %v1286
  %v1300 = vmax.f32 %v1274, %v1287
  %v1301 = vmax.f32 %v1275, %v1288
  %v1302 = vmax.f32 %v1276, %v1289
  %v1303 = vmax.f32 %v1277, %v1290
  %v1304 = vmax.f32 %v1278, %v1291
  %v1305 = vmax.f32 %v1279, %v1292
  %v1306 = vmax.f32 %v1280, %v1293
  %v1307 = vmax.f32 %v1281, %v1294
  %v1308 = vmax.f32 %v1282, %v1295
  %v1309 = vmax.f32 %v1283, %v1296
  %v1310 = vmax.f32 %v1284, %v1297
  %v1311 = vmax.f32 %v1285, %v1298
  %v1312 = vld [vmem:[%s5] sm:$0x1]
  %v1314 = vperm.slane %v1312, 0
  %v1316 = vadd.f32 %v1299, %v1314
  %v1317 = vadd.f32 %v1300, %v1314
  %v1318 = vadd.f32 %v1301, %v1314
  %v1319 = vadd.f32 %v1302, %v1314
  %v1320 = vadd.f32 %v1303, %v1314
  %v1321 = vadd.f32 %v1304, %v1314
  %v1322 = vadd.f32 %v1305, %v1314
  %v1323 = vadd.f32 %v1306, %v1314
  %v1324 = vadd.f32 %v1307, %v1314
  %v1325 = vadd.f32 %v1308, %v1314
  %v1326 = vadd.f32 %v1309, %v1314
  %v1327 = vadd.f32 %v1310, %v1314
  %v1328 = vadd.f32 %v1311, %v1314
  %v1329 = vmax.f32 %v1316, 0.0
  %v1330 = vmax.f32 %v1317, 0.0
  %v1331 = vmax.f32 %v1318, 0.0
  %v1332 = vmax.f32 %v1319, 0.0
  %v1333 = vmax.f32 %v1320, 0.0
  %v1334 = vmax.f32 %v1321, 0.0
  %v1335 = vmax.f32 %v1322, 0.0
  %v1336 = vmax.f32 %v1323, 0.0
  %v1337 = vmax.f32 %v1324, 0.0
  %v1338 = vmax.f32 %v1325, 0.0
  %v1339 = vmax.f32 %v1326, 0.0
  %v1340 = vmax.f32 %v1327, 0.0
  %v1341 = vmax.f32 %v1328, 0.0
  %v1342 = vpack.c.bf16 %v1329, %v1329
  %v1343 = vpack.c.bf16 %v1330, %v1330
  %v1344 = vpack.c.bf16 %v1331, %v1331
  %v1345 = vpack.c.bf16 %v1332, %v1332
  %v1346 = vpack.c.bf16 %v1333, %v1333
  %v1347 = vpack.c.bf16 %v1334, %v1334
  %v1348 = vpack.c.bf16 %v1335, %v1335
  %v1349 = vpack.c.bf16 %v1336, %v1336
  %v1350 = vpack.c.bf16 %v1337, %v1337
  %v1351 = vpack.c.bf16 %v1338, %v1338
  %v1352 = vpack.c.bf16 %v1339, %v1339
  %v1353 = vpack.c.bf16 %v1340, %v1340
  %v1354 = vpack.c.bf16 %v1341, %v1341
  %vm1355 = vcmask 519168
  %1356 = vst.msk [vmem:[%s6] sm:$0xf] %vm1355, %v1342
  %1357 = vst.msk [vmem:[%s6 + $0x4] sm:$0xf] %vm1355, %v1343
  %1358 = vst.msk [vmem:[%s6 + $0x8] sm:$0xf] %vm1355, %v1344
  %1359 = vst.msk [vmem:[%s6 + $0xc] sm:$0xf] %vm1355, %v1345
  %1360 = vst.msk [vmem:[%s6 + $0x10] sm:$0xf] %vm1355, %v1346
  %1361 = vst.msk [vmem:[%s6 + $0x14] sm:$0xf] %vm1355, %v1347
  %1362 = vst.msk [vmem:[%s6 + $0x18] sm:$0xf] %vm1355, %v1348
  %1363 = vst.msk [vmem:[%s6 + $0x1c] sm:$0xf] %vm1355, %v1349
  %1364 = vst.msk [vmem:[%s6 + $0x20] sm:$0xf] %vm1355, %v1350
  %1365 = vst.msk [vmem:[%s6 + $0x24] sm:$0xf] %vm1355, %v1351
  %1366 = vst.msk [vmem:[%s6 + $0x28] sm:$0xf] %vm1355, %v1352
  %1367 = vst.msk [vmem:[%s6 + $0x2c] sm:$0xf] %vm1355, %v1353
  %vm1368 = vcmask 516096
  %1369 = vst.msk [vmem:[%s6 + $0x30] sm:$0x1] %vm1368, %v1354
  // Predicated region
  $region26: #{classifier_cnn_forward.5} parent=0 // pred_check
    _
  $region27: #{classifier_cnn_forward.5} parent=0 // pred_check_branch
    %1371 = sbr.rel (0) target = $region29
  $region28: #{classifier_cnn_forward.5} parent=0 // pred_region
    _
  $region29: #{classifier_cnn_forward.5} parent=0 // pred_fallthru
    _
  // Predicated region
  $region30: #{classifier_cnn_forward.5} parent=0 // pred_check
    _
  $region31: #{classifier_cnn_forward.5} parent=0 // pred_check_branch
    %1373 = sbr.rel (0) target = $region33
  $region32: #{classifier_cnn_forward.5} parent=0 // pred_region
    _
  $region33: #{classifier_cnn_forward.5} parent=0 // pred_fallthru
    _

// kernel: classifier_cnn_forward.7
$region0: #{classifier_cnn_forward.7}
  #allocation0 [shape = 'u32[]', space=smem, size = 0x4, offset = 0x4, fixed_abs, tag = 'smem constant byte address 0x4 - core index']
  #allocation1 [shape = 'u32[72,128]{1,0:T(1,128)}', space=vmem, size = 0x9000, scoped, tag = 'internal scratch']
  %s0 = inlined_call_operand.vmem [shape: bf16[2,576], index: 0, kind: input, shape index: {}]
  %s1 = inlined_call_operand.vmem [shape: bf16[576,128], index: 1, kind: input, shape index: {}]
  %s2 = inlined_call_operand.vmem [shape: f32[1,128], index: 2, kind: input, shape index: {}]
  %s3 = inlined_call_operand.vmem [shape: bf16[128,10], index: 3, kind: input, shape index: {}]
  %s4 = inlined_call_operand.vmem [shape: f32[1,10], index: 4, kind: input, shape index: {}]
  %s5 = inlined_call_operand.hbm [shape: f32[2,10], index: 5, kind: output, shape index: {}]
  %s6 = sld [smem:[#allocation0]]
  $region30: #{classifier_cnn_forward.7} parent=0
    _
  %s8 = ssub.s32 1, %s6
  %s9 = scalar_select 0, %s8, %s6
  $region1: #{classifier_cnn_forward.7} parent=0
    #allocation2 [shape = 'u8[1024]{0}', space=vmem, size = 0x400, scoped, tag = 'output window, operand 0, single buffered']
    #allocation3 [shape = 's32[1]{0}', space=sflag, size = 0x4, scoped, tag = 'scoped memory for classifier_cnn_forward.7']
    %10 = vsyncpa [#allocation3], 0
    // Predicated region
    $region2: #{classifier_cnn_forward.7} parent=1 // pred_check
      _
    $region3: #{classifier_cnn_forward.7} parent=1 // pred_check_branch
      %12 = sbr.rel (0) target = $region5
    $region4: #{classifier_cnn_forward.7} parent=1 // pred_region
      _
    $region5: #{classifier_cnn_forward.7} parent=1 // pred_fallthru
      _
    // Predicated region
    $region6: #{classifier_cnn_forward.7} parent=1 // pred_check
      _
    $region7: #{classifier_cnn_forward.7} parent=1 // pred_check_branch
      %14 = sbr.rel (0) target = $region9
    $region8: #{classifier_cnn_forward.7} parent=1 // pred_region
      _
    $region9: #{classifier_cnn_forward.7} parent=1 // pred_fallthru
      _
    // Predicated region
    $region10: #{classifier_cnn_forward.7} parent=1 // pred_check
      _
    $region11: #{classifier_cnn_forward.7} parent=1 // pred_check_branch
      %16 = sbr.rel (0) target = $region13
    $region12: #{classifier_cnn_forward.7} parent=1 // pred_region
      _
    $region13: #{classifier_cnn_forward.7} parent=1 // pred_fallthru
      _
    // Predicated region
    $region14: #{classifier_cnn_forward.7} parent=1 // pred_check
      _
    $region15: #{classifier_cnn_forward.7} parent=1 // pred_check_branch
      %18 = sbr.rel (0) target = $region17
    $region16: #{classifier_cnn_forward.7} parent=1 // pred_region
      _
    $region17: #{classifier_cnn_forward.7} parent=1 // pred_fallthru
      _
    // Predicated region
    $region18: #{classifier_cnn_forward.7} parent=1 // pred_check
      _
    $region19: #{classifier_cnn_forward.7} parent=1 // pred_check_branch
      %20 = sbr.rel (0) target = $region21
    $region20: #{classifier_cnn_forward.7} parent=1 // pred_region
      _
    $region21: #{classifier_cnn_forward.7} parent=1 // pred_fallthru
      _
    %v22 = vld [vmem:[%s0] sm:$0x1f]
    %v23 = vld [vmem:[%s1] sm:$0xf]
    %v24 = vld [vmem:[%s1 + $0x4] sm:$0xf]
    %v25 = vld [vmem:[%s1 + $0x8] sm:$0xf]
    %v26 = vld [vmem:[%s1 + $0xc] sm:$0xf]
    %v27 = vld [vmem:[%s1 + $0x10] sm:$0xf]
    %v28 = vld [vmem:[%s1 + $0x14] sm:$0xf]
    %v29 = vld [vmem:[%s1 + $0x18] sm:$0xf]
    %v30 = vld [vmem:[%s1 + $0x1c] sm:$0xf]
    %v31 = vld [vmem:[%s1 + $0x20] sm:$0xf]
    %v32 = vld [vmem:[%s1 + $0x24] sm:$0xf]
    %v33 = vld [vmem:[%s1 + $0x28] sm:$0xf]
    %v34 = vld [vmem:[%s1 + $0x2c] sm:$0xf]
    %v35 = vld [vmem:[%s1 + $0x30] sm:$0xf]
    %v36 = vld [vmem:[%s1 + $0x34] sm:$0xf]
    %v37 = vld [vmem:[%s1 + $0x38] sm:$0xf]
    %v38 = vld [vmem:[%s1 + $0x3c] sm:$0xf]
    %v39 = vld [vmem:[%s1 + $0x40] sm:$0xf]
    %v40 = vld [vmem:[%s1 + $0x44] sm:$0xf]
    %v41 = vld [vmem:[%s1 + $0x48] sm:$0xf]
    %v42 = vld [vmem:[%s1 + $0x4c] sm:$0xf]
    %v43 = vld [vmem:[%s1 + $0x50] sm:$0xf]
    %v44 = vld [vmem:[%s1 + $0x54] sm:$0xf]
    %v45 = vld [vmem:[%s1 + $0x58] sm:$0xf]
    %v46 = vld [vmem:[%s1 + $0x5c] sm:$0xf]
    %v47 = vld [vmem:[%s1 + $0x60] sm:$0xf]
    %v48 = vld [vmem:[%s1 + $0x64] sm:$0xf]
    %v49 = vld [vmem:[%s1 + $0x68] sm:$0xf]
    %v50 = vld [vmem:[%s1 + $0x6c] sm:$0xf]
    %v51 = vld [vmem:[%s1 + $0x70] sm:$0xf]
    %v52 = vld [vmem:[%s1 + $0x74] sm:$0xf]
    %v53 = vld [vmem:[%s1 + $0x78] sm:$0xf]
    %v54 = vld [vmem:[%s1 + $0x7c] sm:$0xf]
    %v55 = vld [vmem:[%s1 + $0x80] sm:$0xf]
    %v56 = vld [vmem:[%s1 + $0x84] sm:$0xf]
    %v57 = vld [vmem:[%s1 + $0x88] sm:$0xf]
    %v58 = vld [vmem:[%s1 + $0x8c] sm:$0xf]
    %v59 = vld [vmem:[%s1 + $0x90] sm:$0xf]
    %v60 = vld [vmem:[%s1 + $0x94] sm:$0xf]
    %v61 = vld [vmem:[%s1 + $0x98] sm:$0xf]
    %v62 = vld [vmem:[%s1 + $0x9c] sm:$0xf]
    %v63 = vld [vmem:[%s1 + $0xa0] sm:$0xf]
    %v64 = vld [vmem:[%s1 + $0xa4] sm:$0xf]
    %v65 = vld [vmem:[%s1 + $0xa8] sm:$0xf]
    %v66 = vld [vmem:[%s1 + $0xac] sm:$0xf]
    %v67 = vld [vmem:[%s1 + $0xb0] sm:$0xf]
    %v68 = vld [vmem:[%s1 + $0xb4] sm:$0xf]
    %v69 = vld [vmem:[%s1 + $0xb8] sm:$0xf]
    %v70 = vld [vmem:[%s1 + $0xbc] sm:$0xf]
    %v71 = vld [vmem:[%s1 + $0xc0] sm:$0xf]
    %v72 = vld [vmem:[%s1 + $0xc4] sm:$0xf]
    %v73 = vld [vmem:[%s1 + $0xc8] sm:$0xf]
    %v74 = vld [vmem:[%s1 + $0xcc] sm:$0xf]
    %v75 = vld [vmem:[%s1 + $0xd0] sm:$0xf]
    %v76 = vld [vmem:[%s1 + $0xd4] sm:$0xf]
    %v77 = vld [vmem:[%s1 + $0xd8] sm:$0xf]
    %v78 = vld [vmem:[%s1 + $0xdc] sm:$0xf]
    %v79 = vld [vmem:[%s1 + $0xe0] sm:$0xf]
    %v80 = vld [vmem:[%s1 + $0xe4] sm:$0xf]
    %v81 = vld [vmem:[%s1 + $0xe8] sm:$0xf]
    %v82 = vld [vmem:[%s1 + $0xec] sm:$0xf]
    %v83 = vld [vmem:[%s1 + $0xf0] sm:$0xf]
    %v84 = vld [vmem:[%s1 + $0xf4] sm:$0xf]
    %v85 = vld [vmem:[%s1 + $0xf8] sm:$0xf]
    %v86 = vld [vmem:[%s1 + $0xfc] sm:$0xf]
    %v87 = vld [vmem:[%s1 + $0x100] sm:$0xf]
    %v88 = vld [vmem:[%s1 + $0x104] sm:$0xf]
    %v89 = vld [vmem:[%s1 + $0x108] sm:$0xf]
    %v90 = vld [vmem:[%s1 + $0x10c] sm:$0xf]
    %v91 = vld [vmem:[%s1 + $0x110] sm:$0xf]
    %v92 = vld [vmem:[%s1 + $0x114] sm:$0xf]
    %v93 = vld [vmem:[%s1 + $0x118] sm:$0xf]
    %v94 = vld [vmem:[%s1 + $0x11c] sm:$0xf]
    %v95 = vld [vmem:[%s2] sm:$0x1]
    %v97 = vperm.slane %v95, 0
    %100 = vst [vmem:[#allocation1] ss:$9 sm:$0xff] %v22
    %v101 = vld [vmem:[#allocation1] sm:$0xff]
    %v102 = vld [vmem:[#allocation1 + $0x9] sm:$0xff]
    %v103 = vld [vmem:[#allocation1 + $0x12] sm:$0xff]
    %v104 = vld [vmem:[#allocation1 + $0x1b] sm:$0xff]
    %v105 = vld [vmem:[#allocation1 + $0x24] sm:$0xff]
    %v182 = vunpack.c.l.b16 %v23
    %v183 = vunpack.c.l.b16 %v24
    %v184 = vunpack.c.l.b16 %v25
    %v185 = vunpack.c.l.b16 %v26
    %v186 = vunpack.c.l.b16 %v27
    %v187 = vunpack.c.l.b16 %v28
    %v188 = vunpack.c.l.b16 %v29
    %v189 = vunpack.c.l.b16 %v30
    %v190 = vunpack.c.l.b16 %v31
    %v191 = vunpack.c.l.b16 %v32
    %v192 = vunpack.c.l.b16 %v33
    %v193 = vunpack.c.l.b16 %v34
    %v194 = vunpack.c.l.b16 %v35
    %v195 = vunpack.c.l.b16 %v36
    %v196 = vunpack.c.l.b16 %v37
    %v197 = vunpack.c.l.b16 %v38
    %v198 = vunpack.c.l.b16 %v39
    %v199 = vunpack.c.l.b16 %v40
    %v200 = vunpack.c.l.b16 %v41
    %v201 = vunpack.c.l.b16 %v42
    %v202 = vunpack.c.l.b16 %v43
    %v203 = vunpack.c.l.b16 %v44
    %v204 = vunpack.c.l.b16 %v45
    %v205 = vunpack.c.l.b16 %v46
    %v206 = vunpack.c.l.b16 %v47
    %v207 = vunpack.c.l.b16 %v48
    %v208 = vunpack.c.l.b16 %v49
    %v209 = vunpack.c.l.b16 %v50
    %v210 = vunpack.c.l.b16 %v51
    %v211 = vunpack.c.l.b16 %v52
    %v212 = vunpack.c.l.b16 %v53
    %v213 = vunpack.c.l.b16 %v54
    %v214 = vunpack.c.l.b16 %v55
    %v215 = vunpack.c.l.b16 %v56
    %v216 = vunpack.c.l.b16 %v57
    %v217 = vunpack.c.l.b16 %v58
    %v218 = vunpack.c.l.b16 %v59
    %v219 = vunpack.c.l.b16 %v60
    %v220 = vunpack.c.l.b16 %v61
    %v221 = vunpack.c.l.b16 %v62
    %v222 = vunpack.c.l.b16 %v63
    %v223 = vunpack.c.l.b16 %v64
    %v224 = vunpack.c.l.b16 %v65
    %v225 = vunpack.c.l.b16 %v66
    %v226 = vunpack.c.l.b16 %v67
    %v227 = vunpack.c.l.b16 %v68
    %v228 = vunpack.c.l.b16 %v69
    %v229 = vunpack.c.l.b16 %v70
    %v230 = vunpack.c.l.b16 %v71
    %v231 = vunpack.c.l.b16 %v72
    %v232 = vunpack.c.l.b16 %v73
    %v233 = vunpack.c.l.b16 %v74
    %v234 = vunpack.c.l.b16 %v75
    %v235 = vunpack.c.l.b16 %v76
    %v236 = vunpack.c.l.b16 %v77
    %v237 = vunpack.c.l.b16 %v78
    %v238 = vunpack.c.l.b16 %v79
    %v239 = vunpack.c.l.b16 %v80
    %v240 = vunpack.c.l.b16 %v81
    %v241 = vunpack.c.l.b16 %v82
    %v242 = vunpack.c.l.b16 %v83
    %v243 = vunpack.c.l.b16 %v84
    %v244 = vunpack.c.l.b16 %v85
    %v245 = vunpack.c.l.b16 %v86
    %v246 = vunpack.c.l.b16 %v87
    %v247 = vunpack.c.l.b16 %v88
    %v248 = vunpack.c.l.b16 %v89
    %v249 = vunpack.c.l.b16 %v90
    %v250 = vunpack.c.l.b16 %v91
    %v251 = vunpack.c.l.b16 %v92
    %v252 = vunpack.c.l.b16 %v93
    %v253 = vunpack.c.l.b16 %v94
    %v254 = vpack.c.b16 %v183, %v182
    %v255 = vpack.c.b16 %v185, %v184
    %v256 = vpack.c.b16 %v187, %v186
    %v257 = vpack.c.b16 %v189, %v188
    %v258 = vpack.c.b16 %v191, %v190
    %v259 = vpack.c.b16 %v193, %v192
    %v260 = vpack.c.b16 %v195, %v194
    %v261 = vpack.c.b16 %v197, %v196
    %v262 = vpack.c.b16 %v199, %v198
    %v263 = vpack.c.b16 %v201, %v200
    %v264 = vpack.c.b16 %v203, %v202
    %v265 = vpack.c.b16 %v205, %v204
    %v266 = vpack.c.b16 %v207, %v206
    %v267 = vpack.c.b16 %v209, %v208
    %v268 = vpack.c.b16 %v211, %v210
    %v269 = vpack.c.b16 %v213, %v212
    %v270 = vpack.c.b16 %v215, %v214
    %v271 = vpack.c.b16 %v217, %v216
    %v272 = vpack.c.b16 %v219, %v218
    %v273 = vpack.c.b16 %v221, %v220
    %v274 = vpack.c.b16 %v223, %v222
    %v275 = vpack.c.b16 %v225, %v224
    %v276 = vpack.c.b16 %v227, %v226
    %v277 = vpack.c.b16 %v229, %v228
    %v278 = vpack.c.b16 %v231, %v230
    %v279 = vpack.c.b16 %v233, %v232
    %v280 = vpack.c.b16 %v235, %v234
    %v281 = vpack.c.b16 %v237, %v236
    %v282 = vpack.c.b16 %v239, %v238
    %v283 = vpack.c.b16 %v241, %v240
    %v284 = vpack.c.b16 %v243, %v242
    %v285 = vpack.c.b16 %v245, %v244
    %v286 = vpack.c.b16 %v247, %v246
    %v287 = vpack.c.b16 %v249, %v248
    %v288 = vpack.c.b16 %v251, %v250
    %v289 = vpack.c.b16 %v253, %v252
    %vm326 = vcmask 523264
    %v327 = vsel %vm326, %v105, 0
    %329 = vmatpush.bf16.msra.mxu0 %v261
    %330 = vmatpush.bf16.msra.mxu0 %v260
    %331 = vmatpush.bf16.msra.mxu0 %v259
    %332 = vmatpush.bf16.msra.mxu0 %v258
    %333 = vmatpush.bf16.msra.mxu0 %v257
    %334 = vmatpush.bf16.msra.mxu0 %v256
    %335 = vmatpush.bf16.msra.mxu0 %v255
    %336 = vmatpush.bf16.msra.mxu0 %v254
    %337 = vmatmul.bf16.gmra.mxu0 %v101
    %v338 = vpop.f32.mrf.mxu0
    %v339 = vadd.f32 %v97, %v338
    %v340 = vpop.f32.mrf.mxu0
    %341 = vdwg.mxu0
    %342 = vmatpush.bf16.msra.mxu0 %v269
    %343 = vmatpush.bf16.msra.mxu0 %v268
    %344 = vmatpush.bf16.msra.mxu0 %v267
    %345 = vmatpush.bf16.msra.mxu0 %v266
    %346 = vmatpush.bf16.msra.mxu0 %v265
    %347 = vmatpush.bf16.msra.mxu0 %v264
    %348 = vmatpush.bf16.msra.mxu0 %v263
    %349 = vmatpush.bf16.msra.mxu0 %v262
    %350 = vmatmul.bf16.gmra.mxu0 %v102
    %v351 = vpop.f32.mrf.mxu0
    %v352 = vadd.f32 %v339, %v351
    %v353 = vpop.f32.mrf.mxu0
    %354 = vdwg.mxu0
    %355 = vmatpush.bf16.msra.mxu0 %v277
    %356 = vmatpush.bf16.msra.mxu0 %v276
    %357 = vmatpush.bf16.msra.mxu0 %v275
    %358 = vmatpush.bf16.msra.mxu0 %v274
    %359 = vmatpush.bf16.msra.mxu0 %v273
    %360 = vmatpush.bf16.msra.mxu0 %v272
    %361 = vmatpush.bf16.msra.mxu0 %v271
    %362 = vmatpush.bf16.msra.mxu0 %v270
    %363 = vmatmul.bf16.gmra.mxu0 %v103
    %v364 = vpop.f32.mrf.mxu0
    %v365 = vadd.f32 %v352, %v364
    %v366 = vpop.f32.mrf.mxu0
    %367 = vdwg.mxu0
    %368 = vmatpush.bf16.msra.mxu0 %v285
    %369 = vmatpush.bf16.msra.mxu0 %v284
    %370 = vmatpush.bf16.msra.mxu0 %v283
    %371 = vmatpush.bf16.msra.mxu0 %v282
    %372 = vmatpush.bf16.msra.mxu0 %v281
    %373 = vmatpush.bf16.msra.mxu0 %v280
    %374 = vmatpush.bf16.msra.mxu0 %v279
    %375 = vmatpush.bf16.msra.mxu0 %v278
    %376 = vmatmul.bf16.gmra.mxu0 %v104
    %v377 = vpop.f32.mrf.mxu0
    %v378 = vadd.f32 %v365, %v377
    %v379 = vpop.f32.mrf.mxu0
    %380 = vdwg.mxu0
    %381 = vmatpush.bf16.msra.mxu0 0
    %382 = vmatpush.bf16.msra.mxu0 0
    %383 = vmatpush.bf16.msra.mxu0 0
    %384 = vmatpush.bf16.msra.mxu0 0
    %385 = vmatpush.bf16.msra.mxu0 %v289
    %386 = vmatpush.bf16.msra.mxu0 %v288
    %387 = vmatpush.bf16.msra.mxu0 %v287
    %388 = vmatpush.bf16.msra.mxu0 %v286
    %389 = vmatmul.bf16.gmra.mxu0 %v327
    %v390 = vpop.f32.mrf.mxu0
    %v391 = vadd.f32 %v378, %v390
    %v392 = vpop.f32.mrf.mxu0
    %393 = vdwg.mxu0
    %v394 = vmax.f32 %v391, 0.0
    %v395 = vpack.c.bf16 %v394, %v394
    %v396 = vld [vmem:[%s3] sm:$0xf]
    %v397 = vld [vmem:[%s3 + $0x4] sm:$0xf]
    %v398 = vld [vmem:[%s3 + $0x8] sm:$0xf]
    %v399 = vld [vmem:[%s3 + $0xc] sm:$0xf]
    %v400 = vld [vmem:[%s3 + $0x10] sm:$0xf]
    %v401 = vld [vmem:[%s3 + $0x14] sm:$0xf]
    %v402 = vld [vmem:[%s3 + $0x18] sm:$0xf]
    %v403 = vld [vmem:[%s3 + $0x1c] sm:$0xf]
    %v404 = vld [vmem:[%s3 + $0x20] sm:$0xf]
    %v405 = vld [vmem:[%s3 + $0x24] sm:$0xf]
    %v406 = vld [vmem:[%s3 + $0x28] sm:$0xf]
    %v407 = vld [vmem:[%s3 + $0x2c] sm:$0xf]
    %v408 = vld [vmem:[%s3 + $0x30] sm:$0xf]
    %v409 = vld [vmem:[%s3 + $0x34] sm:$0xf]
    %v410 = vld [vmem:[%s3 + $0x38] sm:$0xf]
    %v411 = vld [vmem:[%s3 + $0x3c] sm:$0xf]
    %v412 = vld [vmem:[%s4] sm:$0x1]
    %v414 = vperm.slane %v412, 0
    %v432 = vunpack.c.l.b16 %v396
    %v433 = vunpack.c.l.b16 %v397
    %v434 = vunpack.c.l.b16 %v398
    %v435 = vunpack.c.l.b16 %v399
    %v436 = vunpack.c.l.b16 %v400
    %v437 = vunpack.c.l.b16 %v401
    %v438 = vunpack.c.l.b16 %v402
    %v439 = vunpack.c.l.b16 %v403
    %v440 = vunpack.c.l.b16 %v404
    %v441 = vunpack.c.l.b16 %v405
    %v442 = vunpack.c.l.b16 %v406
    %v443 = vunpack.c.l.b16 %v407
    %v444 = vunpack.c.l.b16 %v408
    %v445 = vunpack.c.l.b16 %v409
    %v446 = vunpack.c.l.b16 %v410
    %v447 = vunpack.c.l.b16 %v411
    %v448 = vpack.c.b16 %v433, %v432
    %v449 = vpack.c.b16 %v435, %v434
    %v450 = vpack.c.b16 %v437, %v436
    %v451 = vpack.c.b16 %v439, %v438
    %v452 = vpack.c.b16 %v441, %v440
    %v453 = vpack.c.b16 %v443, %v442
    %v454 = vpack.c.b16 %v445, %v444
    %v455 = vpack.c.b16 %v447, %v446
    %464 = vmatpush.bf16.msra.mxu0 %v455
    %465 = vmatpush.bf16.msra.mxu0 %v454
    %466 = vmatpush.bf16.msra.mxu0 %v453
    %467 = vmatpush.bf16.msra.mxu0 %v452
    %468 = vmatpush.bf16.msra.mxu0 %v451
    %469 = vmatpush.bf16.msra.mxu0 %v450
    %470 = vmatpush.bf16.msra.mxu0 %v449
    %471 = vmatpush.bf16.msra.mxu0 %v448
    %472 = vmatmul.bf16.gmra.mxu0 %v395
    %v473 = vpop.f32.mrf.mxu0
    %v474 = vadd.f32 %v414, %v473
    %v475 = vpop.f32.mrf.mxu0
    %476 = vdwg.mxu0
    %vm477 = vcmask 74752
    %478 = vst.msk [vmem:[#allocation2] sm:$0x3] %vm477, %v474
    // Predicated region
    $region22: #{classifier_cnn_forward.7} parent=1 // pred_check
      _
    $region23: #{classifier_cnn_forward.7} parent=1 // pred_check_branch
      %480 = sbr.rel (0) target = $region25
    $region24: #{classifier_cnn_forward.7} parent=1 // pred_region
      %482 = vsyncadd [#allocation3], 0
      %s484 = sshll.u32 [#allocation2], 4
      %s485 = int_to_ptr.vmem [resolvable:$true] %s484
      %s486 = sshll.u32 %s5, 4
      %s487 = int_to_ptr.hbm [resolvable:$true] %s486
      %489 = dma.vmem_to_hbm [thread:$0]  %s485, 32, %s487, [#allocation3]
    $region25: #{classifier_cnn_forward.7} parent=1 // pred_fallthru
      _
    // Predicated region
    $region26: #{classifier_cnn_forward.7} parent=1 // pred_check
      _
    $region27: #{classifier_cnn_forward.7} parent=1 // pred_check_branch
      %491 = sbr.rel (0) target = $region29
    $region28: #{classifier_cnn_forward.7} parent=1 // pred_region
      %493 = dma.done [#allocation3], 32
    $region29: #{classifier_cnn_forward.7} parent=1 // pred_fallthru
      _
    %494 = vsyncpa [#allocation3], 1

// kernel: classifier_cnn_forward.6
$region0: #{classifier_cnn_forward.6}
  #allocation0 [shape = 'u32[]', space=smem, size = 0x4, offset = 0x4, fixed_abs, tag = 'smem constant byte address 0x4 - core index']
  #allocation1 [shape = 'u32[72,128]{1,0:T(1,128)}', space=vmem, size = 0x9000, scoped, tag = 'internal scratch']
  %s0 = inlined_call_operand.vmem [shape: bf16[18,576], index: 0, kind: input, shape index: {}]
  %s1 = inlined_call_operand.vmem [shape: bf16[18,576], index: 1, kind: input, shape index: {}]
  %s2 = inlined_call_operand.vmem [shape: bf16[18,576], index: 2, kind: input, shape index: {}]
  %s3 = inlined_call_operand.vmem [shape: bf16[18,576], index: 3, kind: input, shape index: {}]
  %s4 = inlined_call_operand.vmem [shape: bf16[576,64], index: 4, kind: input, shape index: {}]
  %s5 = inlined_call_operand.vmem [shape: f32[1,64], index: 5, kind: input, shape index: {}]
  %s6 = inlined_call_operand.vmem [shape: bf16[18,64], index: 6, kind: output, shape index: {}]
  %s7 = sld [smem:[#allocation0]]
  $region34: #{classifier_cnn_forward.6} parent=0
    _
  %s9 = ssub.s32 1, %s7
  %s10 = scalar_select 0, %s9, %s7
  // Predicated region
  $region2: #{classifier_cnn_forward.6} parent=0 // pred_check
    _
  $region3: #{classifier_cnn_forward.6} parent=0 // pred_check_branch
    %12 = sbr.rel (0) target = $region5
  $region4: #{classifier_cnn_forward.6} parent=0 // pred_region
    _
  $region5: #{classifier_cnn_forward.6} parent=0 // pred_fallthru
    _
  // Predicated region
  $region6: #{classifier_cnn_forward.6} parent=0 // pred_check
    _
  $region7: #{classifier_cnn_forward.6} parent=0 // pred_check_branch
    %14 = sbr.rel (0) target = $region9
  $region8: #{classifier_cnn_forward.6} parent=0 // pred_region
    _
  $region9: #{classifier_cnn_forward.6} parent=0 // pred_fallthru
    _
  // Predicated region
  $region10: #{classifier_cnn_forward.6} parent=0 // pred_check
    _
  $region11: #{classifier_cnn_forward.6} parent=0 // pred_check_branch
    %16 = sbr.rel (0) target = $region13
  $region12: #{classifier_cnn_forward.6} parent=0 // pred_region
    _
  $region13: #{classifier_cnn_forward.6} parent=0 // pred_fallthru
    _
  // Predicated region
  $region14: #{classifier_cnn_forward.6} parent=0 // pred_check
    _
  $region15: #{classifier_cnn_forward.6} parent=0 // pred_check_branch
    %18 = sbr.rel (0) target = $region17
  $region16: #{classifier_cnn_forward.6} parent=0 // pred_region
    _
  $region17: #{classifier_cnn_forward.6} parent=0 // pred_fallthru
    _
  // Predicated region
  $region18: #{classifier_cnn_forward.6} parent=0 // pred_check
    _
  $region19: #{classifier_cnn_forward.6} parent=0 // pred_check_branch
    %20 = sbr.rel (0) target = $region21
  $region20: #{classifier_cnn_forward.6} parent=0 // pred_region
    _
  $region21: #{classifier_cnn_forward.6} parent=0 // pred_fallthru
    _
  // Predicated region
  $region22: #{classifier_cnn_forward.6} parent=0 // pred_check
    _
  $region23: #{classifier_cnn_forward.6} parent=0 // pred_check_branch
    %22 = sbr.rel (0) target = $region25
  $region24: #{classifier_cnn_forward.6} parent=0 // pred_region
    _
  $region25: #{classifier_cnn_forward.6} parent=0 // pred_fallthru
    _
  %v24 = vld [vmem:[%s4] sm:$0xf]
  %v25 = vld [vmem:[%s4 + $0x4] sm:$0xf]
  %v26 = vld [vmem:[%s4 + $0x8] sm:$0xf]
  %v27 = vld [vmem:[%s4 + $0xc] sm:$0xf]
  %v28 = vld [vmem:[%s4 + $0x10] sm:$0xf]
  %v29 = vld [vmem:[%s4 + $0x14] sm:$0xf]
  %v30 = vld [vmem:[%s4 + $0x18] sm:$0xf]
  %v31 = vld [vmem:[%s4 + $0x1c] sm:$0xf]
  %v32 = vld [vmem:[%s4 + $0x20] sm:$0xf]
  %v33 = vld [vmem:[%s4 + $0x24] sm:$0xf]
  %v34 = vld [vmem:[%s4 + $0x28] sm:$0xf]
  %v35 = vld [vmem:[%s4 + $0x2c] sm:$0xf]
  %v36 = vld [vmem:[%s4 + $0x30] sm:$0xf]
  %v37 = vld [vmem:[%s4 + $0x34] sm:$0xf]
  %v38 = vld [vmem:[%s4 + $0x38] sm:$0xf]
  %v39 = vld [vmem:[%s4 + $0x3c] sm:$0xf]
  %v40 = vld [vmem:[%s4 + $0x40] sm:$0xf]
  %v41 = vld [vmem:[%s4 + $0x44] sm:$0xf]
  %v42 = vld [vmem:[%s4 + $0x48] sm:$0xf]
  %v43 = vld [vmem:[%s4 + $0x4c] sm:$0xf]
  %v44 = vld [vmem:[%s4 + $0x50] sm:$0xf]
  %v45 = vld [vmem:[%s4 + $0x54] sm:$0xf]
  %v46 = vld [vmem:[%s4 + $0x58] sm:$0xf]
  %v47 = vld [vmem:[%s4 + $0x5c] sm:$0xf]
  %v48 = vld [vmem:[%s4 + $0x60] sm:$0xf]
  %v49 = vld [vmem:[%s4 + $0x64] sm:$0xf]
  %v50 = vld [vmem:[%s4 + $0x68] sm:$0xf]
  %v51 = vld [vmem:[%s4 + $0x6c] sm:$0xf]
  %v52 = vld [vmem:[%s4 + $0x70] sm:$0xf]
  %v53 = vld [vmem:[%s4 + $0x74] sm:$0xf]
  %v54 = vld [vmem:[%s4 + $0x78] sm:$0xf]
  %v55 = vld [vmem:[%s4 + $0x7c] sm:$0xf]
  %v56 = vld [vmem:[%s4 + $0x80] sm:$0xf]
  %v57 = vld [vmem:[%s4 + $0x84] sm:$0xf]
  %v58 = vld [vmem:[%s4 + $0x88] sm:$0xf]
  %v59 = vld [vmem:[%s4 + $0x8c] sm:$0xf]
  %v60 = vld [vmem:[%s4 + $0x90] sm:$0xf]
  %v61 = vld [vmem:[%s4 + $0x94] sm:$0xf]
  %v62 = vld [vmem:[%s4 + $0x98] sm:$0xf]
  %v63 = vld [vmem:[%s4 + $0x9c] sm:$0xf]
  %v64 = vld [vmem:[%s4 + $0xa0] sm:$0xf]
  %v65 = vld [vmem:[%s4 + $0xa4] sm:$0xf]
  %v66 = vld [vmem:[%s4 + $0xa8] sm:$0xf]
  %v67 = vld [vmem:[%s4 + $0xac] sm:$0xf]
  %v68 = vld [vmem:[%s4 + $0xb0] sm:$0xf]
  %v69 = vld [vmem:[%s4 + $0xb4] sm:$0xf]
  %v70 = vld [vmem:[%s4 + $0xb8] sm:$0xf]
  %v71 = vld [vmem:[%s4 + $0xbc] sm:$0xf]
  %v72 = vld [vmem:[%s4 + $0xc0] sm:$0xf]
  %v73 = vld [vmem:[%s4 + $0xc4] sm:$0xf]
  %v74 = vld [vmem:[%s4 + $0xc8] sm:$0xf]
  %v75 = vld [vmem:[%s4 + $0xcc] sm:$0xf]
  %v76 = vld [vmem:[%s4 + $0xd0] sm:$0xf]
  %v77 = vld [vmem:[%s4 + $0xd4] sm:$0xf]
  %v78 = vld [vmem:[%s4 + $0xd8] sm:$0xf]
  %v79 = vld [vmem:[%s4 + $0xdc] sm:$0xf]
  %v80 = vld [vmem:[%s4 + $0xe0] sm:$0xf]
  %v81 = vld [vmem:[%s4 + $0xe4] sm:$0xf]
  %v82 = vld [vmem:[%s4 + $0xe8] sm:$0xf]
  %v83 = vld [vmem:[%s4 + $0xec] sm:$0xf]
  %v84 = vld [vmem:[%s4 + $0xf0] sm:$0xf]
  %v85 = vld [vmem:[%s4 + $0xf4] sm:$0xf]
  %v86 = vld [vmem:[%s4 + $0xf8] sm:$0xf]
  %v87 = vld [vmem:[%s4 + $0xfc] sm:$0xf]
  %v88 = vld [vmem:[%s4 + $0x100] sm:$0xf]
  %v89 = vld [vmem:[%s4 + $0x104] sm:$0xf]
  %v90 = vld [vmem:[%s4 + $0x108] sm:$0xf]
  %v91 = vld [vmem:[%s4 + $0x10c] sm:$0xf]
  %v92 = vld [vmem:[%s4 + $0x110] sm:$0xf]
  %v93 = vld [vmem:[%s4 + $0x114] sm:$0xf]
  %v94 = vld [vmem:[%s4 + $0x118] sm:$0xf]
  %v95 = vld [vmem:[%s4 + $0x11c] sm:$0xf]
  %v96 = vld [vmem:[%s0] sm:$0xff]
  %v97 = vld [vmem:[%s0 + $0x8] sm:$0xff]
  %v98 = vld [vmem:[%s0 + $0x10] sm:$0xf]
  %v99 = vld [vmem:[%s0 + $0x14] sm:$0xff]
  %v100 = vld [vmem:[%s0 + $0x1c] sm:$0xff]
  %v101 = vld [vmem:[%s0 + $0x24] sm:$0xf]
  %v102 = vld [vmem:[%s0 + $0x28] sm:$0x11]
  %v103 = vld [vmem:[%s0 + $0x30] sm:$0x11]
  %v104 = vld [vmem:[%s0 + $0x38] sm:$0x1]
  %v114 = vunpack.c.l.b16 %v96
  %v115 = vunpack.c.h.b16 %v96
  %v116 = vunpack.c.l.b16 %v97
  %v117 = vunpack.c.h.b16 %v97
  %v118 = vunpack.c.l.b16 %v98
  %v119 = vunpack.c.l.b16 %v99
  %v120 = vunpack.c.h.b16 %v99
  %v121 = vunpack.c.l.b16 %v100
  %v122 = vunpack.c.h.b16 %v100
  %v123 = vunpack.c.l.b16 %v101
  %v124 = vunpack.c.l.b16 %v102
  %v125 = vunpack.c.h.b16 %v102
  %v126 = vunpack.c.l.b16 %v103
  %v127 = vunpack.c.h.b16 %v103
  %v128 = vunpack.c.l.b16 %v104
  %v129 = vpack.c.b16 %v119, %v114
  %v130 = vpack.c.b16 %v120, %v115
  %v131 = vpack.c.b16 %v121, %v116
  %v132 = vpack.c.b16 %v122, %v117
  %v133 = vpack.c.b16 %v123, %v118
  %v134 = vpack.c.b16 %v124, %v124
  %v135 = vpack.c.b16 %v125, %v125
  %v136 = vpack.c.b16 %v126, %v126
  %v137 = vpack.c.b16 %v127, %v127
  %v138 = vpack.c.b16 %v128, %v128
  %v219 = vunpack.c.l.b16 %v24
  %v220 = vunpack.c.l.b16 %v25
  %v221 = vunpack.c.l.b16 %v26
  %v222 = vunpack.c.l.b16 %v27
  %v223 = vunpack.c.l.b16 %v28
  %v224 = vunpack.c.l.b16 %v29
  %v225 = vunpack.c.l.b16 %v30
  %v226 = vunpack.c.l.b16 %v31
  %v227 = vunpack.c.l.b16 %v32
  %v228 = vunpack.c.l.b16 %v33
  %v229 = vunpack.c.l.b16 %v34
  %v230 = vunpack.c.l.b16 %v35
  %v231 = vunpack.c.l.b16 %v36
  %v232 = vunpack.c.l.b16 %v37
  %v233 = vunpack.c.l.b16 %v38
  %v234 = vunpack.c.l.b16 %v39
  %v235 = vunpack.c.l.b16 %v40
  %v236 = vunpack.c.l.b16 %v41
  %v237 = vunpack.c.l.b16 %v42
  %v238 = vunpack.c.l.b16 %v43
  %v239 = vunpack.c.l.b16 %v44
  %v240 = vunpack.c.l.b16 %v45
  %v241 = vunpack.c.l.b16 %v46
  %v242 = vunpack.c.l.b16 %v47
  %v243 = vunpack.c.l.b16 %v48
  %v244 = vunpack.c.l.b16 %v49
  %v245 = vunpack.c.l.b16 %v50
  %v246 = vunpack.c.l.b16 %v51
  %v247 = vunpack.c.l.b16 %v52
  %v248 = vunpack.c.l.b16 %v53
  %v249 = vunpack.c.l.b16 %v54
  %v250 = vunpack.c.l.b16 %v55
  %v251 = vunpack.c.l.b16 %v56
  %v252 = vunpack.c.l.b16 %v57
  %v253 = vunpack.c.l.b16 %v58
  %v254 = vunpack.c.l.b16 %v59
  %v255 = vunpack.c.l.b16 %v60
  %v256 = vunpack.c.l.b16 %v61
  %v257 = vunpack.c.l.b16 %v62
  %v258 = vunpack.c.l.b16 %v63
  %v259 = vunpack.c.l.b16 %v64
  %v260 = vunpack.c.l.b16 %v65
  %v261 = vunpack.c.l.b16 %v66
  %v262 = vunpack.c.l.b16 %v67
  %v263 = vunpack.c.l.b16 %v68
  %v264 = vunpack.c.l.b16 %v69
  %v265 = vunpack.c.l.b16 %v70
  %v266 = vunpack.c.l.b16 %v71
  %v267 = vunpack.c.l.b16 %v72
  %v268 = vunpack.c.l.b16 %v73
  %v269 = vunpack.c.l.b16 %v74
  %v270 = vunpack.c.l.b16 %v75
  %v271 = vunpack.c.l.b16 %v76
  %v272 = vunpack.c.l.b16 %v77
  %v273 = vunpack.c.l.b16 %v78
  %v274 = vunpack.c.l.b16 %v79
  %v275 = vunpack.c.l.b16 %v80
  %v276 = vunpack.c.l.b16 %v81
  %v277 = vunpack.c.l.b16 %v82
  %v278 = vunpack.c.l.b16 %v83
  %v279 = vunpack.c.l.b16 %v84
  %v280 = vunpack.c.l.b16 %v85
  %v281 = vunpack.c.l.b16 %v86
  %v282 = vunpack.c.l.b16 %v87
  %v283 = vunpack.c.l.b16 %v88
  %v284 = vunpack.c.l.b16 %v89
  %v285 = vunpack.c.l.b16 %v90
  %v286 = vunpack.c.l.b16 %v91
  %v287 = vunpack.c.l.b16 %v92
  %v288 = vunpack.c.l.b16 %v93
  %v289 = vunpack.c.l.b16 %v94
  %v290 = vunpack.c.l.b16 %v95
  %v291 = vpack.c.b16 %v220, %v219
  %v292 = vpack.c.b16 %v222, %v221
  %v293 = vpack.c.b16 %v224, %v223
  %v294 = vpack.c.b16 %v226, %v225
  %v295 = vpack.c.b16 %v228, %v227
  %v296 = vpack.c.b16 %v230, %v229
  %v297 = vpack.c.b16 %v232, %v231
  %v298 = vpack.c.b16 %v234, %v233
  %v299 = vpack.c.b16 %v236, %v235
  %v300 = vpack.c.b16 %v238, %v237
  %v301 = vpack.c.b16 %v240, %v239
  %v302 = vpack.c.b16 %v242, %v241
  %v303 = vpack.c.b16 %v244, %v243
  %v304 = vpack.c.b16 %v246, %v245
  %v305 = vpack.c.b16 %v248, %v247
  %v306 = vpack.c.b16 %v250, %v249
  %v307 = vpack.c.b16 %v252, %v251
  %v308 = vpack.c.b16 %v254, %v253
  %v309 = vpack.c.b16 %v256, %v255
  %v310 = vpack.c.b16 %v258, %v257
  %v311 = vpack.c.b16 %v260, %v259
  %v312 = vpack.c.b16 %v262, %v261
  %v313 = vpack.c.b16 %v264, %v263
  %v314 = vpack.c.b16 %v266, %v265
  %v315 = vpack.c.b16 %v268, %v267
  %v316 = vpack.c.b16 %v270, %v269
  %v317 = vpack.c.b16 %v272, %v271
  %v318 = vpack.c.b16 %v274, %v273
  %v319 = vpack.c.b16 %v276, %v275
  %v320 = vpack.c.b16 %v278, %v277
  %v321 = vpack.c.b16 %v280, %v279
  %v322 = vpack.c.b16 %v282, %v281
  %v323 = vpack.c.b16 %v284, %v283
  %v324 = vpack.c.b16 %v286, %v285
  %v325 = vpack.c.b16 %v288, %v287
  %v326 = vpack.c.b16 %v290, %v289
  %vm363 = vcmask 523264
  %v365 = vsel %vm363, %v133, 0
  %v368 = vsel %vm363, %v138, 0
  %370 = vmatpush.bf16.msra.mxu0 %v298
  %371 = vmatpush.bf16.msra.mxu0 %v297
  %372 = vmatpush.bf16.msra.mxu0 %v296
  %373 = vmatpush.bf16.msra.mxu0 %v295
  %374 = vmatpush.bf16.msra.mxu0 %v294
  %375 = vmatpush.bf16.msra.mxu0 %v293
  %376 = vmatpush.bf16.msra.mxu0 %v292
  %377 = vmatpush.bf16.msra.mxu0 %v291
  %378 = vmatmul.bf16.gmra.mxu0 %v129
  %v379 = vpop.f32.mrf.mxu0
  %v380 = vadd.f32 0.0, %v379
  %v381 = vpop.f32.mrf.mxu0
  %v382 = vadd.f32 0.0, %v381
  %383 = vmatmul.bf16.gmra.mxu0 %v134
  %v384 = vpop.f32.mrf.mxu0
  %v385 = vadd.f32 0.0, %v384
  %v386 = vpop.f32.mrf.mxu0
  %387 = vdwg.mxu0
  %388 = vmatpush.bf16.msra.mxu0 %v306
  %389 = vmatpush.bf16.msra.mxu0 %v305
  %390 = vmatpush.bf16.msra.mxu0 %v304
  %391 = vmatpush.bf16.msra.mxu0 %v303
  %392 = vmatpush.bf16.msra.mxu0 %v302
  %393 = vmatpush.bf16.msra.mxu0 %v301
  %394 = vmatpush.bf16.msra.mxu0 %v300
  %395 = vmatpush.bf16.msra.mxu0 %v299
  %396 = vmatmul.bf16.gmra.mxu0 %v130
  %v397 = vpop.f32.mrf.mxu0
  %v398 = vadd.f32 %v380, %v397
  %v399 = vpop.f32.mrf.mxu0
  %v400 = vadd.f32 %v382, %v399
  %401 = vmatmul.bf16.gmra.mxu0 %v135
  %v402 = vpop.f32.mrf.mxu0
  %v403 = vadd.f32 %v385, %v402
  %v404 = vpop.f32.mrf.mxu0
  %405 = vdwg.mxu0
  %406 = vmatpush.bf16.msra.mxu0 %v314
  %407 = vmatpush.bf16.msra.mxu0 %v313
  %408 = vmatpush.bf16.msra.mxu0 %v312
  %409 = vmatpush.bf16.msra.mxu0 %v311
  %410 = vmatpush.bf16.msra.mxu0 %v310
  %411 = vmatpush.bf16.msra.mxu0 %v309
  %412 = vmatpush.bf16.msra.mxu0 %v308
  %413 = vmatpush.bf16.msra.mxu0 %v307
  %414 = vmatmul.bf16.gmra.mxu0 %v131
  %v415 = vpop.f32.mrf.mxu0
  %v416 = vadd.f32 %v398, %v415
  %v417 = vpop.f32.mrf.mxu0
  %v418 = vadd.f32 %v400, %v417
  %419 = vmatmul.bf16.gmra.mxu0 %v136
  %v420 = vpop.f32.mrf.mxu0
  %v421 = vadd.f32 %v403, %v420
  %v422 = vpop.f32.mrf.mxu0
  %423 = vdwg.mxu0
  %424 = vmatpush.bf16.msra.mxu0 %v322
  %425 = vmatpush.bf16.msra.mxu0 %v321
  %426 = vmatpush.bf16.msra.mxu0 %v320
  %427 = vmatpush.bf16.msra.mxu0 %v319
  %428 = vmatpush.bf16.msra.mxu0 %v318
  %429 = vmatpush.bf16.msra.mxu0 %v317
  %430 = vmatpush.bf16.msra.mxu0 %v316
  %431 = vmatpush.bf16.msra.mxu0 %v315
  %432 = vmatmul.bf16.gmra.mxu0 %v132
  %v433 = vpop.f32.mrf.mxu0
  %v434 = vadd.f32 %v416, %v433
  %v435 = vpop.f32.mrf.mxu0
  %v436 = vadd.f32 %v418, %v435
  %437 = vmatmul.bf16.gmra.mxu0 %v137
  %v438 = vpop.f32.mrf.mxu0
  %v439 = vadd.f32 %v421, %v438
  %v440 = vpop.f32.mrf.mxu0
  %441 = vdwg.mxu0
  %442 = vmatpush.bf16.msra.mxu0 0
  %443 = vmatpush.bf16.msra.mxu0 0
  %444 = vmatpush.bf16.msra.mxu0 0
  %445 = vmatpush.bf16.msra.mxu0 0
  %446 = vmatpush.bf16.msra.mxu0 %v326
  %447 = vmatpush.bf16.msra.mxu0 %v325
  %448 = vmatpush.bf16.msra.mxu0 %v324
  %449 = vmatpush.bf16.msra.mxu0 %v323
  %450 = vmatmul.bf16.gmra.mxu0 %v365
  %v451 = vpop.f32.mrf.mxu0
  %v452 = vadd.f32 %v434, %v451
  %v453 = vpop.f32.mrf.mxu0
  %v454 = vadd.f32 %v436, %v453
  %455 = vmatmul.bf16.gmra.mxu0 %v368
  %v456 = vpop.f32.mrf.mxu0
  %v457 = vadd.f32 %v439, %v456
  %v458 = vpop.f32.mrf.mxu0
  %459 = vdwg.mxu0
  %v460 = vld [vmem:[%s1] sm:$0xff]
  %v461 = vld [vmem:[%s1 + $0x8] sm:$0xff]
  %v462 = vld [vmem:[%s1 + $0x10] sm:$0xf]
  %v463 = vld [vmem:[%s1 + $0x14] sm:$0xff]
  %v464 = vld [vmem:[%s1 + $0x1c] sm:$0xff]
  %v465 = vld [vmem:[%s1 + $0x24] sm:$0xf]
  %v466 = vld [vmem:[%s1 + $0x28] sm:$0x11]
  %v467 = vld [vmem:[%s1 + $0x30] sm:$0x11]
  %v468 = vld [vmem:[%s1 + $0x38] sm:$0x1]
  %v478 = vunpack.c.l.b16 %v460
  %v479 = vunpack.c.h.b16 %v460
  %v480 = vunpack.c.l.b16 %v461
  %v481 = vunpack.c.h.b16 %v461
  %v482 = vunpack.c.l.b16 %v462
  %v483 = vunpack.c.l.b16 %v463
  %v484 = vunpack.c.h.b16 %v463
  %v485 = vunpack.c.l.b16 %v464
  %v486 = vunpack.c.h.b16 %v464
  %v487 = vunpack.c.l.b16 %v465
  %v488 = vunpack.c.l.b16 %v466
  %v489 = vunpack.c.h.b16 %v466
  %v490 = vunpack.c.l.b16 %v467
  %v491 = vunpack.c.h.b16 %v467
  %v492 = vunpack.c.l.b16 %v468
  %v493 = vpack.c.b16 %v483, %v478
  %v494 = vpack.c.b16 %v484, %v479
  %v495 = vpack.c.b16 %v485, %v480
  %v496 = vpack.c.b16 %v486, %v481
  %v497 = vpack.c.b16 %v487, %v482
  %v498 = vpack.c.b16 %v488, %v488
  %v499 = vpack.c.b16 %v489, %v489
  %v500 = vpack.c.b16 %v490, %v490
  %v501 = vpack.c.b16 %v491, %v491
  %v502 = vpack.c.b16 %v492, %v492
  %v512 = vsel %vm363, %v497, 0
  %v515 = vsel %vm363, %v502, 0
  %517 = vmatpush.bf16.msra.mxu0 %v298
  %518 = vmatpush.bf16.msra.mxu0 %v297
  %519 = vmatpush.bf16.msra.mxu0 %v296
  %520 = vmatpush.bf16.msra.mxu0 %v295
  %521 = vmatpush.bf16.msra.mxu0 %v294
  %522 = vmatpush.bf16.msra.mxu0 %v293
  %523 = vmatpush.bf16.msra.mxu0 %v292
  %524 = vmatpush.bf16.msra.mxu0 %v291
  %525 = vmatmul.bf16.gmra.mxu0 %v493
  %v526 = vpop.f32.mrf.mxu0
  %v527 = vadd.f32 0.0, %v526
  %v528 = vpop.f32.mrf.mxu0
  %v529 = vadd.f32 0.0, %v528
  %530 = vmatmul.bf16.gmra.mxu0 %v498
  %v531 = vpop.f32.mrf.mxu0
  %v532 = vadd.f32 0.0, %v531
  %v533 = vpop.f32.mrf.mxu0
  %534 = vdwg.mxu0
  %535 = vmatpush.bf16.msra.mxu0 %v306
  %536 = vmatpush.bf16.msra.mxu0 %v305
  %537 = vmatpush.bf16.msra.mxu0 %v304
  %538 = vmatpush.bf16.msra.mxu0 %v303
  %539 = vmatpush.bf16.msra.mxu0 %v302
  %540 = vmatpush.bf16.msra.mxu0 %v301
  %541 = vmatpush.bf16.msra.mxu0 %v300
  %542 = vmatpush.bf16.msra.mxu0 %v299
  %543 = vmatmul.bf16.gmra.mxu0 %v494
  %v544 = vpop.f32.mrf.mxu0
  %v545 = vadd.f32 %v527, %v544
  %v546 = vpop.f32.mrf.mxu0
  %v547 = vadd.f32 %v529, %v546
  %548 = vmatmul.bf16.gmra.mxu0 %v499
  %v549 = vpop.f32.mrf.mxu0
  %v550 = vadd.f32 %v532, %v549
  %v551 = vpop.f32.mrf.mxu0
  %552 = vdwg.mxu0
  %553 = vmatpush.bf16.msra.mxu0 %v314
  %554 = vmatpush.bf16.msra.mxu0 %v313
  %555 = vmatpush.bf16.msra.mxu0 %v312
  %556 = vmatpush.bf16.msra.mxu0 %v311
  %557 = vmatpush.bf16.msra.mxu0 %v310
  %558 = vmatpush.bf16.msra.mxu0 %v309
  %559 = vmatpush.bf16.msra.mxu0 %v308
  %560 = vmatpush.bf16.msra.mxu0 %v307
  %561 = vmatmul.bf16.gmra.mxu0 %v495
  %v562 = vpop.f32.mrf.mxu0
  %v563 = vadd.f32 %v545, %v562
  %v564 = vpop.f32.mrf.mxu0
  %v565 = vadd.f32 %v547, %v564
  %566 = vmatmul.bf16.gmra.mxu0 %v500
  %v567 = vpop.f32.mrf.mxu0
  %v568 = vadd.f32 %v550, %v567
  %v569 = vpop.f32.mrf.mxu0
  %570 = vdwg.mxu0
  %571 = vmatpush.bf16.msra.mxu0 %v322
  %572 = vmatpush.bf16.msra.mxu0 %v321
  %573 = vmatpush.bf16.msra.mxu0 %v320
  %574 = vmatpush.bf16.msra.mxu0 %v319
  %575 = vmatpush.bf16.msra.mxu0 %v318
  %576 = vmatpush.bf16.msra.mxu0 %v317
  %577 = vmatpush.bf16.msra.mxu0 %v316
  %578 = vmatpush.bf16.msra.mxu0 %v315
  %579 = vmatmul.bf16.gmra.mxu0 %v496
  %v580 = vpop.f32.mrf.mxu0
  %v581 = vadd.f32 %v563, %v580
  %v582 = vpop.f32.mrf.mxu0
  %v583 = vadd.f32 %v565, %v582
  %584 = vmatmul.bf16.gmra.mxu0 %v501
  %v585 = vpop.f32.mrf.mxu0
  %v586 = vadd.f32 %v568, %v585
  %v587 = vpop.f32.mrf.mxu0
  %588 = vdwg.mxu0
  %589 = vmatpush.bf16.msra.mxu0 0
  %590 = vmatpush.bf16.msra.mxu0 0
  %591 = vmatpush.bf16.msra.mxu0 0
  %592 = vmatpush.bf16.msra.mxu0 0
  %593 = vmatpush.bf16.msra.mxu0 %v326
  %594 = vmatpush.bf16.msra.mxu0 %v325
  %595 = vmatpush.bf16.msra.mxu0 %v324
  %596 = vmatpush.bf16.msra.mxu0 %v323
  %597 = vmatmul.bf16.gmra.mxu0 %v512
  %v598 = vpop.f32.mrf.mxu0
  %v599 = vadd.f32 %v581, %v598
  %v600 = vpop.f32.mrf.mxu0
  %v601 = vadd.f32 %v583, %v600
  %602 = vmatmul.bf16.gmra.mxu0 %v515
  %v603 = vpop.f32.mrf.mxu0
  %v604 = vadd.f32 %v586, %v603
  %v605 = vpop.f32.mrf.mxu0
  %606 = vdwg.mxu0
  %v607 = vld [vmem:[%s2] sm:$0xff]
  %v608 = vld [vmem:[%s2 + $0x8] sm:$0xff]
  %v609 = vld [vmem:[%s2 + $0x10] sm:$0xf]
  %v610 = vld [vmem:[%s2 + $0x14] sm:$0xff]
  %v611 = vld [vmem:[%s2 + $0x1c] sm:$0xff]
  %v612 = vld [vmem:[%s2 + $0x24] sm:$0xf]
  %v613 = vld [vmem:[%s2 + $0x28] sm:$0x11]
  %v614 = vld [vmem:[%s2 + $0x30] sm:$0x11]
  %v615 = vld [vmem:[%s2 + $0x38] sm:$0x1]
  %v625 = vunpack.c.l.b16 %v607
  %v626 = vunpack.c.h.b16 %v607
  %v627 = vunpack.c.l.b16 %v608
  %v628 = vunpack.c.h.b16 %v608
  %v629 = vunpack.c.l.b16 %v609
  %v630 = vunpack.c.l.b16 %v610
  %v631 = vunpack.c.h.b16 %v610
  %v632 = vunpack.c.l.b16 %v611
  %v633 = vunpack.c.h.b16 %v611
  %v634 = vunpack.c.l.b16 %v612
  %v635 = vunpack.c.l.b16 %v613
  %v636 = vunpack.c.h.b16 %v613
  %v637 = vunpack.c.l.b16 %v614
  %v638 = vunpack.c.h.b16 %v614
  %v639 = vunpack.c.l.b16 %v615
  %v640 = vpack.c.b16 %v630, %v625
  %v641 = vpack.c.b16 %v631, %v626
  %v642 = vpack.c.b16 %v632, %v627
  %v643 = vpack.c.b16 %v633, %v628
  %v644 = vpack.c.b16 %v634, %v629
  %v645 = vpack.c.b16 %v635, %v635
  %v646 = vpack.c.b16 %v636, %v636
  %v647 = vpack.c.b16 %v637, %v637
  %v648 = vpack.c.b16 %v638, %v638
  %v649 = vpack.c.b16 %v639, %v639
  %v659 = vsel %vm363, %v644, 0
  %v662 = vsel %vm363, %v649, 0
  %664 = vmatpush.bf16.msra.mxu0 %v298
  %665 = vmatpush.bf16.msra.mxu0 %v297
  %666 = vmatpush.bf16.msra.mxu0 %v296
  %667 = vmatpush.bf16.msra.mxu0 %v295
  %668 = vmatpush.bf16.msra.mxu0 %v294
  %669 = vmatpush.bf16.msra.mxu0 %v293
  %670 = vmatpush.bf16.msra.mxu0 %v292
  %671 = vmatpush.bf16.msra.mxu0 %v291
  %672 = vmatmul.bf16.gmra.mxu0 %v640
  %v673 = vpop.f32.mrf.mxu0
  %v674 = vadd.f32 0.0, %v673
  %v675 = vpop.f32.mrf.mxu0
  %v676 = vadd.f32 0.0, %v675
  %677 = vmatmul.bf16.gmra.mxu0 %v645
  %v678 = vpop.f32.mrf.mxu0
  %v679 = vadd.f32 0.0, %v678
  %v680 = vpop.f32.mrf.mxu0
  %681 = vdwg.mxu0
  %682 = vmatpush.bf16.msra.mxu0 %v306
  %683 = vmatpush.bf16.msra.mxu0 %v305
  %684 = vmatpush.bf16.msra.mxu0 %v304
  %685 = vmatpush.bf16.msra.mxu0 %v303
  %686 = vmatpush.bf16.msra.mxu0 %v302
  %687 = vmatpush.bf16.msra.mxu0 %v301
  %688 = vmatpush.bf16.msra.mxu0 %v300
  %689 = vmatpush.bf16.msra.mxu0 %v299
  %690 = vmatmul.bf16.gmra.mxu0 %v641
  %v691 = vpop.f32.mrf.mxu0
  %v692 = vadd.f32 %v674, %v691
  %v693 = vpop.f32.mrf.mxu0
  %v694 = vadd.f32 %v676, %v693
  %695 = vmatmul.bf16.gmra.mxu0 %v646
  %v696 = vpop.f32.mrf.mxu0
  %v697 = vadd.f32 %v679, %v696
  %v698 = vpop.f32.mrf.mxu0
  %699 = vdwg.mxu0
  %700 = vmatpush.bf16.msra.mxu0 %v314
  %701 = vmatpush.bf16.msra.mxu0 %v313
  %702 = vmatpush.bf16.msra.mxu0 %v312
  %703 = vmatpush.bf16.msra.mxu0 %v311
  %704 = vmatpush.bf16.msra.mxu0 %v310
  %705 = vmatpush.bf16.msra.mxu0 %v309
  %706 = vmatpush.bf16.msra.mxu0 %v308
  %707 = vmatpush.bf16.msra.mxu0 %v307
  %708 = vmatmul.bf16.gmra.mxu0 %v642
  %v709 = vpop.f32.mrf.mxu0
  %v710 = vadd.f32 %v692, %v709
  %v711 = vpop.f32.mrf.mxu0
  %v712 = vadd.f32 %v694, %v711
  %713 = vmatmul.bf16.gmra.mxu0 %v647
  %v714 = vpop.f32.mrf.mxu0
  %v715 = vadd.f32 %v697, %v714
  %v716 = vpop.f32.mrf.mxu0
  %717 = vdwg.mxu0
  %718 = vmatpush.bf16.msra.mxu0 %v322
  %719 = vmatpush.bf16.msra.mxu0 %v321
  %720 = vmatpush.bf16.msra.mxu0 %v320
  %721 = vmatpush.bf16.msra.mxu0 %v319
  %722 = vmatpush.bf16.msra.mxu0 %v318
  %723 = vmatpush.bf16.msra.mxu0 %v317
  %724 = vmatpush.bf16.msra.mxu0 %v316
  %725 = vmatpush.bf16.msra.mxu0 %v315
  %726 = vmatmul.bf16.gmra.mxu0 %v643
  %v727 = vpop.f32.mrf.mxu0
  %v728 = vadd.f32 %v710, %v727
  %v729 = vpop.f32.mrf.mxu0
  %v730 = vadd.f32 %v712, %v729
  %731 = vmatmul.bf16.gmra.mxu0 %v648
  %v732 = vpop.f32.mrf.mxu0
  %v733 = vadd.f32 %v715, %v732
  %v734 = vpop.f32.mrf.mxu0
  %735 = vdwg.mxu0
  %736 = vmatpush.bf16.msra.mxu0 0
  %737 = vmatpush.bf16.msra.mxu0 0
  %738 = vmatpush.bf16.msra.mxu0 0
  %739 = vmatpush.bf16.msra.mxu0 0
  %740 = vmatpush.bf16.msra.mxu0 %v326
  %741 = vmatpush.bf16.msra.mxu0 %v325
  %742 = vmatpush.bf16.msra.mxu0 %v324
  %743 = vmatpush.bf16.msra.mxu0 %v323
  %744 = vmatmul.bf16.gmra.mxu0 %v659
  %v745 = vpop.f32.mrf.mxu0
  %v746 = vadd.f32 %v728, %v745
  %v747 = vpop.f32.mrf.mxu0
  %v748 = vadd.f32 %v730, %v747
  %749 = vmatmul.bf16.gmra.mxu0 %v662
  %v750 = vpop.f32.mrf.mxu0
  %v751 = vadd.f32 %v733, %v750
  %v752 = vpop.f32.mrf.mxu0
  %753 = vdwg.mxu0
  %v754 = vld [vmem:[%s3] sm:$0xff]
  %v755 = vld [vmem:[%s3 + $0x8] sm:$0xff]
  %v756 = vld [vmem:[%s3 + $0x10] sm:$0xf]
  %v757 = vld [vmem:[%s3 + $0x14] sm:$0xff]
  %v758 = vld [vmem:[%s3 + $0x1c] sm:$0xff]
  %v759 = vld [vmem:[%s3 + $0x24] sm:$0xf]
  %v760 = vld [vmem:[%s3 + $0x28] sm:$0x11]
  %v761 = vld [vmem:[%s3 + $0x30] sm:$0x11]
  %v762 = vld [vmem:[%s3 + $0x38] sm:$0x1]
  %v772 = vunpack.c.l.b16 %v754
  %v773 = vunpack.c.h.b16 %v754
  %v774 = vunpack.c.l.b16 %v755
  %v775 = vunpack.c.h.b16 %v755
  %v776 = vunpack.c.l.b16 %v756
  %v777 = vunpack.c.l.b16 %v757
  %v778 = vunpack.c.h.b16 %v757
  %v779 = vunpack.c.l.b16 %v758
  %v780 = vunpack.c.h.b16 %v758
  %v781 = vunpack.c.l.b16 %v759
  %v782 = vunpack.c.l.b16 %v760
  %v783 = vunpack.c.h.b16 %v760
  %v784 = vunpack.c.l.b16 %v761
  %v785 = vunpack.c.h.b16 %v761
  %v786 = vunpack.c.l.b16 %v762
  %v787 = vpack.c.b16 %v777, %v772
  %v788 = vpack.c.b16 %v778, %v773
  %v789 = vpack.c.b16 %v779, %v774
  %v790 = vpack.c.b16 %v780, %v775
  %v791 = vpack.c.b16 %v781, %v776
  %v792 = vpack.c.b16 %v782, %v782
  %v793 = vpack.c.b16 %v783, %v783
  %v794 = vpack.c.b16 %v784, %v784
  %v795 = vpack.c.b16 %v785, %v785
  %v796 = vpack.c.b16 %v786, %v786
  %v806 = vsel %vm363, %v791, 0
  %v809 = vsel %vm363, %v796, 0
  %811 = vmatpush.bf16.msra.mxu0 %v298
  %812 = vmatpush.bf16.msra.mxu0 %v297
  %813 = vmatpush.bf16.msra.mxu0 %v296
  %814 = vmatpush.bf16.msra.mxu0 %v295
  %815 = vmatpush.bf16.msra.mxu0 %v294
  %816 = vmatpush.bf16.msra.mxu0 %v293
  %817 = vmatpush.bf16.msra.mxu0 %v292
  %818 = vmatpush.bf16.msra.mxu0 %v291
  %819 = vmatmul.bf16.gmra.mxu0 %v787
  %v820 = vpop.f32.mrf.mxu0
  %v821 = vadd.f32 0.0, %v820
  %v822 = vpop.f32.mrf.mxu0
  %v823 = vadd.f32 0.0, %v822
  %824 = vmatmul.bf16.gmra.mxu0 %v792
  %v825 = vpop.f32.mrf.mxu0
  %v826 = vadd.f32 0.0, %v825
  %v827 = vpop.f32.mrf.mxu0
  %828 = vdwg.mxu0
  %829 = vmatpush.bf16.msra.mxu0 %v306
  %830 = vmatpush.bf16.msra.mxu0 %v305
  %831 = vmatpush.bf16.msra.mxu0 %v304
  %832 = vmatpush.bf16.msra.mxu0 %v303
  %833 = vmatpush.bf16.msra.mxu0 %v302
  %834 = vmatpush.bf16.msra.mxu0 %v301
  %835 = vmatpush.bf16.msra.mxu0 %v300
  %836 = vmatpush.bf16.msra.mxu0 %v299
  %837 = vmatmul.bf16.gmra.mxu0 %v788
  %v838 = vpop.f32.mrf.mxu0
  %v839 = vadd.f32 %v821, %v838
  %v840 = vpop.f32.mrf.mxu0
  %v841 = vadd.f32 %v823, %v840
  %842 = vmatmul.bf16.gmra.mxu0 %v793
  %v843 = vpop.f32.mrf.mxu0
  %v844 = vadd.f32 %v826, %v843
  %v845 = vpop.f32.mrf.mxu0
  %846 = vdwg.mxu0
  %847 = vmatpush.bf16.msra.mxu0 %v314
  %848 = vmatpush.bf16.msra.mxu0 %v313
  %849 = vmatpush.bf16.msra.mxu0 %v312
  %850 = vmatpush.bf16.msra.mxu0 %v311
  %851 = vmatpush.bf16.msra.mxu0 %v310
  %852 = vmatpush.bf16.msra.mxu0 %v309
  %853 = vmatpush.bf16.msra.mxu0 %v308
  %854 = vmatpush.bf16.msra.mxu0 %v307
  %855 = vmatmul.bf16.gmra.mxu0 %v789
  %v856 = vpop.f32.mrf.mxu0
  %v857 = vadd.f32 %v839, %v856
  %v858 = vpop.f32.mrf.mxu0
  %v859 = vadd.f32 %v841, %v858
  %860 = vmatmul.bf16.gmra.mxu0 %v794
  %v861 = vpop.f32.mrf.mxu0
  %v862 = vadd.f32 %v844, %v861
  %v863 = vpop.f32.mrf.mxu0
  %864 = vdwg.mxu0
  %865 = vmatpush.bf16.msra.mxu0 %v322
  %866 = vmatpush.bf16.msra.mxu0 %v321
  %867 = vmatpush.bf16.msra.mxu0 %v320
  %868 = vmatpush.bf16.msra.mxu0 %v319
  %869 = vmatpush.bf16.msra.mxu0 %v318
  %870 = vmatpush.bf16.msra.mxu0 %v317
  %871 = vmatpush.bf16.msra.mxu0 %v316
  %872 = vmatpush.bf16.msra.mxu0 %v315
  %873 = vmatmul.bf16.gmra.mxu0 %v790
  %v874 = vpop.f32.mrf.mxu0
  %v875 = vadd.f32 %v857, %v874
  %v876 = vpop.f32.mrf.mxu0
  %v877 = vadd.f32 %v859, %v876
  %878 = vmatmul.bf16.gmra.mxu0 %v795
  %v879 = vpop.f32.mrf.mxu0
  %v880 = vadd.f32 %v862, %v879
  %v881 = vpop.f32.mrf.mxu0
  %882 = vdwg.mxu0
  %883 = vmatpush.bf16.msra.mxu0 0
  %884 = vmatpush.bf16.msra.mxu0 0
  %885 = vmatpush.bf16.msra.mxu0 0
  %886 = vmatpush.bf16.msra.mxu0 0
  %887 = vmatpush.bf16.msra.mxu0 %v326
  %888 = vmatpush.bf16.msra.mxu0 %v325
  %889 = vmatpush.bf16.msra.mxu0 %v324
  %890 = vmatpush.bf16.msra.mxu0 %v323
  %891 = vmatmul.bf16.gmra.mxu0 %v806
  %v892 = vpop.f32.mrf.mxu0
  %v893 = vadd.f32 %v875, %v892
  %v894 = vpop.f32.mrf.mxu0
  %v895 = vadd.f32 %v877, %v894
  %896 = vmatmul.bf16.gmra.mxu0 %v809
  %v897 = vpop.f32.mrf.mxu0
  %v898 = vadd.f32 %v880, %v897
  %v899 = vpop.f32.mrf.mxu0
  %900 = vdwg.mxu0
  %v901 = vmax.f32 %v452, %v599
  %v902 = vmax.f32 %v454, %v601
  %v903 = vmax.f32 %v457, %v604
  %v904 = vmax.f32 %v746, %v893
  %v905 = vmax.f32 %v748, %v895
  %v906 = vmax.f32 %v751, %v898
  %v907 = vmax.f32 %v901, %v904
  %v908 = vmax.f32 %v902, %v905
  %v909 = vmax.f32 %v903, %v906
  %v910 = vld [vmem:[%s5] sm:$0x1]
  %v912 = vperm.slane %v910, 0
  %v914 = vadd.f32 %v907, %v912
  %v915 = vadd.f32 %v908, %v912
  %v916 = vadd.f32 %v909, %v912
  %v917 = vmax.f32 %v914, 0.0
  %v918 = vmax.f32 %v915, 0.0
  %v919 = vmax.f32 %v916, 0.0
  %v920 = vpack.c.bf16 %v917, %v917
  %v921 = vpack.c.bf16 %v918, %v918
  %v922 = vpack.c.bf16 %v919, %v919
  %vm923 = vcmask 519168
  %924 = vst.msk [vmem:[%s6] sm:$0xf] %vm923, %v920
  %925 = vst.msk [vmem:[%s6 + $0x4] sm:$0xf] %vm923, %v921
  %vm926 = vcmask 516096
  %927 = vst.msk [vmem:[%s6 + $0x8] sm:$0x1] %vm926, %v922
  // Predicated region
  $region26: #{classifier_cnn_forward.6} parent=0 // pred_check
    _
  $region27: #{classifier_cnn_forward.6} parent=0 // pred_check_branch
    %929 = sbr.rel (0) target = $region29
  $region28: #{classifier_cnn_forward.6} parent=0 // pred_region
    _
  $region29: #{classifier_cnn_forward.6} parent=0 // pred_fallthru
    _
  // Predicated region
  $region30: #{classifier_cnn_forward.6} parent=0 // pred_check
    _
  $region31: #{classifier_cnn_forward.6} parent=0 // pred_check_branch
    %931 = sbr.rel (0) target = $region33
  $region32: #{classifier_cnn_forward.6} parent=0 // pred_region
    _
  $region33: #{classifier_cnn_forward.6} parent=0 // pred_fallthru
    _

</llo_original>
